<compile_context>
chip_gen: v7x
topology: tpu7x:2x2x1
jax: 0.10.0
libtpu: 0.0.40
codegen_flags: <defaults>
</compile_context>

<pallas_src>
import functools

import jax
import jax.numpy as jnp
from jax import lax
from jax.experimental import pallas as pl
from jax.experimental.pallas import tpu as pltpu


def _round_up(x, m):
    return ((x + m - 1) // m) * m


# --------------------- Kernel A: fused pairwise (pos, ins_T) distances ---------------------
def _pair_kernel(row_tile,
                 pos_i_ref, pos_all_ref, pos_sq_ref,
                 t_i_ref, t_all_ref, t_sq_ref,
                 negd_ref, tdist_ref):
    # ---- position part: negated squared distance, diagonal masked ----
    xi = pos_i_ref[...]                                   # (tn, 3)   row tile
    xa = pos_all_ref[...]                                 # (Np, 3)   resident per batch
    xsq_i = jnp.sum(xi * xi, axis=-1, keepdims=True)      # (tn, 1)   sublane-oriented
    xsq_j = pos_sq_ref[...]                               # (1, Np)   lane-oriented (precomputed)
    gram_x = lax.dot_general(xi, xa, (((1,), (1,)), ((), ())),
                             preferred_element_type=jnp.float32)      # (tn, Np) on the MXU
    neg_d = 2.0 * gram_x - xsq_i - xsq_j                  # = -||xi-xj||^2 (ready for top_k)
    neg_d = jnp.minimum(neg_d, jnp.float32(0.0))          # kill gram-trick cancellation noise

    tn, npd = neg_d.shape
    row = pl.program_id(1) * row_tile + lax.broadcasted_iota(jnp.int32, (tn, npd), 0)
    col = lax.broadcasted_iota(jnp.int32, (tn, npd), 1)
    negd_ref[...] = jnp.where(row == col, jnp.float32(-1e30), neg_d)  # exclude self robustly

    # ---- ins_T part: pairwise squared distance via gram trick (MXU) ----
    ti = t_i_ref[...]                                     # (tn, C2)
    ta = t_all_ref[...]                                   # (Np, C2)  resident per batch
    tsq_i = jnp.sum(ti * ti, axis=-1, keepdims=True)      # (tn, 1)
    tsq_j = t_sq_ref[...]                                 # (1, Np)
    gram_t = lax.dot_general(ti, ta, (((1,), (1,)), ((), ())),
                             preferred_element_type=jnp.float32)      # (tn, Np)
    tdist_ref[...] = jnp.maximum(tsq_i + tsq_j - 2.0 * gram_t, jnp.float32(0.0))


def _pairwise(pos, t2d, pos_sq, t_sq, row_tile):
    B, Np, _ = pos.shape
    C2 = t2d.shape[-1]
    grid = (B, Np // row_tile)
    return pl.pallas_call(
        functools.partial(_pair_kernel, row_tile),
        out_shape=(jax.ShapeDtypeStruct((B, Np, Np), jnp.float32),
                   jax.ShapeDtypeStruct((B, Np, Np), jnp.float32)),
        grid_spec=pltpu.PrefetchScalarGridSpec(
            num_scalar_prefetch=0,
            grid=grid,
            in_specs=[
                pl.BlockSpec((None, row_tile, 3), lambda b, i: (b, i, 0)),   # pos row tile
                pl.BlockSpec((None, Np, 3), lambda b, i: (b, 0, 0)),         # pos full (resident)
                pl.BlockSpec((None, 1, Np), lambda b, i: (b, 0, 0)),         # |pos|^2 lane-oriented
                pl.BlockSpec((None, row_tile, C2), lambda b, i: (b, i, 0)),  # ins_T row tile
                pl.BlockSpec((None, Np, C2), lambda b, i: (b, 0, 0)),        # ins_T full (resident)
                pl.BlockSpec((None, 1, Np), lambda b, i: (b, 0, 0)),         # |ins_T|^2 lane-oriented
            ],
            out_specs=(
                pl.BlockSpec((None, row_tile, Np), lambda b, i: (b, i, 0)),  # negated distances
                pl.BlockSpec((None, row_tile, Np), lambda b, i: (b, i, 0)),  # ins_T sq. distances
            ),
        ),
        compiler_params=pltpu.CompilerParams(
            dimension_semantics=("parallel", "parallel"),
            vmem_limit_bytes=64 * 1024 * 1024),
    )(pos, pos, pos_sq, t2d, t2d, t_sq)


# --------------------- Kernel B: lane-dense weighted-average combine ---------------------
def _loss_kernel(inv_two_sigma_sq, lab_ref, nlab_ref, negd_ref, tdist_ref, out_ref):
    # All inputs are laid out (k, TL) so points sit on lanes (dense vst on output).
    same = (nlab_ref[...] == lab_ref[...]).astype(jnp.float32)        # (k, TL)
    # negd is already the NEGATED squared distance -> exp is a multiply, no divide.
    dm = same * jnp.exp(negd_ref[...] * jnp.float32(inv_two_sigma_sq))
    num = jnp.sum(dm * tdist_ref[...], axis=0, keepdims=True)         # (1, TL)
    den = jnp.sum(dm, axis=0, keepdims=True) + jnp.float32(0.001)
    # Exact reciprocal (review flagged approx=True vs den as small as 0.001).
    out_ref[...] = num * pl.reciprocal(den, approx=False)


def _combine(lab_own, lab_nbr, negd, tdist, inv_two_sigma_sq, lane_tile):
    k, Mp = lab_nbr.shape
    grid = (Mp // lane_tile,)
    return pl.pallas_call(
        functools.partial(_loss_kernel, float(inv_two_sigma_sq)),
        out_shape=jax.ShapeDtypeStruct((1, Mp), jnp.float32),
        grid_spec=pltpu.PrefetchScalarGridSpec(
            num_scalar_prefetch=0,
            grid=grid,
            in_specs=[
                pl.BlockSpec((1, lane_tile), lambda i: (0, i)),
                pl.BlockSpec((k, lane_tile), lambda i: (0, i)),
                pl.BlockSpec((k, lane_tile), lambda i: (0, i)),
                pl.BlockSpec((k, lane_tile), lambda i: (0, i)),
            ],
            out_specs=pl.BlockSpec((1, lane_tile), lambda i: (0, i)),
        ),
        compiler_params=pltpu.CompilerParams(
            dimension_semantics=("parallel",),
            vmem_limit_bytes=32 * 1024 * 1024),
    )(lab_own, lab_nbr, negd, tdist)


# --------------------- Wrapper ---------------------
def threed_space_loss(positions, labels, ins_T, k=7, sigma=1.0,
                      row_tile=256, lane_tile=512):
    """Forward pass of threeD_space_loss (mean manifold loss)."""
    B, N, _ = positions.shape
    C2 = ins_T.shape[-1] * ins_T.shape[-2]
    assert N >= k + 1, "need at least k+1 points per batch"

    positions = positions.astype(jnp.float32)
    labels = labels.astype(jnp.int32)
    t2d = ins_T.reshape(B, N, C2).astype(jnp.float32)

    # Pad the point axis to the row tile (cdiv-style grids instead of asserts).
    Np = _round_up(N, row_tile)
    pad_n = Np - N
    if pad_n:
        positions = jnp.pad(positions, ((0, 0), (0, pad_n), (0, 0)),
                            constant_values=1e6)          # far sentinels: never selected
        labels = jnp.pad(labels, ((0, 0), (0, pad_n)), constant_values=-1)
        t2d = jnp.pad(t2d, ((0, 0), (0, pad_n), (0, 0)))

    # Lane-oriented squared norms precomputed once (avoids in-kernel XLU transposes).
    pos_sq = jnp.sum(positions * positions, axis=-1)[:, None, :]      # (B, 1, Np)
    t_sq = jnp.sum(t2d * t2d, axis=-1)[:, None, :]                    # (B, 1, Np)

    # Kernel A: fused, row-tiled pairwise distances (positions negated; diag masked).
    neg_dist, t_dist = _pairwise(positions, t2d, pos_sq, t_sq, row_tile)

    # kNN selection. Diagonal already masked -> take top-k directly (no self, no negate).
    # TODO(synk): top-k / sorting has no clean Pallas TPU equivalent; done in XLA glue.
    vals, idx = lax.top_k(neg_dist, k)                                # (B, Np, k) each

    # Tiny per-neighbor gathers (scalars / ints only — no (M,k,C2) materialization).
    t_sel = jnp.take_along_axis(t_dist, idx, axis=-1)                 # (B, Np, k)
    lab_flat = labels.reshape(B * Np)
    flat_idx = idx + jnp.arange(B, dtype=idx.dtype)[:, None, None] * Np
    nlab = jnp.take(lab_flat, flat_idx)                               # (B, Np, k)

    # (k, M) layout: points on lanes -> dense output stores in kernel B.
    M = B * Np
    Mp = _round_up(M, lane_tile)
    pad_m = Mp - M

    def to_kM(x, pad_val):
        x = x.reshape(M, k).T                                         # (k, M)
        if pad_m:
            x = jnp.pad(x, ((0, 0), (0, pad_m)), constant_values=pad_val)
        return x

    nlab_kM = to_kM(nlab, -1)
    negd_kM = to_kM(vals, 0.0)
    tsel_kM = to_kM(t_sel, 0.0)
    lab_own = lab_flat[None, :]
    if pad_m:
        lab_own = jnp.pad(lab_own, ((0, 0), (0, pad_m)), constant_values=0)

    inv_two_sigma_sq = 1.0 / (2.0 * float(sigma) ** 2)
    per_point = _combine(lab_own, nlab_kM, negd_kM, tsel_kM, inv_two_sigma_sq, lane_tile)

    # Drop padded points, average over the real B*N points.
    per_point = per_point[0, :M].reshape(B, Np)[:, :N]
    return jnp.mean(per_point)


# --------------------- Pure-JAX reference (mirrors the PyTorch module) ---------------------
def ref_threed_space_loss(positions, labels, ins_T, k=7, sigma=1.0):
    B, N, _ = positions.shape
    M = B * N
    d = jnp.sum((positions[:, :, None, :] - positions[:, None, :, :]) ** 2, axis=-1)
    _, idx = lax.top_k(-d, k + 1)
    nbr = idx[:, :, 1:]
    flat_idx = (nbr + jnp.arange(B)[:, None, None] * N).reshape(M, k)
    pos_flat = positions.reshape(M, 3)
    lab_flat = labels.reshape(M)
    t_flat = ins_T.reshape(M, -1)
    npos = pos_flat[flat_idx]
    nlab = lab_flat[flat_idx]
    nt = t_flat[flat_idx]
    same = (lab_flat[:, None] == nlab).astype(jnp.float32)
    eij = jnp.exp(-jnp.sum((pos_flat[:, None, :] - npos) ** 2, axis=-1) / (2 * sigma ** 2))
    dm = same * eij
    t_dist = jnp.sum((t_flat[:, None, :] - nt) ** 2, axis=2)
    loss = jnp.sum(dm * t_dist, axis=1) / (jnp.sum(dm, axis=1) + 0.001)
    return loss.mean()


if __name__ == "__main__":
    B, N, C, k, sigma = 2, 64, 17, 7, 1.0
    key = jax.random.PRNGKey(0)
    k1, k2, k3 = jax.random.split(key, 3)
    positions = jax.random.uniform(k1, (B, N, 3), dtype=jnp.float32)
    labels = jax.random.randint(k2, (B, N), 0, C, dtype=jnp.int32)
    ins_T = jax.random.uniform(k3, (B * N, C, C), dtype=jnp.float32)

    loss = jax.block_until_ready(
        threed_space_loss(positions, labels, ins_T, k=k, sigma=sigma))
    ref = jax.block_until_ready(
        ref_threed_space_loss(positions, labels, ins_T, k=k, sigma=sigma))

    assert jnp.isfinite(loss), "non-finite loss"
    assert jnp.allclose(loss, ref, rtol=1e-3, atol=1e-3), (loss, ref)
    print("KERNEL_OK")
</pallas_src>

<mosaic_0001>
module attributes {stable_mosaic.version = 11 : i64} {
  func.func @_pair_kernel(%arg0: i32, %arg1: i32, %arg2: memref<1x256x3xf32, #tpu.memory_space<vmem>>, %arg3: memref<1x256x3xf32, #tpu.memory_space<vmem>>, %arg4: memref<1x1x256xf32, #tpu.memory_space<vmem>>, %arg5: memref<1x256x289xf32, #tpu.memory_space<vmem>>, %arg6: memref<1x256x289xf32, #tpu.memory_space<vmem>>, %arg7: memref<1x1x256xf32, #tpu.memory_space<vmem>>, %arg8: memref<1x256x256xf32, #tpu.memory_space<vmem>>, %arg9: memref<1x256x256xf32, #tpu.memory_space<vmem>>) attributes {dimension_semantics = [#tpu.dimension_semantics<parallel>, #tpu.dimension_semantics<parallel>], iteration_bounds = array<i64: 2, 1>, scalar_prefetch = 0 : i64, scratch_operands = 0 : i64, tpu.core_type = #tpu.core_type<tc>, window_params = [{transform_indices = @transform_0, window_bounds = array<i64: 1, 256, 3>}, {transform_indices = @transform_1, window_bounds = array<i64: 1, 256, 3>}, {transform_indices = @transform_2, window_bounds = array<i64: 1, 1, 256>}, {transform_indices = @transform_3, window_bounds = array<i64: 1, 256, 289>}, {transform_indices = @transform_4, window_bounds = array<i64: 1, 256, 289>}, {transform_indices = @transform_5, window_bounds = array<i64: 1, 1, 256>}, {transform_indices = @transform_6, window_bounds = array<i64: 1, 256, 256>}, {transform_indices = @transform_7, window_bounds = array<i64: 1, 256, 256>}]} {
    %c0 = arith.constant 0 : index
    %c0_0 = arith.constant 0 : index
    %c0_1 = arith.constant 0 : index
    %0 = vector.load %arg2[%c0, %c0_0, %c0_1] : memref<1x256x3xf32, #tpu.memory_space<vmem>>, vector<1x256x3xf32>
    %1 = vector.shape_cast %0 : vector<1x256x3xf32> to vector<256x3xf32>
    %c0_2 = arith.constant 0 : index
    %c0_3 = arith.constant 0 : index
    %c0_4 = arith.constant 0 : index
    %2 = vector.load %arg3[%c0_2, %c0_3, %c0_4] : memref<1x256x3xf32, #tpu.memory_space<vmem>>, vector<1x256x3xf32>
    %3 = vector.shape_cast %2 : vector<1x256x3xf32> to vector<256x3xf32>
    %4 = arith.mulf %1, %1 : vector<256x3xf32>
    %cst = arith.constant dense<0.000000e+00> : vector<256xf32>
    %5 = vector.multi_reduction <add>, %4, %cst [1] : vector<256x3xf32> to vector<256xf32>
    %6 = vector.shape_cast %5 : vector<256xf32> to vector<256x1xf32>
    %c0_5 = arith.constant 0 : index
    %c0_6 = arith.constant 0 : index
    %c0_7 = arith.constant 0 : index
    %7 = vector.load %arg4[%c0_5, %c0_6, %c0_7] : memref<1x1x256xf32, #tpu.memory_space<vmem>>, vector<1x1x256xf32>
    %8 = vector.shape_cast %7 : vector<1x1x256xf32> to vector<1x256xf32>
    %cst_8 = arith.constant dense<0.000000e+00> : vector<256x256xf32>
    %9 = tpu.matmul %1, %3, %cst_8 {dimension_numbers = #tpu.dot_dimension_numbers<[1], [1], [0], [0], [0, 0, 1, 0], [], []>} : vector<256x3xf32>, vector<256x3xf32>, vector<256x256xf32> -> vector<256x256xf32>
    %cst_9 = arith.constant 2.000000e+00 : f32
    %10 = vector.broadcast %cst_9 : f32 to vector<256x256xf32>
    %11 = arith.mulf %10, %9 : vector<256x256xf32>
    %12 = vector.broadcast %6 : vector<256x1xf32> to vector<256x256xf32>
    %13 = arith.subf %11, %12 : vector<256x256xf32>
    %14 = vector.broadcast %8 : vector<1x256xf32> to vector<256x256xf32>
    %15 = arith.subf %13, %14 : vector<256x256xf32>
    %cst_10 = arith.constant 0.000000e+00 : f32
    %16 = vector.broadcast %cst_10 : f32 to vector<256x256xf32>
    %17 = arith.minimumf %15, %16 : vector<256x256xf32>
    %c256_i32 = arith.constant 256 : i32
    %18 = arith.muli %arg1, %c256_i32 : i32
    %19 = tpu.iota {dimensions = array<i32: 0>} : vector<256x256xi32>
    %20 = vector.broadcast %18 : i32 to vector<256x256xi32>
    %21 = arith.addi %20, %19 : vector<256x256xi32>
    %22 = tpu.iota {dimensions = array<i32: 1>} : vector<256x256xi32>
    %23 = arith.cmpi eq, %21, %22 : vector<256x256xi32>
    %cst_11 = arith.constant -1.000000e+30 : f32
    %24 = vector.broadcast %cst_11 : f32 to vector<256x256xf32>
    %25 = arith.select %23, %24, %17 : vector<256x256xi1>, vector<256x256xf32>
    %c0_12 = arith.constant 0 : index
    %c0_13 = arith.constant 0 : index
    %c0_14 = arith.constant 0 : index
    %26 = vector.load %arg8[%c0_12, %c0_13, %c0_14] : memref<1x256x256xf32, #tpu.memory_space<vmem>>, vector<1x256x256xf32>
    %27 = vector.shape_cast %26 : vector<1x256x256xf32> to vector<256x256xf32>
    %28 = vector.shape_cast %25 : vector<256x256xf32> to vector<1x256x256xf32>
    tpu.vector_store %arg8[%c0_12, %c0_13, %c0_14], %28 {strides = array<i32>} : memref<1x256x256xf32, #tpu.memory_space<vmem>>, vector<1x256x256xf32>,
    %c0_15 = arith.constant 0 : index
    %c0_16 = arith.constant 0 : index
    %c0_17 = arith.constant 0 : index
    %29 = vector.load %arg5[%c0_15, %c0_16, %c0_17] : memref<1x256x289xf32, #tpu.memory_space<vmem>>, vector<1x256x289xf32>
    %30 = vector.shape_cast %29 : vector<1x256x289xf32> to vector<256x289xf32>
    %c0_18 = arith.constant 0 : index
    %c0_19 = arith.constant 0 : index
    %c0_20 = arith.constant 0 : index
    %31 = vector.load %arg6[%c0_18, %c0_19, %c0_20] : memref<1x256x289xf32, #tpu.memory_space<vmem>>, vector<1x256x289xf32>
    %32 = vector.shape_cast %31 : vector<1x256x289xf32> to vector<256x289xf32>
    %33 = arith.mulf %30, %30 : vector<256x289xf32>
    %cst_21 = arith.constant dense<0.000000e+00> : vector<256xf32>
    %34 = vector.multi_reduction <add>, %33, %cst_21 [1] : vector<256x289xf32> to vector<256xf32>
    %35 = vector.shape_cast %34 : vector<256xf32> to vector<256x1xf32>
    %c0_22 = arith.constant 0 : index
    %c0_23 = arith.constant 0 : index
    %c0_24 = arith.constant 0 : index
    %36 = vector.load %arg7[%c0_22, %c0_23, %c0_24] : memref<1x1x256xf32, #tpu.memory_space<vmem>>, vector<1x1x256xf32>
    %37 = vector.shape_cast %36 : vector<1x1x256xf32> to vector<1x256xf32>
    %cst_25 = arith.constant dense<0.000000e+00> : vector<256x256xf32>
    %38 = tpu.matmul %30, %32, %cst_25 {dimension_numbers = #tpu.dot_dimension_numbers<[1], [1], [0], [0], [0, 0, 1, 0], [], []>} : vector<256x289xf32>, vector<256x289xf32>, vector<256x256xf32> -> vector<256x256xf32>
    %39 = vector.broadcast %35 : vector<256x1xf32> to vector<256x256xf32>
    %40 = vector.broadcast %37 : vector<1x256xf32> to vector<256x256xf32>
    %41 = arith.addf %39, %40 : vector<256x256xf32>
    %cst_26 = arith.constant 2.000000e+00 : f32
    %42 = vector.broadcast %cst_26 : f32 to vector<256x256xf32>
    %43 = arith.mulf %42, %38 : vector<256x256xf32>
    %44 = arith.subf %41, %43 : vector<256x256xf32>
    %cst_27 = arith.constant 0.000000e+00 : f32
    %45 = vector.broadcast %cst_27 : f32 to vector<256x256xf32>
    %46 = arith.maximumf %44, %45 : vector<256x256xf32>
    %c0_28 = arith.constant 0 : index
    %c0_29 = arith.constant 0 : index
    %c0_30 = arith.constant 0 : index
    %47 = vector.load %arg9[%c0_28, %c0_29, %c0_30] : memref<1x256x256xf32, #tpu.memory_space<vmem>>, vector<1x256x256xf32>
    %48 = vector.shape_cast %47 : vector<1x256x256xf32> to vector<256x256xf32>
    %49 = vector.shape_cast %46 : vector<256x256xf32> to vector<1x256x256xf32>
    tpu.vector_store %arg9[%c0_28, %c0_29, %c0_30], %49 {strides = array<i32>} : memref<1x256x256xf32, #tpu.memory_space<vmem>>, vector<1x256x256xf32>,
    return
  }
  func.func @transform_0(%arg0: i32, %arg1: i32) -> (i32, i32, i32) {
    %c0_i32 = arith.constant 0 : i32
    %c0_i32_0 = arith.constant 0 : i32
    return %arg0, %arg1, %c0_i32 : i32, i32, i32
  }
  func.func @transform_1(%arg0: i32, %arg1: i32) -> (i32, i32, i32) {
    %c0_i32 = arith.constant 0 : i32
    %c0_i32_0 = arith.constant 0 : i32
    %c0_i32_1 = arith.constant 0 : i32
    return %arg0, %c0_i32, %c0_i32_0 : i32, i32, i32
  }
  func.func @transform_2(%arg0: i32, %arg1: i32) -> (i32, i32, i32) {
    %c0_i32 = arith.constant 0 : i32
    %c0_i32_0 = arith.constant 0 : i32
    %c0_i32_1 = arith.constant 0 : i32
    return %arg0, %c0_i32, %c0_i32_0 : i32, i32, i32
  }
  func.func @transform_3(%arg0: i32, %arg1: i32) -> (i32, i32, i32) {
    %c0_i32 = arith.constant 0 : i32
    %c0_i32_0 = arith.constant 0 : i32
    return %arg0, %arg1, %c0_i32 : i32, i32, i32
  }
  func.func @transform_4(%arg0: i32, %arg1: i32) -> (i32, i32, i32) {
    %c0_i32 = arith.constant 0 : i32
    %c0_i32_0 = arith.constant 0 : i32
    %c0_i32_1 = arith.constant 0 : i32
    return %arg0, %c0_i32, %c0_i32_0 : i32, i32, i32
  }
  func.func @transform_5(%arg0: i32, %arg1: i32) -> (i32, i32, i32) {
    %c0_i32 = arith.constant 0 : i32
    %c0_i32_0 = arith.constant 0 : i32
    %c0_i32_1 = arith.constant 0 : i32
    return %arg0, %c0_i32, %c0_i32_0 : i32, i32, i32
  }
  func.func @transform_6(%arg0: i32, %arg1: i32) -> (i32, i32, i32) {
    %c0_i32 = arith.constant 0 : i32
    %c0_i32_0 = arith.constant 0 : i32
    return %arg0, %arg1, %c0_i32 : i32, i32, i32
  }
  func.func @transform_7(%arg0: i32, %arg1: i32) -> (i32, i32, i32) {
    %c0_i32 = arith.constant 0 : i32
    %c0_i32_0 = arith.constant 0 : i32
    return %arg0, %arg1, %c0_i32 : i32, i32, i32
  }
}

</mosaic_0001>

<llo_original>
// kernel: tpu_custom_call.1
$region0: #{tpu_custom_call.1}
  #allocation0 [shape = 'u32[]', space=smem, size = 0x4, offset = 0x4, fixed_abs, tag = 'smem constant byte address 0x4 - core index']
  #allocation1 [shape = 'u32[144,128]{1,0:T(1,128)}', space=vmem, size = 0x12000, scoped, tag = 'internal scratch']
  %s0 = inlined_call_operand.hbm [shape: f32[2,256,3], index: 0, kind: input, shape index: {}]
  %s1 = inlined_call_operand.hbm [shape: f32[2,256,3], index: 1, kind: input, shape index: {}]
  %s2 = inlined_call_operand.hbm [shape: f32[2,1,256], index: 2, kind: input, shape index: {}]
  %s3 = inlined_call_operand.hbm [shape: f32[2,256,289], index: 3, kind: input, shape index: {}]
  %s4 = inlined_call_operand.hbm [shape: f32[2,256,289], index: 4, kind: input, shape index: {}]
  %s5 = inlined_call_operand.hbm [shape: f32[2,1,256], index: 5, kind: input, shape index: {}]
  %s6 = inlined_call_operand.hbm [shape: f32[2,256,256], index: 6, kind: output, shape index: {0}]
  %s7 = inlined_call_operand.hbm [shape: f32[2,256,256], index: 7, kind: output, shape index: {1}]
  %8 = xla_tuple %s6, %s7
  %s9 = sld [smem:[#allocation0]]
  $region89: #{tpu_custom_call.1} parent=0
    _
  %s11 = ssub.s32 1, %s9
  %s12 = scalar_select 0, %s11, %s9
  $region1: #{tpu_custom_call.1} parent=0
    #allocation2 [shape = 'u8[262144]{0}', space=vmem, size = 0x40000, scoped, tag = 'input window, operand 0']
    #allocation3 [shape = 's32[2]{0}', space=sflag, size = 0x8, scoped, tag = 'scoped memory for tpu_custom_call.1']
    #allocation4 [shape = 's32[2]{0}', space=sflag, size = 0x8, scoped, tag = 'scoped memory for tpu_custom_call.1']
    #allocation5 [shape = 'u8[262144]{0}', space=vmem, size = 0x40000, scoped, tag = 'input window, operand 1']
    #allocation6 [shape = 's32[2]{0}', space=sflag, size = 0x8, scoped, tag = 'scoped memory for tpu_custom_call.1']
    #allocation7 [shape = 'u8[2048]{0}', space=vmem, size = 0x800, scoped, tag = 'input window, operand 2']
    #allocation8 [shape = 'u8[786432]{0}', space=vmem, size = 0xc0000, scoped, tag = 'input window, operand 3']
    #allocation9 [shape = 's32[2]{0}', space=sflag, size = 0x8, scoped, tag = 'scoped memory for tpu_custom_call.1']
    #allocation10 [shape = 'u8[786432]{0}', space=vmem, size = 0xc0000, scoped, tag = 'input window, operand 4']
    #allocation11 [shape = 'u8[2048]{0}', space=vmem, size = 0x800, scoped, tag = 'input window, operand 5']
    #allocation12 [shape = 's32[2]{0}', space=sflag, size = 0x8, scoped, tag = 'scoped memory for tpu_custom_call.1']
    #allocation13 [shape = 'u8[524288]{0}', space=vmem, size = 0x80000, scoped, tag = 'output window, operand 0']
    #allocation14 [shape = 'u8[524288]{0}', space=vmem, size = 0x80000, scoped, tag = 'output window, operand 1']
    #allocation15 [shape = 's32[2]{0}', space=sflag, size = 0x8, scoped, tag = 'scoped memory for tpu_custom_call.1']
    %13 = vsyncpa [#allocation3], 0
    %s14 = scalar_lea.sflag [#allocation3], 1
    %15 = vsyncpa %s14, 0
    %16 = vsyncpa [#allocation6], 0
    %s17 = scalar_lea.sflag [#allocation6], 1
    %18 = vsyncpa %s17, 0
    %19 = vsyncpa [#allocation9], 0
    %s20 = scalar_lea.sflag [#allocation9], 1
    %21 = vsyncpa %s20, 0
    %22 = vsyncpa [#allocation12], 0
    %s23 = scalar_lea.sflag [#allocation12], 1
    %24 = vsyncpa %s23, 0
    %25 = vsyncpa [#allocation4], 0
    %s26 = scalar_lea.sflag [#allocation4], 1
    %27 = vsyncpa %s26, 0
    %28 = vsyncpa [#allocation15], 0
    %s29 = scalar_lea.sflag [#allocation15], 1
    %30 = vsyncpa %s29, 0
    loop: start=0, step=1, limit=4
    $region2: #{tpu_custom_call.1} parent=1 // loop_pre_header
      _
    $region3: #{tpu_custom_call.1} parent=1 // loop_header
      %s32 = sphi 0, %s36
      %p33 = scmp.ge.s32.totalorder %s32, 4
      %s39 = sphi 0, %s51
      %s40 = sphi 0, %s47
      %s41 = sphi 0, %s39
      %s42 = sphi 0, %s40
      %s43 = sphi 0, %s41
      %s44 = sphi 0, %s42
      %s56 = sphi 0, %s58
      %s59 = sphi 0, %s56
      %s60 = sphi 0, %s59
      %s76 = sphi 0, %s60
      %s82 = sphi 0, %s84
      %s85 = sphi 0, %s82
      %s86 = sphi 0, %s85
      %s102 = sphi 0, %s86
      %s108 = sphi 0, %s110
      %s111 = sphi 0, %s108
      %s112 = sphi 0, %s111
      %s128 = sphi 0, %s112
      %s136 = sphi 0, %s138
      %s139 = sphi 0, %s136
      %s140 = sphi 0, %s139
      %s156 = sphi 0, %s140
      %s162 = sphi 0, %s164
      %s165 = sphi 0, %s162
      %s166 = sphi 0, %s165
      %s182 = sphi 0, %s166
      %s188 = sphi 0, %s190
      %s191 = sphi 0, %s188
      %s192 = sphi 0, %s191
      %s208 = sphi 0, %s192
      %s216 = sphi 0, %s218
      %s219 = sphi 0, %s216
      %s220 = sphi 0, %s219
      %s236 = sphi 0, %s220
      %s244 = sphi 0, %s246
      %s247 = sphi 0, %s244
      %s248 = sphi 0, %s247
      %s264 = sphi 0, %s248
    $region4: #{tpu_custom_call.1} parent=1 // loop_header_branch
      %35 = sbr.rel (%p33) target = $region8
    $region5: #{tpu_custom_call.1} parent=1 // loop_body
      %s37 = ssub.s32 %s32, 1
      %s38 = ssub.s32 %s32, 2
      %s45 = sadd.s32 1, %s40
      %p46 = scmp.ge.s32.totalorder %s45, 1
      %s47 = scalar_select %p46, 0, %s45
      %s48 = sadd.s32 1, %s39
      %s49 = scalar_select %p46, %s48, %s39
      %p50 = scmp.ge.s32.totalorder %s49, 2
      %s51 = scalar_select %p50, 0, %s49
      %s52 = ssub.s32 %s39, %s51
      %s53 = ssub.s32 %s40, %s47
      %s54 = sor.u32 %s52, %s53
      %p55 = scmp.eq.s32.totalorder %s54, 0
      %s57 = sadd.s32 %s56, 1
      %s58 = scalar_select %p55, %s56, %s57
      %p61 = pneg %p55
      %p62 = scmp.eq.s32.totalorder %s32, 1
      %p63 = por %p61, %p62
      %p64 = scmp.ne.s32.totalorder %s56, %s59
      %p65 = scmp.eq.s32.totalorder %s32, 0
      %p66 = por %p64, %p65
      %p67 = scmp.ne.s32.totalorder %s56, %s59
      %p68 = scmp.eq.s32.totalorder %s37, 1
      %p69 = por %p67, %p68
      %p70 = scmp.ne.s32.totalorder %s59, %s60
      %p71 = scmp.eq.s32.totalorder %s37, 0
      %p72 = por %p70, %p71
      %p73 = scmp.ne.s32.totalorder %s59, %s60
      %p74 = scmp.eq.s32.totalorder %s38, 1
      %p75 = por %p73, %p74
      %p77 = scmp.ne.s32.totalorder %s60, %s76
      %p78 = scmp.eq.s32.totalorder %s38, 0
      %p79 = por %p77, %p78
      %s80 = ssub.s32 %s39, %s51
      %p81 = scmp.eq.s32.totalorder %s80, 0
      %s83 = sadd.s32 %s82, 1
      %s84 = scalar_select %p81, %s82, %s83
      %p87 = pneg %p81
      %p88 = scmp.eq.s32.totalorder %s32, 1
      %p89 = por %p87, %p88
      %p90 = scmp.ne.s32.totalorder %s82, %s85
      %p91 = scmp.eq.s32.totalorder %s32, 0
      %p92 = por %p90, %p91
      %p93 = scmp.ne.s32.totalorder %s82, %s85
      %p94 = scmp.eq.s32.totalorder %s37, 1
      %p95 = por %p93, %p94
      %p96 = scmp.ne.s32.totalorder %s85, %s86
      %p97 = scmp.eq.s32.totalorder %s37, 0
      %p98 = por %p96, %p97
      %p99 = scmp.ne.s32.totalorder %s85, %s86
      %p100 = scmp.eq.s32.totalorder %s38, 1
      %p101 = por %p99, %p100
      %p103 = scmp.ne.s32.totalorder %s86, %s102
      %p104 = scmp.eq.s32.totalorder %s38, 0
      %p105 = por %p103, %p104
      %s106 = ssub.s32 %s39, %s51
      %p107 = scmp.eq.s32.totalorder %s106, 0
      %s109 = sadd.s32 %s108, 1
      %s110 = scalar_select %p107, %s108, %s109
      %p113 = pneg %p107
      %p114 = scmp.eq.s32.totalorder %s32, 1
      %p115 = por %p113, %p114
      %p116 = scmp.ne.s32.totalorder %s108, %s111
      %p117 = scmp.eq.s32.totalorder %s32, 0
      %p118 = por %p116, %p117
      %p119 = scmp.ne.s32.totalorder %s108, %s111
      %p120 = scmp.eq.s32.totalorder %s37, 1
      %p121 = por %p119, %p120
      %p122 = scmp.ne.s32.totalorder %s111, %s112
      %p123 = scmp.eq.s32.totalorder %s37, 0
      %p124 = por %p122, %p123
      %p125 = scmp.ne.s32.totalorder %s111, %s112
      %p126 = scmp.eq.s32.totalorder %s38, 1
      %p127 = por %p125, %p126
      %p129 = scmp.ne.s32.totalorder %s112, %s128
      %p130 = scmp.eq.s32.totalorder %s38, 0
      %p131 = por %p129, %p130
      %s132 = ssub.s32 %s39, %s51
      %s133 = ssub.s32 %s40, %s47
      %s134 = sor.u32 %s132, %s133
      %p135 = scmp.eq.s32.totalorder %s134, 0
      %s137 = sadd.s32 %s136, 1
      %s138 = scalar_select %p135, %s136, %s137
      %p141 = pneg %p135
      %p142 = scmp.eq.s32.totalorder %s32, 1
      %p143 = por %p141, %p142
      %p144 = scmp.ne.s32.totalorder %s136, %s139
      %p145 = scmp.eq.s32.totalorder %s32, 0
      %p146 = por %p144, %p145
      %p147 = scmp.ne.s32.totalorder %s136, %s139
      %p148 = scmp.eq.s32.totalorder %s37, 1
      %p149 = por %p147, %p148
      %p150 = scmp.ne.s32.totalorder %s139, %s140
      %p151 = scmp.eq.s32.totalorder %s37, 0
      %p152 = por %p150, %p151
      %p153 = scmp.ne.s32.totalorder %s139, %s140
      %p154 = scmp.eq.s32.totalorder %s38, 1
      %p155 = por %p153, %p154
      %p157 = scmp.ne.s32.totalorder %s140, %s156
      %p158 = scmp.eq.s32.totalorder %s38, 0
      %p159 = por %p157, %p158
      %s160 = ssub.s32 %s39, %s51
      %p161 = scmp.eq.s32.totalorder %s160, 0
      %s163 = sadd.s32 %s162, 1
      %s164 = scalar_select %p161, %s162, %s163
      %p167 = pneg %p161
      %p168 = scmp.eq.s32.totalorder %s32, 1
      %p169 = por %p167, %p168
      %p170 = scmp.ne.s32.totalorder %s162, %s165
      %p171 = scmp.eq.s32.totalorder %s32, 0
      %p172 = por %p170, %p171
      %p173 = scmp.ne.s32.totalorder %s162, %s165
      %p174 = scmp.eq.s32.totalorder %s37, 1
      %p175 = por %p173, %p174
      %p176 = scmp.ne.s32.totalorder %s165, %s166
      %p177 = scmp.eq.s32.totalorder %s37, 0
      %p178 = por %p176, %p177
      %p179 = scmp.ne.s32.totalorder %s165, %s166
      %p180 = scmp.eq.s32.totalorder %s38, 1
      %p181 = por %p179, %p180
      %p183 = scmp.ne.s32.totalorder %s166, %s182
      %p184 = scmp.eq.s32.totalorder %s38, 0
      %p185 = por %p183, %p184
      %s186 = ssub.s32 %s39, %s51
      %p187 = scmp.eq.s32.totalorder %s186, 0
      %s189 = sadd.s32 %s188, 1
      %s190 = scalar_select %p187, %s188, %s189
      %p193 = pneg %p187
      %p194 = scmp.eq.s32.totalorder %s32, 1
      %p195 = por %p193, %p194
      %p196 = scmp.ne.s32.totalorder %s188, %s191
      %p197 = scmp.eq.s32.totalorder %s32, 0
      %p198 = por %p196, %p197
      %p199 = scmp.ne.s32.totalorder %s188, %s191
      %p200 = scmp.eq.s32.totalorder %s37, 1
      %p201 = por %p199, %p200
      %p202 = scmp.ne.s32.totalorder %s191, %s192
      %p203 = scmp.eq.s32.totalorder %s37, 0
      %p204 = por %p202, %p203
      %p205 = scmp.ne.s32.totalorder %s191, %s192
      %p206 = scmp.eq.s32.totalorder %s38, 1
      %p207 = por %p205, %p206
      %p209 = scmp.ne.s32.totalorder %s192, %s208
      %p210 = scmp.eq.s32.totalorder %s38, 0
      %p211 = por %p209, %p210
      %s212 = ssub.s32 %s39, %s51
      %s213 = ssub.s32 %s40, %s47
      %s214 = sor.u32 %s212, %s213
      %p215 = scmp.eq.s32.totalorder %s214, 0
      %s217 = sadd.s32 %s216, 1
      %s218 = scalar_select %p215, %s216, %s217
      %p221 = pneg %p215
      %p222 = scmp.eq.s32.totalorder %s32, 1
      %p223 = por %p221, %p222
      %p224 = scmp.ne.s32.totalorder %s216, %s219
      %p225 = scmp.eq.s32.totalorder %s32, 0
      %p226 = por %p224, %p225
      %p227 = scmp.ne.s32.totalorder %s216, %s219
      %p228 = scmp.eq.s32.totalorder %s37, 1
      %p229 = por %p227, %p228
      %p230 = scmp.ne.s32.totalorder %s219, %s220
      %p231 = scmp.eq.s32.totalorder %s37, 0
      %p232 = por %p230, %p231
      %p233 = scmp.ne.s32.totalorder %s219, %s220
      %p234 = scmp.eq.s32.totalorder %s38, 1
      %p235 = por %p233, %p234
      %p237 = scmp.ne.s32.totalorder %s220, %s236
      %p238 = scmp.eq.s32.totalorder %s38, 0
      %p239 = por %p237, %p238
      %s240 = ssub.s32 %s39, %s51
      %s241 = ssub.s32 %s40, %s47
      %s242 = sor.u32 %s240, %s241
      %p243 = scmp.eq.s32.totalorder %s242, 0
      %s245 = sadd.s32 %s244, 1
      %s246 = scalar_select %p243, %s244, %s245
      %p249 = pneg %p243
      %p250 = scmp.eq.s32.totalorder %s32, 1
      %p251 = por %p249, %p250
      %p252 = scmp.ne.s32.totalorder %s244, %s247
      %p253 = scmp.eq.s32.totalorder %s32, 0
      %p254 = por %p252, %p253
      %p255 = scmp.ne.s32.totalorder %s244, %s247
      %p256 = scmp.eq.s32.totalorder %s37, 1
      %p257 = por %p255, %p256
      %p258 = scmp.ne.s32.totalorder %s247, %s248
      %p259 = scmp.eq.s32.totalorder %s37, 0
      %p260 = por %p258, %p259
      %p261 = scmp.ne.s32.totalorder %s247, %s248
      %p262 = scmp.eq.s32.totalorder %s38, 1
      %p263 = por %p261, %p262
      %p265 = scmp.ne.s32.totalorder %s248, %s264
      %p266 = scmp.eq.s32.totalorder %s38, 0
      %p267 = por %p265, %p266
      %p268 = scmp.le.s32.totalorder 1, %s32
      %p269 = scmp.lt.s32.totalorder %s32, 3
      %p270 = pnand %p268, %p269
      %p271 = pneg %p270
      // Predicated region
      $region9: #{tpu_custom_call.1} parent=5 // pred_check
        _
      $region10: #{tpu_custom_call.1} parent=5 // pred_check_branch
        %273 = sbr.rel (%p270) target = $region12
      $region11: #{tpu_custom_call.1} parent=5 // pred_region
        %s274 = ssub.s32 %s32, 1
      $region12: #{tpu_custom_call.1} parent=5 // pred_fallthru
        _
      %p275 = scmp.lt.s32.totalorder %s32, 2
      // Predicated region
      $region13: #{tpu_custom_call.1} parent=5 // pred_check
        %p276 = pneg %p275
      $region14: #{tpu_custom_call.1} parent=5 // pred_check_branch
        %278 = sbr.rel (%p276) target = $region16
      $region15: #{tpu_custom_call.1} parent=5 // pred_region
        // Predicated region
        $region17: #{tpu_custom_call.1} parent=15 // pred_check
          %p279 = pneg %p66
        $region18: #{tpu_custom_call.1} parent=15 // pred_check_branch
          %281 = sbr.rel (%p279) target = $region20
        $region19: #{tpu_custom_call.1} parent=15 // pred_region
          %s282 = sand.u32 %s56, 1
          %s283 = scalar_lea.sflag [#allocation3], %s282
          %s284 = sand.u32 %s56, 1
          %s285 = smul.addr %s284, 256
          %s286 = scalar_lea.vmem [#allocation2], %s285
          %s287 = smul.u32 32, %s40
          %s289 = ssub.s32 4096, 4096
          %290 = vsyncadd %s283, %s289
          %s291 = smul.addr %s39, 32
          %s292 = sadd.s32 %s287, %s291
          %s293 = smul.addr %s292, 128
          %s294 = scalar_lea.hbm %s0, %s293
          %s295 = sshll.u32 %s286, 4
          %s296 = int_to_ptr.vmem [resolvable:$true] %s295
          %301 = dma.hbm_to_vmem [thread:$0]  %s294, 4096, %s296, %s283, 128, 128, 8
        $region20: #{tpu_custom_call.1} parent=15 // pred_fallthru
          _
        // Predicated region
        $region21: #{tpu_custom_call.1} parent=15 // pred_check
          %p302 = pneg %p92
        $region22: #{tpu_custom_call.1} parent=15 // pred_check_branch
          %304 = sbr.rel (%p302) target = $region24
        $region23: #{tpu_custom_call.1} parent=15 // pred_region
          %s305 = sand.u32 %s32, 1
          %s306 = scalar_lea.sflag [#allocation6], %s305
          %s307 = sand.u32 %s82, 1
          %s308 = smul.addr %s307, 256
          %s309 = scalar_lea.vmem [#allocation5], %s308
          %s311 = ssub.s32 4096, 4096
          %312 = vsyncadd %s306, %s311
          %s313 = smul.addr %s39, 32
          %s314 = smul.addr %s313, 128
          %s315 = scalar_lea.hbm %s1, %s314
          %s316 = sshll.u32 %s309, 4
          %s317 = int_to_ptr.vmem [resolvable:$true] %s316
          %322 = dma.hbm_to_vmem [thread:$0]  %s315, 4096, %s317, %s306, 128, 128, 8
        $region24: #{tpu_custom_call.1} parent=15 // pred_fallthru
          _
        // Predicated region
        $region25: #{tpu_custom_call.1} parent=15 // pred_check
          %p323 = pneg %p118
        $region26: #{tpu_custom_call.1} parent=15 // pred_check_branch
          %325 = sbr.rel (%p323) target = $region28
        $region27: #{tpu_custom_call.1} parent=15 // pred_region
          %s326 = sand.u32 %s32, 1
          %s327 = scalar_lea.sflag [#allocation6], %s326
          %s328 = sand.u32 %s108, 1
          %s329 = smul.addr %s328, 2
          %s330 = scalar_lea.vmem [#allocation7], %s329
          %s332 = ssub.s32 32, 32
          %333 = vsyncadd %s327, %s332
          %s334 = smul.addr %s39, 2
          %s335 = smul.addr %s334, 16
          %s336 = scalar_lea.hbm %s2, %s335
          %s338 = sshll.u32 %s330, 4
          %s339 = int_to_ptr.vmem [resolvable:$true] %s338
          %341 = dma.hbm_to_vmem [thread:$0]  %s336, 32, %s339, %s327
        $region28: #{tpu_custom_call.1} parent=15 // pred_fallthru
          _
        // Predicated region
        $region29: #{tpu_custom_call.1} parent=15 // pred_check
          %p342 = pneg %p146
        $region30: #{tpu_custom_call.1} parent=15 // pred_check_branch
          %344 = sbr.rel (%p342) target = $region32
        $region31: #{tpu_custom_call.1} parent=15 // pred_region
          %s345 = sand.u32 %s32, 1
          %s346 = scalar_lea.sflag [#allocation9], %s345
          %s347 = sand.u32 %s136, 1
          %s348 = smul.addr %s347, 768
          %s349 = scalar_lea.vmem [#allocation8], %s348
          %s350 = smul.u32 32, %s40
          %s352 = ssub.s32 12288, 12288
          %353 = vsyncadd %s346, %s352
          %s354 = smul.addr %s350, 3
          %s355 = smul.addr %s39, 96
          %s356 = sadd.s32 %s354, %s355
          %s357 = smul.addr %s356, 128
          %s358 = scalar_lea.hbm %s3, %s357
          %s359 = sshll.u32 %s349, 4
          %s360 = int_to_ptr.vmem [resolvable:$true] %s359
          %365 = dma.hbm_to_vmem [thread:$0]  %s358, 12288, %s360, %s346, 384, 384, 24
        $region32: #{tpu_custom_call.1} parent=15 // pred_fallthru
          _
        // Predicated region
        $region33: #{tpu_custom_call.1} parent=15 // pred_check
          %p366 = pneg %p172
        $region34: #{tpu_custom_call.1} parent=15 // pred_check_branch
          %368 = sbr.rel (%p366) target = $region36
        $region35: #{tpu_custom_call.1} parent=15 // pred_region
          %s369 = sand.u32 %s32, 1
          %s370 = scalar_lea.sflag [#allocation9], %s369
          %s371 = sand.u32 %s162, 1
          %s372 = smul.addr %s371, 768
          %s373 = scalar_lea.vmem [#allocation10], %s372
          %s375 = ssub.s32 12288, 12288
          %376 = vsyncadd %s370, %s375
          %s377 = smul.addr %s39, 96
          %s378 = smul.addr %s377, 128
          %s379 = scalar_lea.hbm %s4, %s378
          %s380 = sshll.u32 %s373, 4
          %s381 = int_to_ptr.vmem [resolvable:$true] %s380
          %386 = dma.hbm_to_vmem [thread:$0]  %s379, 12288, %s381, %s370, 384, 384, 24
        $region36: #{tpu_custom_call.1} parent=15 // pred_fallthru
          _
        // Predicated region
        $region37: #{tpu_custom_call.1} parent=15 // pred_check
          %p387 = pneg %p198
        $region38: #{tpu_custom_call.1} parent=15 // pred_check_branch
          %389 = sbr.rel (%p387) target = $region40
        $region39: #{tpu_custom_call.1} parent=15 // pred_region
          %s390 = sand.u32 %s188, 1
          %s391 = scalar_lea.sflag [#allocation12], %s390
          %s392 = sand.u32 %s188, 1
          %s393 = smul.addr %s392, 2
          %s394 = scalar_lea.vmem [#allocation11], %s393
          %s396 = ssub.s32 32, 32
          %397 = vsyncadd %s391, %s396
          %s398 = smul.addr %s39, 2
          %s399 = smul.addr %s398, 16
          %s400 = scalar_lea.hbm %s5, %s399
          %s402 = sshll.u32 %s394, 4
          %s403 = int_to_ptr.vmem [resolvable:$true] %s402
          %405 = dma.hbm_to_vmem [thread:$0]  %s400, 32, %s403, %s391
        $region40: #{tpu_custom_call.1} parent=15 // pred_fallthru
          _
      $region16: #{tpu_custom_call.1} parent=5 // pred_fallthru
        _
      %p406 = scmp.le.s32.totalorder 1, %s32
      %p407 = scmp.lt.s32.totalorder %s32, 3
      %p408 = pnand %p406, %p407
      %p409 = pneg %p408
      // Predicated region
      $region41: #{tpu_custom_call.1} parent=5 // pred_check
        _
      $region42: #{tpu_custom_call.1} parent=5 // pred_check_branch
        %411 = sbr.rel (%p408) target = $region44
      $region43: #{tpu_custom_call.1} parent=5 // pred_region
        %s412 = ssub.s32 %s32, 1
        %s413 = sand.u32 %s59, 1
        %s414 = scalar_lea.sflag [#allocation3], %s413
        %s415 = sand.u32 %s59, 1
        %s416 = smul.addr %s415, 256
        %s417 = scalar_lea.vmem [#allocation2], %s416
        // Predicated region
        $region45: #{tpu_custom_call.1} parent=43 // pred_check
          %p418 = pneg %p72
        $region46: #{tpu_custom_call.1} parent=43 // pred_check_branch
          %420 = sbr.rel (%p418) target = $region48
        $region47: #{tpu_custom_call.1} parent=43 // pred_region
          %421 = dma.done %s414, 4096
        $region48: #{tpu_custom_call.1} parent=43 // pred_fallthru
          _
        %s422 = sand.u32 %s37, 1
        %s423 = scalar_lea.sflag [#allocation6], %s422
        %s424 = sand.u32 %s85, 1
        %s425 = smul.addr %s424, 256
        %s426 = scalar_lea.vmem [#allocation5], %s425
        // Predicated region
        $region49: #{tpu_custom_call.1} parent=43 // pred_check
          %p427 = pneg %p98
        $region50: #{tpu_custom_call.1} parent=43 // pred_check_branch
          %429 = sbr.rel (%p427) target = $region52
        $region51: #{tpu_custom_call.1} parent=43 // pred_region
          %430 = dma.done %s423, 4096
        $region52: #{tpu_custom_call.1} parent=43 // pred_fallthru
          _
        %s431 = sand.u32 %s37, 1
        %s432 = scalar_lea.sflag [#allocation6], %s431
        %s433 = sand.u32 %s111, 1
        %s434 = smul.addr %s433, 2
        %s435 = scalar_lea.vmem [#allocation7], %s434
        // Predicated region
        $region53: #{tpu_custom_call.1} parent=43 // pred_check
          %p436 = pneg %p124
        $region54: #{tpu_custom_call.1} parent=43 // pred_check_branch
          %438 = sbr.rel (%p436) target = $region56
        $region55: #{tpu_custom_call.1} parent=43 // pred_region
          %439 = dma.done %s432, 32
        $region56: #{tpu_custom_call.1} parent=43 // pred_fallthru
          _
        %s440 = sand.u32 %s37, 1
        %s441 = scalar_lea.sflag [#allocation9], %s440
        %s442 = sand.u32 %s139, 1
        %s443 = smul.addr %s442, 768
        %s444 = scalar_lea.vmem [#allocation8], %s443
        // Predicated region
        $region57: #{tpu_custom_call.1} parent=43 // pred_check
          %p445 = pneg %p152
        $region58: #{tpu_custom_call.1} parent=43 // pred_check_branch
          %447 = sbr.rel (%p445) target = $region60
        $region59: #{tpu_custom_call.1} parent=43 // pred_region
          %448 = dma.done %s441, 12288
        $region60: #{tpu_custom_call.1} parent=43 // pred_fallthru
          _
        %s449 = sand.u32 %s37, 1
        %s450 = scalar_lea.sflag [#allocation9], %s449
        %s451 = sand.u32 %s165, 1
        %s452 = smul.addr %s451, 768
        %s453 = scalar_lea.vmem [#allocation10], %s452
        // Predicated region
        $region61: #{tpu_custom_call.1} parent=43 // pred_check
          %p454 = pneg %p178
        $region62: #{tpu_custom_call.1} parent=43 // pred_check_branch
          %456 = sbr.rel (%p454) target = $region64
        $region63: #{tpu_custom_call.1} parent=43 // pred_region
          %457 = dma.done %s450, 12288
        $region64: #{tpu_custom_call.1} parent=43 // pred_fallthru
          _
        %s458 = sand.u32 %s191, 1
        %s459 = scalar_lea.sflag [#allocation12], %s458
        %s460 = sand.u32 %s191, 1
        %s461 = smul.addr %s460, 2
        %s462 = scalar_lea.vmem [#allocation11], %s461
        // Predicated region
        $region65: #{tpu_custom_call.1} parent=43 // pred_check
          %p463 = pneg %p204
        $region66: #{tpu_custom_call.1} parent=43 // pred_check_branch
          %465 = sbr.rel (%p463) target = $region68
        $region67: #{tpu_custom_call.1} parent=43 // pred_region
          %466 = dma.done %s459, 32
        $region68: #{tpu_custom_call.1} parent=43 // pred_fallthru
          _
        %s467 = sand.u32 %s59, 1
        %s468 = scalar_lea.sflag [#allocation3], %s467
        %s469 = sand.u32 %s59, 1
        %s470 = smul.addr %s469, 256
        %s471 = scalar_lea.vmem [#allocation2], %s470
        %p472 = pneg %p72
        %p473 = pneg %p69
        %s474 = sand.u32 %s37, 1
        %s475 = scalar_lea.sflag [#allocation6], %s474
        %s476 = sand.u32 %s85, 1
        %s477 = smul.addr %s476, 256
        %s478 = scalar_lea.vmem [#allocation5], %s477
        %p479 = pneg %p98
        %p480 = pneg %p95
        %s481 = sand.u32 %s37, 1
        %s482 = scalar_lea.sflag [#allocation6], %s481
        %s483 = sand.u32 %s111, 1
        %s484 = smul.addr %s483, 2
        %s485 = scalar_lea.vmem [#allocation7], %s484
        %p486 = pneg %p124
        %p487 = pneg %p121
        %s488 = sand.u32 %s37, 1
        %s489 = scalar_lea.sflag [#allocation9], %s488
        %s490 = sand.u32 %s139, 1
        %s491 = smul.addr %s490, 768
        %s492 = scalar_lea.vmem [#allocation8], %s491
        %p493 = pneg %p152
        %p494 = pneg %p149
        %s495 = sand.u32 %s37, 1
        %s496 = scalar_lea.sflag [#allocation9], %s495
        %s497 = sand.u32 %s165, 1
        %s498 = smul.addr %s497, 768
        %s499 = scalar_lea.vmem [#allocation10], %s498
        %p500 = pneg %p178
        %p501 = pneg %p175
        %s502 = sand.u32 %s191, 1
        %s503 = scalar_lea.sflag [#allocation12], %s502
        %s504 = sand.u32 %s191, 1
        %s505 = smul.addr %s504, 2
        %s506 = scalar_lea.vmem [#allocation11], %s505
        %p507 = pneg %p204
        %p508 = pneg %p201
        %p509 = pneg %p232
        %p510 = pneg %p229
        %s511 = sand.u32 %s219, 1
        %s512 = scalar_lea.sflag [#allocation4], %s511
        %s513 = sand.u32 %s219, 1
        %s514 = smul.addr %s513, 512
        %s515 = scalar_lea.vmem [#allocation13], %s514
        %p516 = pneg %p260
        %p517 = pneg %p257
        %s518 = sand.u32 %s247, 1
        %s519 = scalar_lea.sflag [#allocation15], %s518
        %s520 = sand.u32 %s247, 1
        %s521 = smul.addr %s520, 512
        %s522 = scalar_lea.vmem [#allocation14], %s521
        %s523 = smul.u32 32, %s42
        %s524 = smul.u32 32, %s42
        %s525 = smul.u32 32, %s42
        %s526 = smul.u32 32, %s42
        %v527 = vld [vmem:[%s417] sm:$0xff]
        %v528 = vld [vmem:[%s417 + $0x8] sm:$0xff]
        %v529 = vld [vmem:[%s417 + $0x10] sm:$0xff]
        %v530 = vld [vmem:[%s417 + $0x18] sm:$0xff]
        %v531 = vld [vmem:[%s417 + $0x20] sm:$0xff]
        %v532 = vld [vmem:[%s417 + $0x28] sm:$0xff]
        %v533 = vld [vmem:[%s417 + $0x30] sm:$0xff]
        %v534 = vld [vmem:[%s417 + $0x38] sm:$0xff]
        %v535 = vld [vmem:[%s417 + $0x40] sm:$0xff]
        %v536 = vld [vmem:[%s417 + $0x48] sm:$0xff]
        %v537 = vld [vmem:[%s417 + $0x50] sm:$0xff]
        %v538 = vld [vmem:[%s417 + $0x58] sm:$0xff]
        %v539 = vld [vmem:[%s417 + $0x60] sm:$0xff]
        %v540 = vld [vmem:[%s417 + $0x68] sm:$0xff]
        %v541 = vld [vmem:[%s417 + $0x70] sm:$0xff]
        %v542 = vld [vmem:[%s417 + $0x78] sm:$0xff]
        %v543 = vld [vmem:[%s417 + $0x80] sm:$0xff]
        %v544 = vld [vmem:[%s417 + $0x88] sm:$0xff]
        %v545 = vld [vmem:[%s417 + $0x90] sm:$0xff]
        %v546 = vld [vmem:[%s417 + $0x98] sm:$0xff]
        %v547 = vld [vmem:[%s417 + $0xa0] sm:$0xff]
        %v548 = vld [vmem:[%s417 + $0xa8] sm:$0xff]
        %v549 = vld [vmem:[%s417 + $0xb0] sm:$0xff]
        %v550 = vld [vmem:[%s417 + $0xb8] sm:$0xff]
        %v551 = vld [vmem:[%s417 + $0xc0] sm:$0xff]
        %v552 = vld [vmem:[%s417 + $0xc8] sm:$0xff]
        %v553 = vld [vmem:[%s417 + $0xd0] sm:$0xff]
        %v554 = vld [vmem:[%s417 + $0xd8] sm:$0xff]
        %v555 = vld [vmem:[%s417 + $0xe0] sm:$0xff]
        %v556 = vld [vmem:[%s417 + $0xe8] sm:$0xff]
        %v557 = vld [vmem:[%s417 + $0xf0] sm:$0xff]
        %v558 = vld [vmem:[%s417 + $0xf8] sm:$0xff]
        %v559 = vld [vmem:[%s426] sm:$0xff]
        %v560 = vld [vmem:[%s426 + $0x8] sm:$0xff]
        %v561 = vld [vmem:[%s426 + $0x10] sm:$0xff]
        %v562 = vld [vmem:[%s426 + $0x18] sm:$0xff]
        %v563 = vld [vmem:[%s426 + $0x20] sm:$0xff]
        %v564 = vld [vmem:[%s426 + $0x28] sm:$0xff]
        %v565 = vld [vmem:[%s426 + $0x30] sm:$0xff]
        %v566 = vld [vmem:[%s426 + $0x38] sm:$0xff]
        %v567 = vld [vmem:[%s426 + $0x40] sm:$0xff]
        %v568 = vld [vmem:[%s426 + $0x48] sm:$0xff]
        %v569 = vld [vmem:[%s426 + $0x50] sm:$0xff]
        %v570 = vld [vmem:[%s426 + $0x58] sm:$0xff]
        %v571 = vld [vmem:[%s426 + $0x60] sm:$0xff]
        %v572 = vld [vmem:[%s426 + $0x68] sm:$0xff]
        %v573 = vld [vmem:[%s426 + $0x70] sm:$0xff]
        %v574 = vld [vmem:[%s426 + $0x78] sm:$0xff]
        %v575 = vld [vmem:[%s426 + $0x80] sm:$0xff]
        %v576 = vld [vmem:[%s426 + $0x88] sm:$0xff]
        %v577 = vld [vmem:[%s426 + $0x90] sm:$0xff]
        %v578 = vld [vmem:[%s426 + $0x98] sm:$0xff]
        %v579 = vld [vmem:[%s426 + $0xa0] sm:$0xff]
        %v580 = vld [vmem:[%s426 + $0xa8] sm:$0xff]
        %v581 = vld [vmem:[%s426 + $0xb0] sm:$0xff]
        %v582 = vld [vmem:[%s426 + $0xb8] sm:$0xff]
        %v583 = vld [vmem:[%s426 + $0xc0] sm:$0xff]
        %v584 = vld [vmem:[%s426 + $0xc8] sm:$0xff]
        %v585 = vld [vmem:[%s426 + $0xd0] sm:$0xff]
        %v586 = vld [vmem:[%s426 + $0xd8] sm:$0xff]
        %v587 = vld [vmem:[%s426 + $0xe0] sm:$0xff]
        %v588 = vld [vmem:[%s426 + $0xe8] sm:$0xff]
        %v589 = vld [vmem:[%s426 + $0xf0] sm:$0xff]
        %v590 = vld [vmem:[%s426 + $0xf8] sm:$0xff]
        %v591 = vmul.f32 %v527, %v527
        %v592 = vmul.f32 %v528, %v528
        %v593 = vmul.f32 %v529, %v529
        %v594 = vmul.f32 %v530, %v530
        %v595 = vmul.f32 %v531, %v531
        %v596 = vmul.f32 %v532, %v532
        %v597 = vmul.f32 %v533, %v533
        %v598 = vmul.f32 %v534, %v534
        %v599 = vmul.f32 %v535, %v535
        %v600 = vmul.f32 %v536, %v536
        %v601 = vmul.f32 %v537, %v537
        %v602 = vmul.f32 %v538, %v538
        %v603 = vmul.f32 %v539, %v539
        %v604 = vmul.f32 %v540, %v540
        %v605 = vmul.f32 %v541, %v541
        %v606 = vmul.f32 %v542, %v542
        %v607 = vmul.f32 %v543, %v543
        %v608 = vmul.f32 %v544, %v544
        %v609 = vmul.f32 %v545, %v545
        %v610 = vmul.f32 %v546, %v546
        %v611 = vmul.f32 %v547, %v547
        %v612 = vmul.f32 %v548, %v548
        %v613 = vmul.f32 %v549, %v549
        %v614 = vmul.f32 %v550, %v550
        %v615 = vmul.f32 %v551, %v551
        %v616 = vmul.f32 %v552, %v552
        %v617 = vmul.f32 %v553, %v553
        %v618 = vmul.f32 %v554, %v554
        %v619 = vmul.f32 %v555, %v555
        %v620 = vmul.f32 %v556, %v556
        %v621 = vmul.f32 %v557, %v557
        %v622 = vmul.f32 %v558, %v558
        %vm623 = vcmask 23552
        %v624 = vsel %vm623, %v591, 0.0
        %625 = vadd.xlane.f32.xlu0 %v624
        %v626 = vpop.xlane.xlu0 %625
        %v627 = vsel %vm623, %v592, 0.0
        %628 = vadd.xlane.f32.xlu0 %v627
        %v629 = vpop.xlane.xlu0 %628
        %v630 = vsel %vm623, %v593, 0.0
        %631 = vadd.xlane.f32.xlu0 %v630
        %v632 = vpop.xlane.xlu0 %631
        %v633 = vsel %vm623, %v594, 0.0
        %634 = vadd.xlane.f32.xlu0 %v633
        %v635 = vpop.xlane.xlu0 %634
        %v636 = vsel %vm623, %v595, 0.0
        %637 = vadd.xlane.f32.xlu0 %v636
        %v638 = vpop.xlane.xlu0 %637
        %v639 = vsel %vm623, %v596, 0.0
        %640 = vadd.xlane.f32.xlu0 %v639
        %v641 = vpop.xlane.xlu0 %640
        %v642 = vsel %vm623, %v597, 0.0
        %643 = vadd.xlane.f32.xlu0 %v642
        %v644 = vpop.xlane.xlu0 %643
        %v645 = vsel %vm623, %v598, 0.0
        %646 = vadd.xlane.f32.xlu0 %v645
        %v647 = vpop.xlane.xlu0 %646
        %v648 = vsel %vm623, %v599, 0.0
        %649 = vadd.xlane.f32.xlu0 %v648
        %v650 = vpop.xlane.xlu0 %649
        %v651 = vsel %vm623, %v600, 0.0
        %652 = vadd.xlane.f32.xlu0 %v651
        %v653 = vpop.xlane.xlu0 %652
        %v654 = vsel %vm623, %v601, 0.0
        %655 = vadd.xlane.f32.xlu0 %v654
        %v656 = vpop.xlane.xlu0 %655
        %v657 = vsel %vm623, %v602, 0.0
        %658 = vadd.xlane.f32.xlu0 %v657
        %v659 = vpop.xlane.xlu0 %658
        %v660 = vsel %vm623, %v603, 0.0
        %661 = vadd.xlane.f32.xlu0 %v660
        %v662 = vpop.xlane.xlu0 %661
        %v663 = vsel %vm623, %v604, 0.0
        %664 = vadd.xlane.f32.xlu0 %v663
        %v665 = vpop.xlane.xlu0 %664
        %v666 = vsel %vm623, %v605, 0.0
        %667 = vadd.xlane.f32.xlu0 %v666
        %v668 = vpop.xlane.xlu0 %667
        %v669 = vsel %vm623, %v606, 0.0
        %670 = vadd.xlane.f32.xlu0 %v669
        %v671 = vpop.xlane.xlu0 %670
        %v672 = vsel %vm623, %v607, 0.0
        %673 = vadd.xlane.f32.xlu0 %v672
        %v674 = vpop.xlane.xlu0 %673
        %v675 = vsel %vm623, %v608, 0.0
        %676 = vadd.xlane.f32.xlu0 %v675
        %v677 = vpop.xlane.xlu0 %676
        %v678 = vsel %vm623, %v609, 0.0
        %679 = vadd.xlane.f32.xlu0 %v678
        %v680 = vpop.xlane.xlu0 %679
        %v681 = vsel %vm623, %v610, 0.0
        %682 = vadd.xlane.f32.xlu0 %v681
        %v683 = vpop.xlane.xlu0 %682
        %v684 = vsel %vm623, %v611, 0.0
        %685 = vadd.xlane.f32.xlu0 %v684
        %v686 = vpop.xlane.xlu0 %685
        %v687 = vsel %vm623, %v612, 0.0
        %688 = vadd.xlane.f32.xlu0 %v687
        %v689 = vpop.xlane.xlu0 %688
        %v690 = vsel %vm623, %v613, 0.0
        %691 = vadd.xlane.f32.xlu0 %v690
        %v692 = vpop.xlane.xlu0 %691
        %v693 = vsel %vm623, %v614, 0.0
        %694 = vadd.xlane.f32.xlu0 %v693
        %v695 = vpop.xlane.xlu0 %694
        %v696 = vsel %vm623, %v615, 0.0
        %697 = vadd.xlane.f32.xlu0 %v696
        %v698 = vpop.xlane.xlu0 %697
        %v699 = vsel %vm623, %v616, 0.0
        %700 = vadd.xlane.f32.xlu0 %v699
        %v701 = vpop.xlane.xlu0 %700
        %v702 = vsel %vm623, %v617, 0.0
        %703 = vadd.xlane.f32.xlu0 %v702
        %v704 = vpop.xlane.xlu0 %703
        %v705 = vsel %vm623, %v618, 0.0
        %706 = vadd.xlane.f32.xlu0 %v705
        %v707 = vpop.xlane.xlu0 %706
        %v708 = vsel %vm623, %v619, 0.0
        %709 = vadd.xlane.f32.xlu0 %v708
        %v710 = vpop.xlane.xlu0 %709
        %v711 = vsel %vm623, %v620, 0.0
        %712 = vadd.xlane.f32.xlu0 %v711
        %v713 = vpop.xlane.xlu0 %712
        %v714 = vsel %vm623, %v621, 0.0
        %715 = vadd.xlane.f32.xlu0 %v714
        %v716 = vpop.xlane.xlu0 %715
        %v717 = vsel %vm623, %v622, 0.0
        %718 = vadd.xlane.f32.xlu0 %v717
        %v719 = vpop.xlane.xlu0 %718
        %v720 = vld [vmem:[%s435] sm:$0x3]
        %v722 = vsel %vm623, %v527, 0
        %v725 = vsel %vm623, %v528, 0
        %v728 = vsel %vm623, %v529, 0
        %v731 = vsel %vm623, %v530, 0
        %v734 = vsel %vm623, %v531, 0
        %v737 = vsel %vm623, %v532, 0
        %v740 = vsel %vm623, %v533, 0
        %v743 = vsel %vm623, %v534, 0
        %v746 = vsel %vm623, %v535, 0
        %v749 = vsel %vm623, %v536, 0
        %v752 = vsel %vm623, %v537, 0
        %v755 = vsel %vm623, %v538, 0
        %v758 = vsel %vm623, %v539, 0
        %v761 = vsel %vm623, %v540, 0
        %v764 = vsel %vm623, %v541, 0
        %v767 = vsel %vm623, %v542, 0
        %v770 = vsel %vm623, %v543, 0
        %v773 = vsel %vm623, %v544, 0
        %v776 = vsel %vm623, %v545, 0
        %v779 = vsel %vm623, %v546, 0
        %v782 = vsel %vm623, %v547, 0
        %v785 = vsel %vm623, %v548, 0
        %v788 = vsel %vm623, %v549, 0
        %v791 = vsel %vm623, %v550, 0
        %v794 = vsel %vm623, %v551, 0
        %v797 = vsel %vm623, %v552, 0
        %v800 = vsel %vm623, %v553, 0
        %v803 = vsel %vm623, %v554, 0
        %v806 = vsel %vm623, %v555, 0
        %v809 = vsel %vm623, %v556, 0
        %v812 = vsel %vm623, %v557, 0
        %v815 = vsel %vm623, %v558, 0
        %v818 = vsel %vm623, %v559, 0
        %v821 = vsel %vm623, %v560, 0
        %v824 = vsel %vm623, %v561, 0
        %v827 = vsel %vm623, %v562, 0
        %v830 = vsel %vm623, %v563, 0
        %v833 = vsel %vm623, %v564, 0
        %v836 = vsel %vm623, %v565, 0
        %v839 = vsel %vm623, %v566, 0
        %v842 = vsel %vm623, %v567, 0
        %v845 = vsel %vm623, %v568, 0
        %v848 = vsel %vm623, %v569, 0
        %v851 = vsel %vm623, %v570, 0
        %v854 = vsel %vm623, %v571, 0
        %v857 = vsel %vm623, %v572, 0
        %v860 = vsel %vm623, %v573, 0
        %v863 = vsel %vm623, %v574, 0
        %v866 = vsel %vm623, %v575, 0
        %v869 = vsel %vm623, %v576, 0
        %v872 = vsel %vm623, %v577, 0
        %v875 = vsel %vm623, %v578, 0
        %v878 = vsel %vm623, %v579, 0
        %v881 = vsel %vm623, %v580, 0
        %v884 = vsel %vm623, %v581, 0
        %v887 = vsel %vm623, %v582, 0
        %v890 = vsel %vm623, %v583, 0
        %v893 = vsel %vm623, %v584, 0
        %v896 = vsel %vm623, %v585, 0
        %v899 = vsel %vm623, %v586, 0
        %v902 = vsel %vm623, %v587, 0
        %v905 = vsel %vm623, %v588, 0
        %v908 = vsel %vm623, %v589, 0
        %v911 = vsel %vm623, %v590, 0
        %913 = vmatprep.subr.mxu0 0.0
        %914 = vmatpush1.xpose.msra.mxu0 %v818
        %915 = vmatprep.subr.mxu0 0.0
        %916 = vmatpush1.xpose.msra.mxu0 %v821
        %917 = vmatprep.subr.mxu0 0.0
        %918 = vmatpush1.xpose.msra.mxu0 %v824
        %919 = vmatprep.subr.mxu0 0.0
        %920 = vmatpush1.xpose.msra.mxu0 %v827
        %921 = vmatprep.subr.mxu0 0.0
        %922 = vmatpush1.xpose.msra.mxu0 %v830
        %923 = vmatprep.subr.mxu0 0.0
        %924 = vmatpush1.xpose.msra.mxu0 %v833
        %925 = vmatprep.subr.mxu0 0.0
        %926 = vmatpush1.xpose.msra.mxu0 %v836
        %927 = vmatprep.subr.mxu0 0.0
        %928 = vmatpush1.xpose.msra.mxu0 %v839
        %929 = vmatprep.subr.mxu0 0.0
        %930 = vmatpush1.xpose.msra.mxu0 %v842
        %931 = vmatprep.subr.mxu0 0.0
        %932 = vmatpush1.xpose.msra.mxu0 %v845
        %933 = vmatprep.subr.mxu0 0.0
        %934 = vmatpush1.xpose.msra.mxu0 %v848
        %935 = vmatprep.subr.mxu0 0.0
        %936 = vmatpush1.xpose.msra.mxu0 %v851
        %937 = vmatprep.subr.mxu0 0.0
        %938 = vmatpush1.xpose.msra.mxu0 %v854
        %939 = vmatprep.subr.mxu0 0.0
        %940 = vmatpush1.xpose.msra.mxu0 %v857
        %941 = vmatprep.subr.mxu0 0.0
        %942 = vmatpush1.xpose.msra.mxu0 %v860
        %943 = vmatprep.subr.mxu0 0.0
        %944 = vmatpush1.xpose.msra.mxu0 %v863
        %945 = vmatprep.subr.mxu0 0.0
        %946 = vmatpush1.xpose.msra.mxu0 %v866
        %947 = vmatprep.subr.mxu0 0.0
        %948 = vmatpush1.xpose.msra.mxu0 %v869
        %949 = vmatprep.subr.mxu0 0.0
        %950 = vmatpush1.xpose.msra.mxu0 %v872
        %951 = vmatprep.subr.mxu0 0.0
        %952 = vmatpush1.xpose.msra.mxu0 %v875
        %953 = vmatprep.subr.mxu0 0.0
        %954 = vmatpush1.xpose.msra.mxu0 %v878
        %955 = vmatprep.subr.mxu0 0.0
        %956 = vmatpush1.xpose.msra.mxu0 %v881
        %957 = vmatprep.subr.mxu0 0.0
        %958 = vmatpush1.xpose.msra.mxu0 %v884
        %959 = vmatprep.subr.mxu0 0.0
        %960 = vmatpush1.xpose.msra.mxu0 %v887
        %961 = vmatprep.subr.mxu0 0.0
        %962 = vmatpush1.xpose.msra.mxu0 %v890
        %963 = vmatprep.subr.mxu0 0.0
        %964 = vmatpush1.xpose.msra.mxu0 %v893
        %965 = vmatprep.subr.mxu0 0.0
        %966 = vmatpush1.xpose.msra.mxu0 %v896
        %967 = vmatprep.subr.mxu0 0.0
        %968 = vmatpush1.xpose.msra.mxu0 %v899
        %969 = vmatprep.subr.mxu0 0.0
        %970 = vmatpush1.xpose.msra.mxu0 %v902
        %971 = vmatprep.subr.mxu0 0.0
        %972 = vmatpush1.xpose.msra.mxu0 %v905
        %973 = vmatprep.subr.mxu0 0.0
        %974 = vmatpush1.xpose.msra.mxu0 %v908
        %975 = vmatprep.subr.mxu0 0.0
        %976 = vmatpush1.xpose.msra.mxu0 %v911
        %977 = vmatprep.mubr.f32.mxu0 0.0
        %978 = vmatmul.mubr.f32.gmra.mrb[0].mxu0 %v722
        %v979 = vpop.f32.mrb[0].mxu0
        %v980 = vadd.f32 0.0, %v979
        %v981 = vpop.f32.mrb[0].mxu0
        %v982 = vadd.f32 0.0, %v981
        %983 = vmatprep.mubr.f32.mxu0 0.0
        %984 = vmatmul.mubr.f32.gmra.mrb[0].mxu0 %v725
        %v985 = vpop.f32.mrb[0].mxu0
        %v986 = vadd.f32 0.0, %v985
        %v987 = vpop.f32.mrb[0].mxu0
        %v988 = vadd.f32 0.0, %v987
        %989 = vmatprep.mubr.f32.mxu0 0.0
        %990 = vmatmul.mubr.f32.gmra.mrb[0].mxu0 %v728
        %v991 = vpop.f32.mrb[0].mxu0
        %v992 = vadd.f32 0.0, %v991
        %v993 = vpop.f32.mrb[0].mxu0
        %v994 = vadd.f32 0.0, %v993
        %995 = vmatprep.mubr.f32.mxu0 0.0
        %996 = vmatmul.mubr.f32.gmra.mrb[0].mxu0 %v731
        %v997 = vpop.f32.mrb[0].mxu0
        %v998 = vadd.f32 0.0, %v997
        %v999 = vpop.f32.mrb[0].mxu0
        %v1000 = vadd.f32 0.0, %v999
        %1001 = vmatprep.mubr.f32.mxu0 0.0
        %1002 = vmatmul.mubr.f32.gmra.mrb[0].mxu0 %v734
        %v1003 = vpop.f32.mrb[0].mxu0
        %v1004 = vadd.f32 0.0, %v1003
        %v1005 = vpop.f32.mrb[0].mxu0
        %v1006 = vadd.f32 0.0, %v1005
        %1007 = vmatprep.mubr.f32.mxu0 0.0
        %1008 = vmatmul.mubr.f32.gmra.mrb[0].mxu0 %v737
        %v1009 = vpop.f32.mrb[0].mxu0
        %v1010 = vadd.f32 0.0, %v1009
        %v1011 = vpop.f32.mrb[0].mxu0
        %v1012 = vadd.f32 0.0, %v1011
        %1013 = vmatprep.mubr.f32.mxu0 0.0
        %1014 = vmatmul.mubr.f32.gmra.mrb[0].mxu0 %v740
        %v1015 = vpop.f32.mrb[0].mxu0
        %v1016 = vadd.f32 0.0, %v1015
        %v1017 = vpop.f32.mrb[0].mxu0
        %v1018 = vadd.f32 0.0, %v1017
        %1019 = vmatprep.mubr.f32.mxu0 0.0
        %1020 = vmatmul.mubr.f32.gmra.mrb[0].mxu0 %v743
        %v1021 = vpop.f32.mrb[0].mxu0
        %v1022 = vadd.f32 0.0, %v1021
        %v1023 = vpop.f32.mrb[0].mxu0
        %v1024 = vadd.f32 0.0, %v1023
        %1025 = vmatprep.mubr.f32.mxu0 0.0
        %1026 = vmatmul.mubr.f32.gmra.mrb[0].mxu0 %v746
        %v1027 = vpop.f32.mrb[0].mxu0
        %v1028 = vadd.f32 0.0, %v1027
        %v1029 = vpop.f32.mrb[0].mxu0
        %v1030 = vadd.f32 0.0, %v1029
        %1031 = vmatprep.mubr.f32.mxu0 0.0
        %1032 = vmatmul.mubr.f32.gmra.mrb[0].mxu0 %v749
        %v1033 = vpop.f32.mrb[0].mxu0
        %v1034 = vadd.f32 0.0, %v1033
        %v1035 = vpop.f32.mrb[0].mxu0
        %v1036 = vadd.f32 0.0, %v1035
        %1037 = vmatprep.mubr.f32.mxu0 0.0
        %1038 = vmatmul.mubr.f32.gmra.mrb[0].mxu0 %v752
        %v1039 = vpop.f32.mrb[0].mxu0
        %v1040 = vadd.f32 0.0, %v1039
        %v1041 = vpop.f32.mrb[0].mxu0
        %v1042 = vadd.f32 0.0, %v1041
        %1043 = vmatprep.mubr.f32.mxu0 0.0
        %1044 = vmatmul.mubr.f32.gmra.mrb[0].mxu0 %v755
        %v1045 = vpop.f32.mrb[0].mxu0
        %v1046 = vadd.f32 0.0, %v1045
        %v1047 = vpop.f32.mrb[0].mxu0
        %v1048 = vadd.f32 0.0, %v1047
        %1049 = vmatprep.mubr.f32.mxu0 0.0
        %1050 = vmatmul.mubr.f32.gmra.mrb[0].mxu0 %v758
        %v1051 = vpop.f32.mrb[0].mxu0
        %v1052 = vadd.f32 0.0, %v1051
        %v1053 = vpop.f32.mrb[0].mxu0
        %v1054 = vadd.f32 0.0, %v1053
        %1055 = vmatprep.mubr.f32.mxu0 0.0
        %1056 = vmatmul.mubr.f32.gmra.mrb[0].mxu0 %v761
        %v1057 = vpop.f32.mrb[0].mxu0
        %v1058 = vadd.f32 0.0, %v1057
        %v1059 = vpop.f32.mrb[0].mxu0
        %v1060 = vadd.f32 0.0, %v1059
        %1061 = vmatprep.mubr.f32.mxu0 0.0
        %1062 = vmatmul.mubr.f32.gmra.mrb[0].mxu0 %v764
        %v1063 = vpop.f32.mrb[0].mxu0
        %v1064 = vadd.f32 0.0, %v1063
        %v1065 = vpop.f32.mrb[0].mxu0
        %v1066 = vadd.f32 0.0, %v1065
        %1067 = vmatprep.mubr.f32.mxu0 0.0
        %1068 = vmatmul.mubr.f32.gmra.mrb[0].mxu0 %v767
        %v1069 = vpop.f32.mrb[0].mxu0
        %v1070 = vadd.f32 0.0, %v1069
        %v1071 = vpop.f32.mrb[0].mxu0
        %v1072 = vadd.f32 0.0, %v1071
        %1073 = vmatprep.mubr.f32.mxu0 0.0
        %1074 = vmatmul.mubr.f32.gmra.mrb[0].mxu0 %v770
        %v1075 = vpop.f32.mrb[0].mxu0
        %v1076 = vadd.f32 0.0, %v1075
        %v1077 = vpop.f32.mrb[0].mxu0
        %v1078 = vadd.f32 0.0, %v1077
        %1079 = vmatprep.mubr.f32.mxu0 0.0
        %1080 = vmatmul.mubr.f32.gmra.mrb[0].mxu0 %v773
        %v1081 = vpop.f32.mrb[0].mxu0
        %v1082 = vadd.f32 0.0, %v1081
        %v1083 = vpop.f32.mrb[0].mxu0
        %v1084 = vadd.f32 0.0, %v1083
        %1085 = vmatprep.mubr.f32.mxu0 0.0
        %1086 = vmatmul.mubr.f32.gmra.mrb[0].mxu0 %v776
        %v1087 = vpop.f32.mrb[0].mxu0
        %v1088 = vadd.f32 0.0, %v1087
        %v1089 = vpop.f32.mrb[0].mxu0
        %v1090 = vadd.f32 0.0, %v1089
        %1091 = vmatprep.mubr.f32.mxu0 0.0
        %1092 = vmatmul.mubr.f32.gmra.mrb[0].mxu0 %v779
        %v1093 = vpop.f32.mrb[0].mxu0
        %v1094 = vadd.f32 0.0, %v1093
        %v1095 = vpop.f32.mrb[0].mxu0
        %v1096 = vadd.f32 0.0, %v1095
        %1097 = vmatprep.mubr.f32.mxu0 0.0
        %1098 = vmatmul.mubr.f32.gmra.mrb[0].mxu0 %v782
        %v1099 = vpop.f32.mrb[0].mxu0
        %v1100 = vadd.f32 0.0, %v1099
        %v1101 = vpop.f32.mrb[0].mxu0
        %v1102 = vadd.f32 0.0, %v1101
        %1103 = vmatprep.mubr.f32.mxu0 0.0
        %1104 = vmatmul.mubr.f32.gmra.mrb[0].mxu0 %v785
        %v1105 = vpop.f32.mrb[0].mxu0
        %v1106 = vadd.f32 0.0, %v1105
        %v1107 = vpop.f32.mrb[0].mxu0
        %v1108 = vadd.f32 0.0, %v1107
        %1109 = vmatprep.mubr.f32.mxu0 0.0
        %1110 = vmatmul.mubr.f32.gmra.mrb[0].mxu0 %v788
        %v1111 = vpop.f32.mrb[0].mxu0
        %v1112 = vadd.f32 0.0, %v1111
        %v1113 = vpop.f32.mrb[0].mxu0
        %v1114 = vadd.f32 0.0, %v1113
        %1115 = vmatprep.mubr.f32.mxu0 0.0
        %1116 = vmatmul.mubr.f32.gmra.mrb[0].mxu0 %v791
        %v1117 = vpop.f32.mrb[0].mxu0
        %v1118 = vadd.f32 0.0, %v1117
        %v1119 = vpop.f32.mrb[0].mxu0
        %v1120 = vadd.f32 0.0, %v1119
        %1121 = vmatprep.mubr.f32.mxu0 0.0
        %1122 = vmatmul.mubr.f32.gmra.mrb[0].mxu0 %v794
        %v1123 = vpop.f32.mrb[0].mxu0
        %v1124 = vadd.f32 0.0, %v1123
        %v1125 = vpop.f32.mrb[0].mxu0
        %v1126 = vadd.f32 0.0, %v1125
        %1127 = vmatprep.mubr.f32.mxu0 0.0
        %1128 = vmatmul.mubr.f32.gmra.mrb[0].mxu0 %v797
        %v1129 = vpop.f32.mrb[0].mxu0
        %v1130 = vadd.f32 0.0, %v1129
        %v1131 = vpop.f32.mrb[0].mxu0
        %v1132 = vadd.f32 0.0, %v1131
        %1133 = vmatprep.mubr.f32.mxu0 0.0
        %1134 = vmatmul.mubr.f32.gmra.mrb[0].mxu0 %v800
        %v1135 = vpop.f32.mrb[0].mxu0
        %v1136 = vadd.f32 0.0, %v1135
        %v1137 = vpop.f32.mrb[0].mxu0
        %v1138 = vadd.f32 0.0, %v1137
        %1139 = vmatprep.mubr.f32.mxu0 0.0
        %1140 = vmatmul.mubr.f32.gmra.mrb[0].mxu0 %v803
        %v1141 = vpop.f32.mrb[0].mxu0
        %v1142 = vadd.f32 0.0, %v1141
        %v1143 = vpop.f32.mrb[0].mxu0
        %v1144 = vadd.f32 0.0, %v1143
        %1145 = vmatprep.mubr.f32.mxu0 0.0
        %1146 = vmatmul.mubr.f32.gmra.mrb[0].mxu0 %v806
        %v1147 = vpop.f32.mrb[0].mxu0
        %v1148 = vadd.f32 0.0, %v1147
        %v1149 = vpop.f32.mrb[0].mxu0
        %v1150 = vadd.f32 0.0, %v1149
        %1151 = vmatprep.mubr.f32.mxu0 0.0
        %1152 = vmatmul.mubr.f32.gmra.mrb[0].mxu0 %v809
        %v1153 = vpop.f32.mrb[0].mxu0
        %v1154 = vadd.f32 0.0, %v1153
        %v1155 = vpop.f32.mrb[0].mxu0
        %v1156 = vadd.f32 0.0, %v1155
        %1157 = vmatprep.mubr.f32.mxu0 0.0
        %1158 = vmatmul.mubr.f32.gmra.mrb[0].mxu0 %v812
        %v1159 = vpop.f32.mrb[0].mxu0
        %v1160 = vadd.f32 0.0, %v1159
        %v1161 = vpop.f32.mrb[0].mxu0
        %v1162 = vadd.f32 0.0, %v1161
        %1163 = vmatprep.mubr.f32.mxu0 0.0
        %1164 = vmatmul.mubr.f32.gmra.mrb[0].mxu0 %v815
        %v1165 = vpop.f32.mrb[0].mxu0
        %v1166 = vadd.f32 0.0, %v1165
        %v1167 = vpop.f32.mrb[0].mxu0
        %v1168 = vadd.f32 0.0, %v1167
        %1169 = vdwg.mxu0
        %v1170 = vmul.f32 %v980, 2.0
        %v1171 = vmul.f32 %v982, 2.0
        %v1172 = vmul.f32 %v986, 2.0
        %v1173 = vmul.f32 %v988, 2.0
        %v1174 = vmul.f32 %v992, 2.0
        %v1175 = vmul.f32 %v994, 2.0
        %v1176 = vmul.f32 %v998, 2.0
        %v1177 = vmul.f32 %v1000, 2.0
        %v1178 = vmul.f32 %v1004, 2.0
        %v1179 = vmul.f32 %v1006, 2.0
        %v1180 = vmul.f32 %v1010, 2.0
        %v1181 = vmul.f32 %v1012, 2.0
        %v1182 = vmul.f32 %v1016, 2.0
        %v1183 = vmul.f32 %v1018, 2.0
        %v1184 = vmul.f32 %v1022, 2.0
        %v1185 = vmul.f32 %v1024, 2.0
        %v1186 = vmul.f32 %v1028, 2.0
        %v1187 = vmul.f32 %v1030, 2.0
        %v1188 = vmul.f32 %v1034, 2.0
        %v1189 = vmul.f32 %v1036, 2.0
        %v1190 = vmul.f32 %v1040, 2.0
        %v1191 = vmul.f32 %v1042, 2.0
        %v1192 = vmul.f32 %v1046, 2.0
        %v1193 = vmul.f32 %v1048, 2.0
        %v1194 = vmul.f32 %v1052, 2.0
        %v1195 = vmul.f32 %v1054, 2.0
        %v1196 = vmul.f32 %v1058, 2.0
        %v1197 = vmul.f32 %v1060, 2.0
        %v1198 = vmul.f32 %v1064, 2.0
        %v1199 = vmul.f32 %v1066, 2.0
        %v1200 = vmul.f32 %v1070, 2.0
        %v1201 = vmul.f32 %v1072, 2.0
        %v1202 = vmul.f32 %v1076, 2.0
        %v1203 = vmul.f32 %v1078, 2.0
        %v1204 = vmul.f32 %v1082, 2.0
        %v1205 = vmul.f32 %v1084, 2.0
        %v1206 = vmul.f32 %v1088, 2.0
        %v1207 = vmul.f32 %v1090, 2.0
        %v1208 = vmul.f32 %v1094, 2.0
        %v1209 = vmul.f32 %v1096, 2.0
        %v1210 = vmul.f32 %v1100, 2.0
        %v1211 = vmul.f32 %v1102, 2.0
        %v1212 = vmul.f32 %v1106, 2.0
        %v1213 = vmul.f32 %v1108, 2.0
        %v1214 = vmul.f32 %v1112, 2.0
        %v1215 = vmul.f32 %v1114, 2.0
        %v1216 = vmul.f32 %v1118, 2.0
        %v1217 = vmul.f32 %v1120, 2.0
        %v1218 = vmul.f32 %v1124, 2.0
        %v1219 = vmul.f32 %v1126, 2.0
        %v1220 = vmul.f32 %v1130, 2.0
        %v1221 = vmul.f32 %v1132, 2.0
        %v1222 = vmul.f32 %v1136, 2.0
        %v1223 = vmul.f32 %v1138, 2.0
        %v1224 = vmul.f32 %v1142, 2.0
        %v1225 = vmul.f32 %v1144, 2.0
        %v1226 = vmul.f32 %v1148, 2.0
        %v1227 = vmul.f32 %v1150, 2.0
        %v1228 = vmul.f32 %v1154, 2.0
        %v1229 = vmul.f32 %v1156, 2.0
        %v1230 = vmul.f32 %v1160, 2.0
        %v1231 = vmul.f32 %v1162, 2.0
        %v1232 = vmul.f32 %v1166, 2.0
        %v1233 = vmul.f32 %v1168, 2.0
        %v1234 = vsub.f32 %v1170, %v626
        %v1235 = vsub.f32 %v1171, %v626
        %v1236 = vsub.f32 %v1172, %v629
        %v1237 = vsub.f32 %v1173, %v629
        %v1238 = vsub.f32 %v1174, %v632
        %v1239 = vsub.f32 %v1175, %v632
        %v1240 = vsub.f32 %v1176, %v635
        %v1241 = vsub.f32 %v1177, %v635
        %v1242 = vsub.f32 %v1178, %v638
        %v1243 = vsub.f32 %v1179, %v638
        %v1244 = vsub.f32 %v1180, %v641
        %v1245 = vsub.f32 %v1181, %v641
        %v1246 = vsub.f32 %v1182, %v644
        %v1247 = vsub.f32 %v1183, %v644
        %v1248 = vsub.f32 %v1184, %v647
        %v1249 = vsub.f32 %v1185, %v647
        %v1250 = vsub.f32 %v1186, %v650
        %v1251 = vsub.f32 %v1187, %v650
        %v1252 = vsub.f32 %v1188, %v653
        %v1253 = vsub.f32 %v1189, %v653
        %v1254 = vsub.f32 %v1190, %v656
        %v1255 = vsub.f32 %v1191, %v656
        %v1256 = vsub.f32 %v1192, %v659
        %v1257 = vsub.f32 %v1193, %v659
        %v1258 = vsub.f32 %v1194, %v662
        %v1259 = vsub.f32 %v1195, %v662
        %v1260 = vsub.f32 %v1196, %v665
        %v1261 = vsub.f32 %v1197, %v665
        %v1262 = vsub.f32 %v1198, %v668
        %v1263 = vsub.f32 %v1199, %v668
        %v1264 = vsub.f32 %v1200, %v671
        %v1265 = vsub.f32 %v1201, %v671
        %v1266 = vsub.f32 %v1202, %v674
        %v1267 = vsub.f32 %v1203, %v674
        %v1268 = vsub.f32 %v1204, %v677
        %v1269 = vsub.f32 %v1205, %v677
        %v1270 = vsub.f32 %v1206, %v680
        %v1271 = vsub.f32 %v1207, %v680
        %v1272 = vsub.f32 %v1208, %v683
        %v1273 = vsub.f32 %v1209, %v683
        %v1274 = vsub.f32 %v1210, %v686
        %v1275 = vsub.f32 %v1211, %v686
        %v1276 = vsub.f32 %v1212, %v689
        %v1277 = vsub.f32 %v1213, %v689
        %v1278 = vsub.f32 %v1214, %v692
        %v1279 = vsub.f32 %v1215, %v692
        %v1280 = vsub.f32 %v1216, %v695
        %v1281 = vsub.f32 %v1217, %v695
        %v1282 = vsub.f32 %v1218, %v698
        %v1283 = vsub.f32 %v1219, %v698
        %v1284 = vsub.f32 %v1220, %v701
        %v1285 = vsub.f32 %v1221, %v701
        %v1286 = vsub.f32 %v1222, %v704
        %v1287 = vsub.f32 %v1223, %v704
        %v1288 = vsub.f32 %v1224, %v707
        %v1289 = vsub.f32 %v1225, %v707
        %v1290 = vsub.f32 %v1226, %v710
        %v1291 = vsub.f32 %v1227, %v710
        %v1292 = vsub.f32 %v1228, %v713
        %v1293 = vsub.f32 %v1229, %v713
        %v1294 = vsub.f32 %v1230, %v716
        %v1295 = vsub.f32 %v1231, %v716
        %v1296 = vsub.f32 %v1232, %v719
        %v1297 = vsub.f32 %v1233, %v719
        %v1299 = vlaneseq
        %v1300 = vshrl.u32 %v1299, 7
        %v1301 = vsub.s32 0, %v1300
        %v1302 = vrot.slane %v720, %v1301
        %v1303 = vlaneseq
        %v1304 = vshrl.u32 %v1303, 7
        %v1305 = vsub.s32 1, %v1304
        %v1306 = vrot.slane %v720, %v1305
        %v1309 = vsub.f32 %v1234, %v1302
        %v1310 = vsub.f32 %v1235, %v1306
        %v1311 = vsub.f32 %v1236, %v1302
        %v1312 = vsub.f32 %v1237, %v1306
        %v1313 = vsub.f32 %v1238, %v1302
        %v1314 = vsub.f32 %v1239, %v1306
        %v1315 = vsub.f32 %v1240, %v1302
        %v1316 = vsub.f32 %v1241, %v1306
        %v1317 = vsub.f32 %v1242, %v1302
        %v1318 = vsub.f32 %v1243, %v1306
        %v1319 = vsub.f32 %v1244, %v1302
        %v1320 = vsub.f32 %v1245, %v1306
        %v1321 = vsub.f32 %v1246, %v1302
        %v1322 = vsub.f32 %v1247, %v1306
        %v1323 = vsub.f32 %v1248, %v1302
        %v1324 = vsub.f32 %v1249, %v1306
        %v1325 = vsub.f32 %v1250, %v1302
        %v1326 = vsub.f32 %v1251, %v1306
        %v1327 = vsub.f32 %v1252, %v1302
        %v1328 = vsub.f32 %v1253, %v1306
        %v1329 = vsub.f32 %v1254, %v1302
        %v1330 = vsub.f32 %v1255, %v1306
        %v1331 = vsub.f32 %v1256, %v1302
        %v1332 = vsub.f32 %v1257, %v1306
        %v1333 = vsub.f32 %v1258, %v1302
        %v1334 = vsub.f32 %v1259, %v1306
        %v1335 = vsub.f32 %v1260, %v1302
        %v1336 = vsub.f32 %v1261, %v1306
        %v1337 = vsub.f32 %v1262, %v1302
        %v1338 = vsub.f32 %v1263, %v1306
        %v1339 = vsub.f32 %v1264, %v1302
        %v1340 = vsub.f32 %v1265, %v1306
        %v1341 = vsub.f32 %v1266, %v1302
        %v1342 = vsub.f32 %v1267, %v1306
        %v1343 = vsub.f32 %v1268, %v1302
        %v1344 = vsub.f32 %v1269, %v1306
        %v1345 = vsub.f32 %v1270, %v1302
        %v1346 = vsub.f32 %v1271, %v1306
        %v1347 = vsub.f32 %v1272, %v1302
        %v1348 = vsub.f32 %v1273, %v1306
        %v1349 = vsub.f32 %v1274, %v1302
        %v1350 = vsub.f32 %v1275, %v1306
        %v1351 = vsub.f32 %v1276, %v1302
        %v1352 = vsub.f32 %v1277, %v1306
        %v1353 = vsub.f32 %v1278, %v1302
        %v1354 = vsub.f32 %v1279, %v1306
        %v1355 = vsub.f32 %v1280, %v1302
        %v1356 = vsub.f32 %v1281, %v1306
        %v1357 = vsub.f32 %v1282, %v1302
        %v1358 = vsub.f32 %v1283, %v1306
        %v1359 = vsub.f32 %v1284, %v1302
        %v1360 = vsub.f32 %v1285, %v1306
        %v1361 = vsub.f32 %v1286, %v1302
        %v1362 = vsub.f32 %v1287, %v1306
        %v1363 = vsub.f32 %v1288, %v1302
        %v1364 = vsub.f32 %v1289, %v1306
        %v1365 = vsub.f32 %v1290, %v1302
        %v1366 = vsub.f32 %v1291, %v1306
        %v1367 = vsub.f32 %v1292, %v1302
        %v1368 = vsub.f32 %v1293, %v1306
        %v1369 = vsub.f32 %v1294, %v1302
        %v1370 = vsub.f32 %v1295, %v1306
        %v1371 = vsub.f32 %v1296, %v1302
        %v1372 = vsub.f32 %v1297, %v1306
        %v1373 = vmin.f32 %v1309, 0.0
        %v1374 = vmin.f32 %v1310, 0.0
        %v1375 = vmin.f32 %v1311, 0.0
        %v1376 = vmin.f32 %v1312, 0.0
        %v1377 = vmin.f32 %v1313, 0.0
        %v1378 = vmin.f32 %v1314, 0.0
        %v1379 = vmin.f32 %v1315, 0.0
        %v1380 = vmin.f32 %v1316, 0.0
        %v1381 = vmin.f32 %v1317, 0.0
        %v1382 = vmin.f32 %v1318, 0.0
        %v1383 = vmin.f32 %v1319, 0.0
        %v1384 = vmin.f32 %v1320, 0.0
        %v1385 = vmin.f32 %v1321, 0.0
        %v1386 = vmin.f32 %v1322, 0.0
        %v1387 = vmin.f32 %v1323, 0.0
        %v1388 = vmin.f32 %v1324, 0.0
        %v1389 = vmin.f32 %v1325, 0.0
        %v1390 = vmin.f32 %v1326, 0.0
        %v1391 = vmin.f32 %v1327, 0.0
        %v1392 = vmin.f32 %v1328, 0.0
        %v1393 = vmin.f32 %v1329, 0.0
        %v1394 = vmin.f32 %v1330, 0.0
        %v1395 = vmin.f32 %v1331, 0.0
        %v1396 = vmin.f32 %v1332, 0.0
        %v1397 = vmin.f32 %v1333, 0.0
        %v1398 = vmin.f32 %v1334, 0.0
        %v1399 = vmin.f32 %v1335, 0.0
        %v1400 = vmin.f32 %v1336, 0.0
        %v1401 = vmin.f32 %v1337, 0.0
        %v1402 = vmin.f32 %v1338, 0.0
        %v1403 = vmin.f32 %v1339, 0.0
        %v1404 = vmin.f32 %v1340, 0.0
        %v1405 = vmin.f32 %v1341, 0.0
        %v1406 = vmin.f32 %v1342, 0.0
        %v1407 = vmin.f32 %v1343, 0.0
        %v1408 = vmin.f32 %v1344, 0.0
        %v1409 = vmin.f32 %v1345, 0.0
        %v1410 = vmin.f32 %v1346, 0.0
        %v1411 = vmin.f32 %v1347, 0.0
        %v1412 = vmin.f32 %v1348, 0.0
        %v1413 = vmin.f32 %v1349, 0.0
        %v1414 = vmin.f32 %v1350, 0.0
        %v1415 = vmin.f32 %v1351, 0.0
        %v1416 = vmin.f32 %v1352, 0.0
        %v1417 = vmin.f32 %v1353, 0.0
        %v1418 = vmin.f32 %v1354, 0.0
        %v1419 = vmin.f32 %v1355, 0.0
        %v1420 = vmin.f32 %v1356, 0.0
        %v1421 = vmin.f32 %v1357, 0.0
        %v1422 = vmin.f32 %v1358, 0.0
        %v1423 = vmin.f32 %v1359, 0.0
        %v1424 = vmin.f32 %v1360, 0.0
        %v1425 = vmin.f32 %v1361, 0.0
        %v1426 = vmin.f32 %v1362, 0.0
        %v1427 = vmin.f32 %v1363, 0.0
        %v1428 = vmin.f32 %v1364, 0.0
        %v1429 = vmin.f32 %v1365, 0.0
        %v1430 = vmin.f32 %v1366, 0.0
        %v1431 = vmin.f32 %v1367, 0.0
        %v1432 = vmin.f32 %v1368, 0.0
        %v1433 = vmin.f32 %v1369, 0.0
        %v1434 = vmin.f32 %v1370, 0.0
        %v1435 = vmin.f32 %v1371, 0.0
        %v1436 = vmin.f32 %v1372, 0.0
        %s1437 = smul.u32 %s42, 256
        %v1438 = vlaneseq
        %v1439 = vshrl.u32 %v1438, 7
        %v1440 = vadd.s32 %v1439, 8
        %v1441 = vadd.s32 %v1439, 16
        %v1442 = vadd.s32 %v1439, 24
        %v1443 = vadd.s32 %v1439, 32
        %v1444 = vadd.s32 %v1439, 40
        %v1445 = vadd.s32 %v1439, 48
        %v1446 = vadd.s32 %v1439, 56
        %v1447 = vadd.s32 %v1439, 64
        %v1448 = vadd.s32 %v1439, 72
        %v1449 = vadd.s32 %v1439, 80
        %v1450 = vadd.s32 %v1439, 88
        %v1451 = vadd.s32 %v1439, 96
        %v1452 = vadd.s32 %v1439, 104
        %v1453 = vadd.s32 %v1439, 112
        %v1454 = vadd.s32 %v1439, 120
        %v1455 = vadd.s32 %v1439, 128
        %v1456 = vadd.s32 %v1439, 136
        %v1457 = vadd.s32 %v1439, 144
        %v1458 = vadd.s32 %v1439, 152
        %v1459 = vadd.s32 %v1439, 160
        %v1460 = vadd.s32 %v1439, 168
        %v1461 = vadd.s32 %v1439, 176
        %v1462 = vadd.s32 %v1439, 184
        %v1463 = vadd.s32 %v1439, 192
        %v1464 = vadd.s32 %v1439, 200
        %v1465 = vadd.s32 %v1439, 208
        %v1466 = vadd.s32 %v1439, 216
        %v1467 = vadd.s32 %v1439, 224
        %v1468 = vadd.s32 %v1439, 232
        %v1469 = vadd.s32 %v1439, 240
        %v1470 = vadd.s32 %v1439, 248
        %v1471 = vstv %s1437
        %v1472 = vadd.s32 %v1471, %v1439
        %v1473 = vadd.s32 %v1471, %v1440
        %v1474 = vadd.s32 %v1471, %v1441
        %v1475 = vadd.s32 %v1471, %v1442
        %v1476 = vadd.s32 %v1471, %v1443
        %v1477 = vadd.s32 %v1471, %v1444
        %v1478 = vadd.s32 %v1471, %v1445
        %v1479 = vadd.s32 %v1471, %v1446
        %v1480 = vadd.s32 %v1471, %v1447
        %v1481 = vadd.s32 %v1471, %v1448
        %v1482 = vadd.s32 %v1471, %v1449
        %v1483 = vadd.s32 %v1471, %v1450
        %v1484 = vadd.s32 %v1471, %v1451
        %v1485 = vadd.s32 %v1471, %v1452
        %v1486 = vadd.s32 %v1471, %v1453
        %v1487 = vadd.s32 %v1471, %v1454
        %v1488 = vadd.s32 %v1471, %v1455
        %v1489 = vadd.s32 %v1471, %v1456
        %v1490 = vadd.s32 %v1471, %v1457
        %v1491 = vadd.s32 %v1471, %v1458
        %v1492 = vadd.s32 %v1471, %v1459
        %v1493 = vadd.s32 %v1471, %v1460
        %v1494 = vadd.s32 %v1471, %v1461
        %v1495 = vadd.s32 %v1471, %v1462
        %v1496 = vadd.s32 %v1471, %v1463
        %v1497 = vadd.s32 %v1471, %v1464
        %v1498 = vadd.s32 %v1471, %v1465
        %v1499 = vadd.s32 %v1471, %v1466
        %v1500 = vadd.s32 %v1471, %v1467
        %v1501 = vadd.s32 %v1471, %v1468
        %v1502 = vadd.s32 %v1471, %v1469
        %v1503 = vadd.s32 %v1471, %v1470
        %v1504 = vlaneseq
        %v1505 = vand.u32 %v1504, 127
        %v1506 = vadd.s32 %v1505, 128
        %vm1507 = vcmp.eq.s32.totalorder %v1472, %v1505
        %vm1508 = vcmp.eq.s32.totalorder %v1472, %v1506
        %vm1509 = vcmp.eq.s32.totalorder %v1473, %v1505
        %vm1510 = vcmp.eq.s32.totalorder %v1473, %v1506
        %vm1511 = vcmp.eq.s32.totalorder %v1474, %v1505
        %vm1512 = vcmp.eq.s32.totalorder %v1474, %v1506
        %vm1513 = vcmp.eq.s32.totalorder %v1475, %v1505
        %vm1514 = vcmp.eq.s32.totalorder %v1475, %v1506
        %vm1515 = vcmp.eq.s32.totalorder %v1476, %v1505
        %vm1516 = vcmp.eq.s32.totalorder %v1476, %v1506
        %vm1517 = vcmp.eq.s32.totalorder %v1477, %v1505
        %vm1518 = vcmp.eq.s32.totalorder %v1477, %v1506
        %vm1519 = vcmp.eq.s32.totalorder %v1478, %v1505
        %vm1520 = vcmp.eq.s32.totalorder %v1478, %v1506
        %vm1521 = vcmp.eq.s32.totalorder %v1479, %v1505
        %vm1522 = vcmp.eq.s32.totalorder %v1479, %v1506
        %vm1523 = vcmp.eq.s32.totalorder %v1480, %v1505
        %vm1524 = vcmp.eq.s32.totalorder %v1480, %v1506
        %vm1525 = vcmp.eq.s32.totalorder %v1481, %v1505
        %vm1526 = vcmp.eq.s32.totalorder %v1481, %v1506
        %vm1527 = vcmp.eq.s32.totalorder %v1482, %v1505
        %vm1528 = vcmp.eq.s32.totalorder %v1482, %v1506
        %vm1529 = vcmp.eq.s32.totalorder %v1483, %v1505
        %vm1530 = vcmp.eq.s32.totalorder %v1483, %v1506
        %vm1531 = vcmp.eq.s32.totalorder %v1484, %v1505
        %vm1532 = vcmp.eq.s32.totalorder %v1484, %v1506
        %vm1533 = vcmp.eq.s32.totalorder %v1485, %v1505
        %vm1534 = vcmp.eq.s32.totalorder %v1485, %v1506
        %vm1535 = vcmp.eq.s32.totalorder %v1486, %v1505
        %vm1536 = vcmp.eq.s32.totalorder %v1486, %v1506
        %vm1537 = vcmp.eq.s32.totalorder %v1487, %v1505
        %vm1538 = vcmp.eq.s32.totalorder %v1487, %v1506
        %vm1539 = vcmp.eq.s32.totalorder %v1488, %v1505
        %vm1540 = vcmp.eq.s32.totalorder %v1488, %v1506
        %vm1541 = vcmp.eq.s32.totalorder %v1489, %v1505
        %vm1542 = vcmp.eq.s32.totalorder %v1489, %v1506
        %vm1543 = vcmp.eq.s32.totalorder %v1490, %v1505
        %vm1544 = vcmp.eq.s32.totalorder %v1490, %v1506
        %vm1545 = vcmp.eq.s32.totalorder %v1491, %v1505
        %vm1546 = vcmp.eq.s32.totalorder %v1491, %v1506
        %vm1547 = vcmp.eq.s32.totalorder %v1492, %v1505
        %vm1548 = vcmp.eq.s32.totalorder %v1492, %v1506
        %vm1549 = vcmp.eq.s32.totalorder %v1493, %v1505
        %vm1550 = vcmp.eq.s32.totalorder %v1493, %v1506
        %vm1551 = vcmp.eq.s32.totalorder %v1494, %v1505
        %vm1552 = vcmp.eq.s32.totalorder %v1494, %v1506
        %vm1553 = vcmp.eq.s32.totalorder %v1495, %v1505
        %vm1554 = vcmp.eq.s32.totalorder %v1495, %v1506
        %vm1555 = vcmp.eq.s32.totalorder %v1496, %v1505
        %vm1556 = vcmp.eq.s32.totalorder %v1496, %v1506
        %vm1557 = vcmp.eq.s32.totalorder %v1497, %v1505
        %vm1558 = vcmp.eq.s32.totalorder %v1497, %v1506
        %vm1559 = vcmp.eq.s32.totalorder %v1498, %v1505
        %vm1560 = vcmp.eq.s32.totalorder %v1498, %v1506
        %vm1561 = vcmp.eq.s32.totalorder %v1499, %v1505
        %vm1562 = vcmp.eq.s32.totalorder %v1499, %v1506
        %vm1563 = vcmp.eq.s32.totalorder %v1500, %v1505
        %vm1564 = vcmp.eq.s32.totalorder %v1500, %v1506
        %vm1565 = vcmp.eq.s32.totalorder %v1501, %v1505
        %vm1566 = vcmp.eq.s32.totalorder %v1501, %v1506
        %vm1567 = vcmp.eq.s32.totalorder %v1502, %v1505
        %vm1568 = vcmp.eq.s32.totalorder %v1502, %v1506
        %vm1569 = vcmp.eq.s32.totalorder %v1503, %v1505
        %vm1570 = vcmp.eq.s32.totalorder %v1503, %v1506
        %v1571 = vsel %vm1507, -1e+30, %v1373
        %v1572 = vsel %vm1508, -1e+30, %v1374
        %v1573 = vsel %vm1509, -1e+30, %v1375
        %v1574 = vsel %vm1510, -1e+30, %v1376
        %v1575 = vsel %vm1511, -1e+30, %v1377
        %v1576 = vsel %vm1512, -1e+30, %v1378
        %v1577 = vsel %vm1513, -1e+30, %v1379
        %v1578 = vsel %vm1514, -1e+30, %v1380
        %v1579 = vsel %vm1515, -1e+30, %v1381
        %v1580 = vsel %vm1516, -1e+30, %v1382
        %v1581 = vsel %vm1517, -1e+30, %v1383
        %v1582 = vsel %vm1518, -1e+30, %v1384
        %v1583 = vsel %vm1519, -1e+30, %v1385
        %v1584 = vsel %vm1520, -1e+30, %v1386
        %v1585 = vsel %vm1521, -1e+30, %v1387
        %v1586 = vsel %vm1522, -1e+30, %v1388
        %v1587 = vsel %vm1523, -1e+30, %v1389
        %v1588 = vsel %vm1524, -1e+30, %v1390
        %v1589 = vsel %vm1525, -1e+30, %v1391
        %v1590 = vsel %vm1526, -1e+30, %v1392
        %v1591 = vsel %vm1527, -1e+30, %v1393
        %v1592 = vsel %vm1528, -1e+30, %v1394
        %v1593 = vsel %vm1529, -1e+30, %v1395
        %v1594 = vsel %vm1530, -1e+30, %v1396
        %v1595 = vsel %vm1531, -1e+30, %v1397
        %v1596 = vsel %vm1532, -1e+30, %v1398
        %v1597 = vsel %vm1533, -1e+30, %v1399
        %v1598 = vsel %vm1534, -1e+30, %v1400
        %v1599 = vsel %vm1535, -1e+30, %v1401
        %v1600 = vsel %vm1536, -1e+30, %v1402
        %v1601 = vsel %vm1537, -1e+30, %v1403
        %v1602 = vsel %vm1538, -1e+30, %v1404
        %v1603 = vsel %vm1539, -1e+30, %v1405
        %v1604 = vsel %vm1540, -1e+30, %v1406
        %v1605 = vsel %vm1541, -1e+30, %v1407
        %v1606 = vsel %vm1542, -1e+30, %v1408
        %v1607 = vsel %vm1543, -1e+30, %v1409
        %v1608 = vsel %vm1544, -1e+30, %v1410
        %v1609 = vsel %vm1545, -1e+30, %v1411
        %v1610 = vsel %vm1546, -1e+30, %v1412
        %v1611 = vsel %vm1547, -1e+30, %v1413
        %v1612 = vsel %vm1548, -1e+30, %v1414
        %v1613 = vsel %vm1549, -1e+30, %v1415
        %v1614 = vsel %vm1550, -1e+30, %v1416
        %v1615 = vsel %vm1551, -1e+30, %v1417
        %v1616 = vsel %vm1552, -1e+30, %v1418
        %v1617 = vsel %vm1553, -1e+30, %v1419
        %v1618 = vsel %vm1554, -1e+30, %v1420
        %v1619 = vsel %vm1555, -1e+30, %v1421
        %v1620 = vsel %vm1556, -1e+30, %v1422
        %v1621 = vsel %vm1557, -1e+30, %v1423
        %v1622 = vsel %vm1558, -1e+30, %v1424
        %v1623 = vsel %vm1559, -1e+30, %v1425
        %v1624 = vsel %vm1560, -1e+30, %v1426
        %v1625 = vsel %vm1561, -1e+30, %v1427
        %v1626 = vsel %vm1562, -1e+30, %v1428
        %v1627 = vsel %vm1563, -1e+30, %v1429
        %v1628 = vsel %vm1564, -1e+30, %v1430
        %v1629 = vsel %vm1565, -1e+30, %v1431
        %v1630 = vsel %vm1566, -1e+30, %v1432
        %v1631 = vsel %vm1567, -1e+30, %v1433
        %v1632 = vsel %vm1568, -1e+30, %v1434
        %v1633 = vsel %vm1569, -1e+30, %v1435
        %v1634 = vsel %vm1570, -1e+30, %v1436
        %1635 = vst [vmem:[%s515] sm:$0xff] %v1571
        %1636 = vst [vmem:[%s515 + $0x8] sm:$0xff] %v1572
        %1637 = vst [vmem:[%s515 + $0x10] sm:$0xff] %v1573
        %1638 = vst [vmem:[%s515 + $0x18] sm:$0xff] %v1574
        %1639 = vst [vmem:[%s515 + $0x20] sm:$0xff] %v1575
        %1640 = vst [vmem:[%s515 + $0x28] sm:$0xff] %v1576
        %1641 = vst [vmem:[%s515 + $0x30] sm:$0xff] %v1577
        %1642 = vst [vmem:[%s515 + $0x38] sm:$0xff] %v1578
        %1643 = vst [vmem:[%s515 + $0x40] sm:$0xff] %v1579
        %1644 = vst [vmem:[%s515 + $0x48] sm:$0xff] %v1580
        %1645 = vst [vmem:[%s515 + $0x50] sm:$0xff] %v1581
        %1646 = vst [vmem:[%s515 + $0x58] sm:$0xff] %v1582
        %1647 = vst [vmem:[%s515 + $0x60] sm:$0xff] %v1583
        %1648 = vst [vmem:[%s515 + $0x68] sm:$0xff] %v1584
        %1649 = vst [vmem:[%s515 + $0x70] sm:$0xff] %v1585
        %1650 = vst [vmem:[%s515 + $0x78] sm:$0xff] %v1586
        %1651 = vst [vmem:[%s515 + $0x80] sm:$0xff] %v1587
        %1652 = vst [vmem:[%s515 + $0x88] sm:$0xff] %v1588
        %1653 = vst [vmem:[%s515 + $0x90] sm:$0xff] %v1589
        %1654 = vst [vmem:[%s515 + $0x98] sm:$0xff] %v1590
        %1655 = vst [vmem:[%s515 + $0xa0] sm:$0xff] %v1591
        %1656 = vst [vmem:[%s515 + $0xa8] sm:$0xff] %v1592
        %1657 = vst [vmem:[%s515 + $0xb0] sm:$0xff] %v1593
        %1658 = vst [vmem:[%s515 + $0xb8] sm:$0xff] %v1594
        %1659 = vst [vmem:[%s515 + $0xc0] sm:$0xff] %v1595
        %1660 = vst [vmem:[%s515 + $0xc8] sm:$0xff] %v1596
        %1661 = vst [vmem:[%s515 + $0xd0] sm:$0xff] %v1597
        %1662 = vst [vmem:[%s515 + $0xd8] sm:$0xff] %v1598
        %1663 = vst [vmem:[%s515 + $0xe0] sm:$0xff] %v1599
        %1664 = vst [vmem:[%s515 + $0xe8] sm:$0xff] %v1600
        %1665 = vst [vmem:[%s515 + $0xf0] sm:$0xff] %v1601
        %1666 = vst [vmem:[%s515 + $0xf8] sm:$0xff] %v1602
        %1667 = vst [vmem:[%s515 + $0x100] sm:$0xff] %v1603
        %1668 = vst [vmem:[%s515 + $0x108] sm:$0xff] %v1604
        %1669 = vst [vmem:[%s515 + $0x110] sm:$0xff] %v1605
        %1670 = vst [vmem:[%s515 + $0x118] sm:$0xff] %v1606
        %1671 = vst [vmem:[%s515 + $0x120] sm:$0xff] %v1607
        %1672 = vst [vmem:[%s515 + $0x128] sm:$0xff] %v1608
        %1673 = vst [vmem:[%s515 + $0x130] sm:$0xff] %v1609
        %1674 = vst [vmem:[%s515 + $0x138] sm:$0xff] %v1610
        %1675 = vst [vmem:[%s515 + $0x140] sm:$0xff] %v1611
        %1676 = vst [vmem:[%s515 + $0x148] sm:$0xff] %v1612
        %1677 = vst [vmem:[%s515 + $0x150] sm:$0xff] %v1613
        %1678 = vst [vmem:[%s515 + $0x158] sm:$0xff] %v1614
        %1679 = vst [vmem:[%s515 + $0x160] sm:$0xff] %v1615
        %1680 = vst [vmem:[%s515 + $0x168] sm:$0xff] %v1616
        %1681 = vst [vmem:[%s515 + $0x170] sm:$0xff] %v1617
        %1682 = vst [vmem:[%s515 + $0x178] sm:$0xff] %v1618
        %1683 = vst [vmem:[%s515 + $0x180] sm:$0xff] %v1619
        %1684 = vst [vmem:[%s515 + $0x188] sm:$0xff] %v1620
        %1685 = vst [vmem:[%s515 + $0x190] sm:$0xff] %v1621
        %1686 = vst [vmem:[%s515 + $0x198] sm:$0xff] %v1622
        %1687 = vst [vmem:[%s515 + $0x1a0] sm:$0xff] %v1623
        %1688 = vst [vmem:[%s515 + $0x1a8] sm:$0xff] %v1624
        %1689 = vst [vmem:[%s515 + $0x1b0] sm:$0xff] %v1625
        %1690 = vst [vmem:[%s515 + $0x1b8] sm:$0xff] %v1626
        %1691 = vst [vmem:[%s515 + $0x1c0] sm:$0xff] %v1627
        %1692 = vst [vmem:[%s515 + $0x1c8] sm:$0xff] %v1628
        %1693 = vst [vmem:[%s515 + $0x1d0] sm:$0xff] %v1629
        %1694 = vst [vmem:[%s515 + $0x1d8] sm:$0xff] %v1630
        %1695 = vst [vmem:[%s515 + $0x1e0] sm:$0xff] %v1631
        %1696 = vst [vmem:[%s515 + $0x1e8] sm:$0xff] %v1632
        %1697 = vst [vmem:[%s515 + $0x1f0] sm:$0xff] %v1633
        %1698 = vst [vmem:[%s515 + $0x1f8] sm:$0xff] %v1634
        %v1699 = vld [vmem:[%s444] sm:$0xff]
        %v1700 = vld [vmem:[%s444 + $0x8] sm:$0xff]
        %v1701 = vld [vmem:[%s444 + $0x10] sm:$0xff]
        %v1702 = vld [vmem:[%s444 + $0x18] sm:$0xff]
        %v1703 = vld [vmem:[%s444 + $0x20] sm:$0xff]
        %v1704 = vld [vmem:[%s444 + $0x28] sm:$0xff]
        %v1705 = vld [vmem:[%s444 + $0x30] sm:$0xff]
        %v1706 = vld [vmem:[%s444 + $0x38] sm:$0xff]
        %v1707 = vld [vmem:[%s444 + $0x40] sm:$0xff]
        %v1708 = vld [vmem:[%s444 + $0x48] sm:$0xff]
        %v1709 = vld [vmem:[%s444 + $0x50] sm:$0xff]
        %v1710 = vld [vmem:[%s444 + $0x58] sm:$0xff]
        %v1711 = vld [vmem:[%s444 + $0x60] sm:$0xff]
        %v1712 = vld [vmem:[%s444 + $0x68] sm:$0xff]
        %v1713 = vld [vmem:[%s444 + $0x70] sm:$0xff]
        %v1714 = vld [vmem:[%s444 + $0x78] sm:$0xff]
        %v1715 = vld [vmem:[%s444 + $0x80] sm:$0xff]
        %v1716 = vld [vmem:[%s444 + $0x88] sm:$0xff]
        %v1717 = vld [vmem:[%s444 + $0x90] sm:$0xff]
        %v1718 = vld [vmem:[%s444 + $0x98] sm:$0xff]
        %v1719 = vld [vmem:[%s444 + $0xa0] sm:$0xff]
        %v1720 = vld [vmem:[%s444 + $0xa8] sm:$0xff]
        %v1721 = vld [vmem:[%s444 + $0xb0] sm:$0xff]
        %v1722 = vld [vmem:[%s444 + $0xb8] sm:$0xff]
        %v1723 = vld [vmem:[%s444 + $0xc0] sm:$0xff]
        %v1724 = vld [vmem:[%s444 + $0xc8] sm:$0xff]
        %v1725 = vld [vmem:[%s444 + $0xd0] sm:$0xff]
        %v1726 = vld [vmem:[%s444 + $0xd8] sm:$0xff]
        %v1727 = vld [vmem:[%s444 + $0xe0] sm:$0xff]
        %v1728 = vld [vmem:[%s444 + $0xe8] sm:$0xff]
        %v1729 = vld [vmem:[%s444 + $0xf0] sm:$0xff]
        %v1730 = vld [vmem:[%s444 + $0xf8] sm:$0xff]
        %v1731 = vld [vmem:[%s444 + $0x100] sm:$0xff]
        %v1732 = vld [vmem:[%s444 + $0x108] sm:$0xff]
        %v1733 = vld [vmem:[%s444 + $0x110] sm:$0xff]
        %v1734 = vld [vmem:[%s444 + $0x118] sm:$0xff]
        %v1735 = vld [vmem:[%s444 + $0x120] sm:$0xff]
        %v1736 = vld [vmem:[%s444 + $0x128] sm:$0xff]
        %v1737 = vld [vmem:[%s444 + $0x130] sm:$0xff]
        %v1738 = vld [vmem:[%s444 + $0x138] sm:$0xff]
        %v1739 = vld [vmem:[%s444 + $0x140] sm:$0xff]
        %v1740 = vld [vmem:[%s444 + $0x148] sm:$0xff]
        %v1741 = vld [vmem:[%s444 + $0x150] sm:$0xff]
        %v1742 = vld [vmem:[%s444 + $0x158] sm:$0xff]
        %v1743 = vld [vmem:[%s444 + $0x160] sm:$0xff]
        %v1744 = vld [vmem:[%s444 + $0x168] sm:$0xff]
        %v1745 = vld [vmem:[%s444 + $0x170] sm:$0xff]
        %v1746 = vld [vmem:[%s444 + $0x178] sm:$0xff]
        %v1747 = vld [vmem:[%s444 + $0x180] sm:$0xff]
        %v1748 = vld [vmem:[%s444 + $0x188] sm:$0xff]
        %v1749 = vld [vmem:[%s444 + $0x190] sm:$0xff]
        %v1750 = vld [vmem:[%s444 + $0x198] sm:$0xff]
        %v1751 = vld [vmem:[%s444 + $0x1a0] sm:$0xff]
        %v1752 = vld [vmem:[%s444 + $0x1a8] sm:$0xff]
        %v1753 = vld [vmem:[%s444 + $0x1b0] sm:$0xff]
        %v1754 = vld [vmem:[%s444 + $0x1b8] sm:$0xff]
        %v1755 = vld [vmem:[%s444 + $0x1c0] sm:$0xff]
        %v1756 = vld [vmem:[%s444 + $0x1c8] sm:$0xff]
        %v1757 = vld [vmem:[%s444 + $0x1d0] sm:$0xff]
        %v1758 = vld [vmem:[%s444 + $0x1d8] sm:$0xff]
        %v1759 = vld [vmem:[%s444 + $0x1e0] sm:$0xff]
        %v1760 = vld [vmem:[%s444 + $0x1e8] sm:$0xff]
        %v1761 = vld [vmem:[%s444 + $0x1f0] sm:$0xff]
        %v1762 = vld [vmem:[%s444 + $0x1f8] sm:$0xff]
        %v1763 = vld [vmem:[%s444 + $0x200] sm:$0xff]
        %v1764 = vld [vmem:[%s444 + $0x208] sm:$0xff]
        %v1765 = vld [vmem:[%s444 + $0x210] sm:$0xff]
        %v1766 = vld [vmem:[%s444 + $0x218] sm:$0xff]
        %v1767 = vld [vmem:[%s444 + $0x220] sm:$0xff]
        %v1768 = vld [vmem:[%s444 + $0x228] sm:$0xff]
        %v1769 = vld [vmem:[%s444 + $0x230] sm:$0xff]
        %v1770 = vld [vmem:[%s444 + $0x238] sm:$0xff]
        %v1771 = vld [vmem:[%s444 + $0x240] sm:$0xff]
        %v1772 = vld [vmem:[%s444 + $0x248] sm:$0xff]
        %v1773 = vld [vmem:[%s444 + $0x250] sm:$0xff]
        %v1774 = vld [vmem:[%s444 + $0x258] sm:$0xff]
        %v1775 = vld [vmem:[%s444 + $0x260] sm:$0xff]
        %v1776 = vld [vmem:[%s444 + $0x268] sm:$0xff]
        %v1777 = vld [vmem:[%s444 + $0x270] sm:$0xff]
        %v1778 = vld [vmem:[%s444 + $0x278] sm:$0xff]
        %v1779 = vld [vmem:[%s444 + $0x280] sm:$0xff]
        %v1780 = vld [vmem:[%s444 + $0x288] sm:$0xff]
        %v1781 = vld [vmem:[%s444 + $0x290] sm:$0xff]
        %v1782 = vld [vmem:[%s444 + $0x298] sm:$0xff]
        %v1783 = vld [vmem:[%s444 + $0x2a0] sm:$0xff]
        %v1784 = vld [vmem:[%s444 + $0x2a8] sm:$0xff]
        %v1785 = vld [vmem:[%s444 + $0x2b0] sm:$0xff]
        %v1786 = vld [vmem:[%s444 + $0x2b8] sm:$0xff]
        %v1787 = vld [vmem:[%s444 + $0x2c0] sm:$0xff]
        %v1788 = vld [vmem:[%s444 + $0x2c8] sm:$0xff]
        %v1789 = vld [vmem:[%s444 + $0x2d0] sm:$0xff]
        %v1790 = vld [vmem:[%s444 + $0x2d8] sm:$0xff]
        %v1791 = vld [vmem:[%s444 + $0x2e0] sm:$0xff]
        %v1792 = vld [vmem:[%s444 + $0x2e8] sm:$0xff]
        %v1793 = vld [vmem:[%s444 + $0x2f0] sm:$0xff]
        %v1794 = vld [vmem:[%s444 + $0x2f8] sm:$0xff]
        %v1795 = vld [vmem:[%s453] sm:$0xff]
        %v1796 = vld [vmem:[%s453 + $0x8] sm:$0xff]
        %v1797 = vld [vmem:[%s453 + $0x10] sm:$0xff]
        %v1798 = vld [vmem:[%s453 + $0x18] sm:$0xff]
        %v1799 = vld [vmem:[%s453 + $0x20] sm:$0xff]
        %v1800 = vld [vmem:[%s453 + $0x28] sm:$0xff]
        %v1801 = vld [vmem:[%s453 + $0x30] sm:$0xff]
        %v1802 = vld [vmem:[%s453 + $0x38] sm:$0xff]
        %v1803 = vld [vmem:[%s453 + $0x40] sm:$0xff]
        %v1804 = vld [vmem:[%s453 + $0x48] sm:$0xff]
        %v1805 = vld [vmem:[%s453 + $0x50] sm:$0xff]
        %v1806 = vld [vmem:[%s453 + $0x58] sm:$0xff]
        %v1807 = vld [vmem:[%s453 + $0x60] sm:$0xff]
        %v1808 = vld [vmem:[%s453 + $0x68] sm:$0xff]
        %v1809 = vld [vmem:[%s453 + $0x70] sm:$0xff]
        %v1810 = vld [vmem:[%s453 + $0x78] sm:$0xff]
        %v1811 = vld [vmem:[%s453 + $0x80] sm:$0xff]
        %v1812 = vld [vmem:[%s453 + $0x88] sm:$0xff]
        %v1813 = vld [vmem:[%s453 + $0x90] sm:$0xff]
        %v1814 = vld [vmem:[%s453 + $0x98] sm:$0xff]
        %v1815 = vld [vmem:[%s453 + $0xa0] sm:$0xff]
        %v1816 = vld [vmem:[%s453 + $0xa8] sm:$0xff]
        %v1817 = vld [vmem:[%s453 + $0xb0] sm:$0xff]
        %v1818 = vld [vmem:[%s453 + $0xb8] sm:$0xff]
        %v1819 = vld [vmem:[%s453 + $0xc0] sm:$0xff]
        %v1820 = vld [vmem:[%s453 + $0xc8] sm:$0xff]
        %v1821 = vld [vmem:[%s453 + $0xd0] sm:$0xff]
        %v1822 = vld [vmem:[%s453 + $0xd8] sm:$0xff]
        %v1823 = vld [vmem:[%s453 + $0xe0] sm:$0xff]
        %v1824 = vld [vmem:[%s453 + $0xe8] sm:$0xff]
        %v1825 = vld [vmem:[%s453 + $0xf0] sm:$0xff]
        %v1826 = vld [vmem:[%s453 + $0xf8] sm:$0xff]
        %v1827 = vld [vmem:[%s453 + $0x100] sm:$0xff]
        %v1828 = vld [vmem:[%s453 + $0x108] sm:$0xff]
        %v1829 = vld [vmem:[%s453 + $0x110] sm:$0xff]
        %v1830 = vld [vmem:[%s453 + $0x118] sm:$0xff]
        %v1831 = vld [vmem:[%s453 + $0x120] sm:$0xff]
        %v1832 = vld [vmem:[%s453 + $0x128] sm:$0xff]
        %v1833 = vld [vmem:[%s453 + $0x130] sm:$0xff]
        %v1834 = vld [vmem:[%s453 + $0x138] sm:$0xff]
        %v1835 = vld [vmem:[%s453 + $0x140] sm:$0xff]
        %v1836 = vld [vmem:[%s453 + $0x148] sm:$0xff]
        %v1837 = vld [vmem:[%s453 + $0x150] sm:$0xff]
        %v1838 = vld [vmem:[%s453 + $0x158] sm:$0xff]
        %v1839 = vld [vmem:[%s453 + $0x160] sm:$0xff]
        %v1840 = vld [vmem:[%s453 + $0x168] sm:$0xff]
        %v1841 = vld [vmem:[%s453 + $0x170] sm:$0xff]
        %v1842 = vld [vmem:[%s453 + $0x178] sm:$0xff]
        %v1843 = vld [vmem:[%s453 + $0x180] sm:$0xff]
        %v1844 = vld [vmem:[%s453 + $0x188] sm:$0xff]
        %v1845 = vld [vmem:[%s453 + $0x190] sm:$0xff]
        %v1846 = vld [vmem:[%s453 + $0x198] sm:$0xff]
        %v1847 = vld [vmem:[%s453 + $0x1a0] sm:$0xff]
        %v1848 = vld [vmem:[%s453 + $0x1a8] sm:$0xff]
        %v1849 = vld [vmem:[%s453 + $0x1b0] sm:$0xff]
        %v1850 = vld [vmem:[%s453 + $0x1b8] sm:$0xff]
        %v1851 = vld [vmem:[%s453 + $0x1c0] sm:$0xff]
        %v1852 = vld [vmem:[%s453 + $0x1c8] sm:$0xff]
        %v1853 = vld [vmem:[%s453 + $0x1d0] sm:$0xff]
        %v1854 = vld [vmem:[%s453 + $0x1d8] sm:$0xff]
        %v1855 = vld [vmem:[%s453 + $0x1e0] sm:$0xff]
        %v1856 = vld [vmem:[%s453 + $0x1e8] sm:$0xff]
        %v1857 = vld [vmem:[%s453 + $0x1f0] sm:$0xff]
        %v1858 = vld [vmem:[%s453 + $0x1f8] sm:$0xff]
        %v1859 = vld [vmem:[%s453 + $0x200] sm:$0xff]
        %v1860 = vld [vmem:[%s453 + $0x208] sm:$0xff]
        %v1861 = vld [vmem:[%s453 + $0x210] sm:$0xff]
        %v1862 = vld [vmem:[%s453 + $0x218] sm:$0xff]
        %v1863 = vld [vmem:[%s453 + $0x220] sm:$0xff]
        %v1864 = vld [vmem:[%s453 + $0x228] sm:$0xff]
        %v1865 = vld [vmem:[%s453 + $0x230] sm:$0xff]
        %v1866 = vld [vmem:[%s453 + $0x238] sm:$0xff]
        %v1867 = vld [vmem:[%s453 + $0x240] sm:$0xff]
        %v1868 = vld [vmem:[%s453 + $0x248] sm:$0xff]
        %v1869 = vld [vmem:[%s453 + $0x250] sm:$0xff]
        %v1870 = vld [vmem:[%s453 + $0x258] sm:$0xff]
        %v1871 = vld [vmem:[%s453 + $0x260] sm:$0xff]
        %v1872 = vld [vmem:[%s453 + $0x268] sm:$0xff]
        %v1873 = vld [vmem:[%s453 + $0x270] sm:$0xff]
        %v1874 = vld [vmem:[%s453 + $0x278] sm:$0xff]
        %v1875 = vld [vmem:[%s453 + $0x280] sm:$0xff]
        %v1876 = vld [vmem:[%s453 + $0x288] sm:$0xff]
        %v1877 = vld [vmem:[%s453 + $0x290] sm:$0xff]
        %v1878 = vld [vmem:[%s453 + $0x298] sm:$0xff]
        %v1879 = vld [vmem:[%s453 + $0x2a0] sm:$0xff]
        %v1880 = vld [vmem:[%s453 + $0x2a8] sm:$0xff]
        %v1881 = vld [vmem:[%s453 + $0x2b0] sm:$0xff]
        %v1882 = vld [vmem:[%s453 + $0x2b8] sm:$0xff]
        %v1883 = vld [vmem:[%s453 + $0x2c0] sm:$0xff]
        %v1884 = vld [vmem:[%s453 + $0x2c8] sm:$0xff]
        %v1885 = vld [vmem:[%s453 + $0x2d0] sm:$0xff]
        %v1886 = vld [vmem:[%s453 + $0x2d8] sm:$0xff]
        %v1887 = vld [vmem:[%s453 + $0x2e0] sm:$0xff]
        %v1888 = vld [vmem:[%s453 + $0x2e8] sm:$0xff]
        %v1889 = vld [vmem:[%s453 + $0x2f0] sm:$0xff]
        %v1890 = vld [vmem:[%s453 + $0x2f8] sm:$0xff]
        %v1891 = vmul.f32 %v1699, %v1699
        %v1892 = vmul.f32 %v1700, %v1700
        %v1893 = vmul.f32 %v1701, %v1701
        %v1894 = vmul.f32 %v1702, %v1702
        %v1895 = vmul.f32 %v1703, %v1703
        %v1896 = vmul.f32 %v1704, %v1704
        %v1897 = vmul.f32 %v1705, %v1705
        %v1898 = vmul.f32 %v1706, %v1706
        %v1899 = vmul.f32 %v1707, %v1707
        %v1900 = vmul.f32 %v1708, %v1708
        %v1901 = vmul.f32 %v1709, %v1709
        %v1902 = vmul.f32 %v1710, %v1710
        %v1903 = vmul.f32 %v1711, %v1711
        %v1904 = vmul.f32 %v1712, %v1712
        %v1905 = vmul.f32 %v1713, %v1713
        %v1906 = vmul.f32 %v1714, %v1714
        %v1907 = vmul.f32 %v1715, %v1715
        %v1908 = vmul.f32 %v1716, %v1716
        %v1909 = vmul.f32 %v1717, %v1717
        %v1910 = vmul.f32 %v1718, %v1718
        %v1911 = vmul.f32 %v1719, %v1719
        %v1912 = vmul.f32 %v1720, %v1720
        %v1913 = vmul.f32 %v1721, %v1721
        %v1914 = vmul.f32 %v1722, %v1722
        %v1915 = vmul.f32 %v1723, %v1723
        %v1916 = vmul.f32 %v1724, %v1724
        %v1917 = vmul.f32 %v1725, %v1725
        %v1918 = vmul.f32 %v1726, %v1726
        %v1919 = vmul.f32 %v1727, %v1727
        %v1920 = vmul.f32 %v1728, %v1728
        %v1921 = vmul.f32 %v1729, %v1729
        %v1922 = vmul.f32 %v1730, %v1730
        %v1923 = vmul.f32 %v1731, %v1731
        %v1924 = vmul.f32 %v1732, %v1732
        %v1925 = vmul.f32 %v1733, %v1733
        %v1926 = vmul.f32 %v1734, %v1734
        %v1927 = vmul.f32 %v1735, %v1735
        %v1928 = vmul.f32 %v1736, %v1736
        %v1929 = vmul.f32 %v1737, %v1737
        %v1930 = vmul.f32 %v1738, %v1738
        %v1931 = vmul.f32 %v1739, %v1739
        %v1932 = vmul.f32 %v1740, %v1740
        %v1933 = vmul.f32 %v1741, %v1741
        %v1934 = vmul.f32 %v1742, %v1742
        %v1935 = vmul.f32 %v1743, %v1743
        %v1936 = vmul.f32 %v1744, %v1744
        %v1937 = vmul.f32 %v1745, %v1745
        %v1938 = vmul.f32 %v1746, %v1746
        %v1939 = vmul.f32 %v1747, %v1747
        %v1940 = vmul.f32 %v1748, %v1748
        %v1941 = vmul.f32 %v1749, %v1749
        %v1942 = vmul.f32 %v1750, %v1750
        %v1943 = vmul.f32 %v1751, %v1751
        %v1944 = vmul.f32 %v1752, %v1752
        %v1945 = vmul.f32 %v1753, %v1753
        %v1946 = vmul.f32 %v1754, %v1754
        %v1947 = vmul.f32 %v1755, %v1755
        %v1948 = vmul.f32 %v1756, %v1756
        %v1949 = vmul.f32 %v1757, %v1757
        %v1950 = vmul.f32 %v1758, %v1758
        %v1951 = vmul.f32 %v1759, %v1759
        %v1952 = vmul.f32 %v1760, %v1760
        %v1953 = vmul.f32 %v1761, %v1761
        %v1954 = vmul.f32 %v1762, %v1762
        %v1955 = vmul.f32 %v1763, %v1763
        %v1956 = vmul.f32 %v1764, %v1764
        %v1957 = vmul.f32 %v1765, %v1765
        %v1958 = vmul.f32 %v1766, %v1766
        %v1959 = vmul.f32 %v1767, %v1767
        %v1960 = vmul.f32 %v1768, %v1768
        %v1961 = vmul.f32 %v1769, %v1769
        %v1962 = vmul.f32 %v1770, %v1770
        %v1963 = vmul.f32 %v1771, %v1771
        %v1964 = vmul.f32 %v1772, %v1772
        %v1965 = vmul.f32 %v1773, %v1773
        %v1966 = vmul.f32 %v1774, %v1774
        %v1967 = vmul.f32 %v1775, %v1775
        %v1968 = vmul.f32 %v1776, %v1776
        %v1969 = vmul.f32 %v1777, %v1777
        %v1970 = vmul.f32 %v1778, %v1778
        %v1971 = vmul.f32 %v1779, %v1779
        %v1972 = vmul.f32 %v1780, %v1780
        %v1973 = vmul.f32 %v1781, %v1781
        %v1974 = vmul.f32 %v1782, %v1782
        %v1975 = vmul.f32 %v1783, %v1783
        %v1976 = vmul.f32 %v1784, %v1784
        %v1977 = vmul.f32 %v1785, %v1785
        %v1978 = vmul.f32 %v1786, %v1786
        %v1979 = vmul.f32 %v1787, %v1787
        %v1980 = vmul.f32 %v1788, %v1788
        %v1981 = vmul.f32 %v1789, %v1789
        %v1982 = vmul.f32 %v1790, %v1790
        %v1983 = vmul.f32 %v1791, %v1791
        %v1984 = vmul.f32 %v1792, %v1792
        %v1985 = vmul.f32 %v1793, %v1793
        %v1986 = vmul.f32 %v1794, %v1794
        %v1987 = vadd.f32 %v1891, %v1892
        %vm1988 = vcmask 269312
        %v1989 = vsel %vm1988, %v1893, 0.0
        %v1990 = vadd.f32 %v1987, %v1989
        %1991 = vadd.xlane.f32.xlu0 %v1990
        %v1992 = vpop.xlane.xlu0 %1991
        %v1993 = vadd.f32 %v1894, %v1895
        %v1994 = vsel %vm1988, %v1896, 0.0
        %v1995 = vadd.f32 %v1993, %v1994
        %1996 = vadd.xlane.f32.xlu0 %v1995
        %v1997 = vpop.xlane.xlu0 %1996
        %v1998 = vadd.f32 %v1897, %v1898
        %v1999 = vsel %vm1988, %v1899, 0.0
        %v2000 = vadd.f32 %v1998, %v1999
        %2001 = vadd.xlane.f32.xlu0 %v2000
        %v2002 = vpop.xlane.xlu0 %2001
        %v2003 = vadd.f32 %v1900, %v1901
        %v2004 = vsel %vm1988, %v1902, 0.0
        %v2005 = vadd.f32 %v2003, %v2004
        %2006 = vadd.xlane.f32.xlu0 %v2005
        %v2007 = vpop.xlane.xlu0 %2006
        %v2008 = vadd.f32 %v1903, %v1904
        %v2009 = vsel %vm1988, %v1905, 0.0
        %v2010 = vadd.f32 %v2008, %v2009
        %2011 = vadd.xlane.f32.xlu0 %v2010
        %v2012 = vpop.xlane.xlu0 %2011
        %v2013 = vadd.f32 %v1906, %v1907
        %v2014 = vsel %vm1988, %v1908, 0.0
        %v2015 = vadd.f32 %v2013, %v2014
        %2016 = vadd.xlane.f32.xlu0 %v2015
        %v2017 = vpop.xlane.xlu0 %2016
        %v2018 = vadd.f32 %v1909, %v1910
        %v2019 = vsel %vm1988, %v1911, 0.0
        %v2020 = vadd.f32 %v2018, %v2019
        %2021 = vadd.xlane.f32.xlu0 %v2020
        %v2022 = vpop.xlane.xlu0 %2021
        %v2023 = vadd.f32 %v1912, %v1913
        %v2024 = vsel %vm1988, %v1914, 0.0
        %v2025 = vadd.f32 %v2023, %v2024
        %2026 = vadd.xlane.f32.xlu0 %v2025
        %v2027 = vpop.xlane.xlu0 %2026
        %v2028 = vadd.f32 %v1915, %v1916
        %v2029 = vsel %vm1988, %v1917, 0.0
        %v2030 = vadd.f32 %v2028, %v2029
        %2031 = vadd.xlane.f32.xlu0 %v2030
        %v2032 = vpop.xlane.xlu0 %2031
        %v2033 = vadd.f32 %v1918, %v1919
        %v2034 = vsel %vm1988, %v1920, 0.0
        %v2035 = vadd.f32 %v2033, %v2034
        %2036 = vadd.xlane.f32.xlu0 %v2035
        %v2037 = vpop.xlane.xlu0 %2036
        %v2038 = vadd.f32 %v1921, %v1922
        %v2039 = vsel %vm1988, %v1923, 0.0
        %v2040 = vadd.f32 %v2038, %v2039
        %2041 = vadd.xlane.f32.xlu0 %v2040
        %v2042 = vpop.xlane.xlu0 %2041
        %v2043 = vadd.f32 %v1924, %v1925
        %v2044 = vsel %vm1988, %v1926, 0.0
        %v2045 = vadd.f32 %v2043, %v2044
        %2046 = vadd.xlane.f32.xlu0 %v2045
        %v2047 = vpop.xlane.xlu0 %2046
        %v2048 = vadd.f32 %v1927, %v1928
        %v2049 = vsel %vm1988, %v1929, 0.0
        %v2050 = vadd.f32 %v2048, %v2049
        %2051 = vadd.xlane.f32.xlu0 %v2050
        %v2052 = vpop.xlane.xlu0 %2051
        %v2053 = vadd.f32 %v1930, %v1931
        %v2054 = vsel %vm1988, %v1932, 0.0
        %v2055 = vadd.f32 %v2053, %v2054
        %2056 = vadd.xlane.f32.xlu0 %v2055
        %v2057 = vpop.xlane.xlu0 %2056
        %v2058 = vadd.f32 %v1933, %v1934
        %v2059 = vsel %vm1988, %v1935, 0.0
        %v2060 = vadd.f32 %v2058, %v2059
        %2061 = vadd.xlane.f32.xlu0 %v2060
        %v2062 = vpop.xlane.xlu0 %2061
        %v2063 = vadd.f32 %v1936, %v1937
        %v2064 = vsel %vm1988, %v1938, 0.0
        %v2065 = vadd.f32 %v2063, %v2064
        %2066 = vadd.xlane.f32.xlu0 %v2065
        %v2067 = vpop.xlane.xlu0 %2066
        %v2068 = vadd.f32 %v1939, %v1940
        %v2069 = vsel %vm1988, %v1941, 0.0
        %v2070 = vadd.f32 %v2068, %v2069
        %2071 = vadd.xlane.f32.xlu0 %v2070
        %v2072 = vpop.xlane.xlu0 %2071
        %v2073 = vadd.f32 %v1942, %v1943
        %v2074 = vsel %vm1988, %v1944, 0.0
        %v2075 = vadd.f32 %v2073, %v2074
        %2076 = vadd.xlane.f32.xlu0 %v2075
        %v2077 = vpop.xlane.xlu0 %2076
        %v2078 = vadd.f32 %v1945, %v1946
        %v2079 = vsel %vm1988, %v1947, 0.0
        %v2080 = vadd.f32 %v2078, %v2079
        %2081 = vadd.xlane.f32.xlu0 %v2080
        %v2082 = vpop.xlane.xlu0 %2081
        %v2083 = vadd.f32 %v1948, %v1949
        %v2084 = vsel %vm1988, %v1950, 0.0
        %v2085 = vadd.f32 %v2083, %v2084
        %2086 = vadd.xlane.f32.xlu0 %v2085
        %v2087 = vpop.xlane.xlu0 %2086
        %v2088 = vadd.f32 %v1951, %v1952
        %v2089 = vsel %vm1988, %v1953, 0.0
        %v2090 = vadd.f32 %v2088, %v2089
        %2091 = vadd.xlane.f32.xlu0 %v2090
        %v2092 = vpop.xlane.xlu0 %2091
        %v2093 = vadd.f32 %v1954, %v1955
        %v2094 = vsel %vm1988, %v1956, 0.0
        %v2095 = vadd.f32 %v2093, %v2094
        %2096 = vadd.xlane.f32.xlu0 %v2095
        %v2097 = vpop.xlane.xlu0 %2096
        %v2098 = vadd.f32 %v1957, %v1958
        %v2099 = vsel %vm1988, %v1959, 0.0
        %v2100 = vadd.f32 %v2098, %v2099
        %2101 = vadd.xlane.f32.xlu0 %v2100
        %v2102 = vpop.xlane.xlu0 %2101
        %v2103 = vadd.f32 %v1960, %v1961
        %v2104 = vsel %vm1988, %v1962, 0.0
        %v2105 = vadd.f32 %v2103, %v2104
        %2106 = vadd.xlane.f32.xlu0 %v2105
        %v2107 = vpop.xlane.xlu0 %2106
        %v2108 = vadd.f32 %v1963, %v1964
        %v2109 = vsel %vm1988, %v1965, 0.0
        %v2110 = vadd.f32 %v2108, %v2109
        %2111 = vadd.xlane.f32.xlu0 %v2110
        %v2112 = vpop.xlane.xlu0 %2111
        %v2113 = vadd.f32 %v1966, %v1967
        %v2114 = vsel %vm1988, %v1968, 0.0
        %v2115 = vadd.f32 %v2113, %v2114
        %2116 = vadd.xlane.f32.xlu0 %v2115
        %v2117 = vpop.xlane.xlu0 %2116
        %v2118 = vadd.f32 %v1969, %v1970
        %v2119 = vsel %vm1988, %v1971, 0.0
        %v2120 = vadd.f32 %v2118, %v2119
        %2121 = vadd.xlane.f32.xlu0 %v2120
        %v2122 = vpop.xlane.xlu0 %2121
        %v2123 = vadd.f32 %v1972, %v1973
        %v2124 = vsel %vm1988, %v1974, 0.0
        %v2125 = vadd.f32 %v2123, %v2124
        %2126 = vadd.xlane.f32.xlu0 %v2125
        %v2127 = vpop.xlane.xlu0 %2126
        %v2128 = vadd.f32 %v1975, %v1976
        %v2129 = vsel %vm1988, %v1977, 0.0
        %v2130 = vadd.f32 %v2128, %v2129
        %2131 = vadd.xlane.f32.xlu0 %v2130
        %v2132 = vpop.xlane.xlu0 %2131
        %v2133 = vadd.f32 %v1978, %v1979
        %v2134 = vsel %vm1988, %v1980, 0.0
        %v2135 = vadd.f32 %v2133, %v2134
        %2136 = vadd.xlane.f32.xlu0 %v2135
        %v2137 = vpop.xlane.xlu0 %2136
        %v2138 = vadd.f32 %v1981, %v1982
        %v2139 = vsel %vm1988, %v1983, 0.0
        %v2140 = vadd.f32 %v2138, %v2139
        %2141 = vadd.xlane.f32.xlu0 %v2140
        %v2142 = vpop.xlane.xlu0 %2141
        %v2143 = vadd.f32 %v1984, %v1985
        %v2144 = vsel %vm1988, %v1986, 0.0
        %v2145 = vadd.f32 %v2143, %v2144
        %2146 = vadd.xlane.f32.xlu0 %v2145
        %v2147 = vpop.xlane.xlu0 %2146
        %v2148 = vld [vmem:[%s462] sm:$0x3]
        %v2150 = vsel %vm1988, %v1701, 0
        %v2153 = vsel %vm1988, %v1704, 0
        %v2156 = vsel %vm1988, %v1707, 0
        %v2159 = vsel %vm1988, %v1710, 0
        %v2162 = vsel %vm1988, %v1713, 0
        %v2165 = vsel %vm1988, %v1716, 0
        %v2168 = vsel %vm1988, %v1719, 0
        %v2171 = vsel %vm1988, %v1722, 0
        %v2174 = vsel %vm1988, %v1725, 0
        %v2177 = vsel %vm1988, %v1728, 0
        %v2180 = vsel %vm1988, %v1731, 0
        %v2183 = vsel %vm1988, %v1734, 0
        %v2186 = vsel %vm1988, %v1737, 0
        %v2189 = vsel %vm1988, %v1740, 0
        %v2192 = vsel %vm1988, %v1743, 0
        %v2195 = vsel %vm1988, %v1746, 0
        %v2198 = vsel %vm1988, %v1749, 0
        %v2201 = vsel %vm1988, %v1752, 0
        %v2204 = vsel %vm1988, %v1755, 0
        %v2207 = vsel %vm1988, %v1758, 0
        %v2210 = vsel %vm1988, %v1761, 0
        %v2213 = vsel %vm1988, %v1764, 0
        %v2216 = vsel %vm1988, %v1767, 0
        %v2219 = vsel %vm1988, %v1770, 0
        %v2222 = vsel %vm1988, %v1773, 0
        %v2225 = vsel %vm1988, %v1776, 0
        %v2228 = vsel %vm1988, %v1779, 0
        %v2231 = vsel %vm1988, %v1782, 0
        %v2234 = vsel %vm1988, %v1785, 0
        %v2237 = vsel %vm1988, %v1788, 0
        %v2240 = vsel %vm1988, %v1791, 0
        %v2243 = vsel %vm1988, %v1794, 0
        %v2246 = vsel %vm1988, %v1797, 0
        %v2249 = vsel %vm1988, %v1800, 0
        %v2252 = vsel %vm1988, %v1803, 0
        %v2255 = vsel %vm1988, %v1806, 0
        %v2258 = vsel %vm1988, %v1809, 0
        %v2261 = vsel %vm1988, %v1812, 0
        %v2264 = vsel %vm1988, %v1815, 0
        %v2267 = vsel %vm1988, %v1818, 0
        %v2270 = vsel %vm1988, %v1821, 0
        %v2273 = vsel %vm1988, %v1824, 0
        %v2276 = vsel %vm1988, %v1827, 0
        %v2279 = vsel %vm1988, %v1830, 0
        %v2282 = vsel %vm1988, %v1833, 0
        %v2285 = vsel %vm1988, %v1836, 0
        %v2288 = vsel %vm1988, %v1839, 0
        %v2291 = vsel %vm1988, %v1842, 0
        %v2294 = vsel %vm1988, %v1845, 0
        %v2297 = vsel %vm1988, %v1848, 0
        %v2300 = vsel %vm1988, %v1851, 0
        %v2303 = vsel %vm1988, %v1854, 0
        %v2306 = vsel %vm1988, %v1857, 0
        %v2309 = vsel %vm1988, %v1860, 0
        %v2312 = vsel %vm1988, %v1863, 0
        %v2315 = vsel %vm1988, %v1866, 0
        %v2318 = vsel %vm1988, %v1869, 0
        %v2321 = vsel %vm1988, %v1872, 0
        %v2324 = vsel %vm1988, %v1875, 0
        %v2327 = vsel %vm1988, %v1878, 0
        %v2330 = vsel %vm1988, %v1881, 0
        %v2333 = vsel %vm1988, %v1884, 0
        %v2336 = vsel %vm1988, %v1887, 0
        %v2339 = vsel %vm1988, %v1890, 0
        %2341 = vmatprep.subr.mxu0 %v1796
        %2342 = vmatpush1.xpose.msra.mxu0 %v1795
        %2343 = vmatprep.subr.mxu0 %v1799
        %2344 = vmatpush1.xpose.msra.mxu0 %v1798
        %2345 = vmatprep.subr.mxu0 %v1802
        %2346 = vmatpush1.xpose.msra.mxu0 %v1801
        %2347 = vmatprep.subr.mxu0 %v1805
        %2348 = vmatpush1.xpose.msra.mxu0 %v1804
        %2349 = vmatprep.subr.mxu0 %v1808
        %2350 = vmatpush1.xpose.msra.mxu0 %v1807
        %2351 = vmatprep.subr.mxu0 %v1811
        %2352 = vmatpush1.xpose.msra.mxu0 %v1810
        %2353 = vmatprep.subr.mxu0 %v1814
        %2354 = vmatpush1.xpose.msra.mxu0 %v1813
        %2355 = vmatprep.subr.mxu0 %v1817
        %2356 = vmatpush1.xpose.msra.mxu0 %v1816
        %2357 = vmatprep.subr.mxu0 %v1820
        %2358 = vmatpush1.xpose.msra.mxu0 %v1819
        %2359 = vmatprep.subr.mxu0 %v1823
        %2360 = vmatpush1.xpose.msra.mxu0 %v1822
        %2361 = vmatprep.subr.mxu0 %v1826
        %2362 = vmatpush1.xpose.msra.mxu0 %v1825
        %2363 = vmatprep.subr.mxu0 %v1829
        %2364 = vmatpush1.xpose.msra.mxu0 %v1828
        %2365 = vmatprep.subr.mxu0 %v1832
        %2366 = vmatpush1.xpose.msra.mxu0 %v1831
        %2367 = vmatprep.subr.mxu0 %v1835
        %2368 = vmatpush1.xpose.msra.mxu0 %v1834
        %2369 = vmatprep.subr.mxu0 %v1838
        %2370 = vmatpush1.xpose.msra.mxu0 %v1837
        %2371 = vmatprep.subr.mxu0 %v1841
        %2372 = vmatpush1.xpose.msra.mxu0 %v1840
        %2373 = vmatprep.subr.mxu0 %v1844
        %2374 = vmatpush1.xpose.msra.mxu0 %v1843
        %2375 = vmatprep.subr.mxu0 %v1847
        %2376 = vmatpush1.xpose.msra.mxu0 %v1846
        %2377 = vmatprep.subr.mxu0 %v1850
        %2378 = vmatpush1.xpose.msra.mxu0 %v1849
        %2379 = vmatprep.subr.mxu0 %v1853
        %2380 = vmatpush1.xpose.msra.mxu0 %v1852
        %2381 = vmatprep.subr.mxu0 %v1856
        %2382 = vmatpush1.xpose.msra.mxu0 %v1855
        %2383 = vmatprep.subr.mxu0 %v1859
        %2384 = vmatpush1.xpose.msra.mxu0 %v1858
        %2385 = vmatprep.subr.mxu0 %v1862
        %2386 = vmatpush1.xpose.msra.mxu0 %v1861
        %2387 = vmatprep.subr.mxu0 %v1865
        %2388 = vmatpush1.xpose.msra.mxu0 %v1864
        %2389 = vmatprep.subr.mxu0 %v1868
        %2390 = vmatpush1.xpose.msra.mxu0 %v1867
        %2391 = vmatprep.subr.mxu0 %v1871
        %2392 = vmatpush1.xpose.msra.mxu0 %v1870
        %2393 = vmatprep.subr.mxu0 %v1874
        %2394 = vmatpush1.xpose.msra.mxu0 %v1873
        %2395 = vmatprep.subr.mxu0 %v1877
        %2396 = vmatpush1.xpose.msra.mxu0 %v1876
        %2397 = vmatprep.subr.mxu0 %v1880
        %2398 = vmatpush1.xpose.msra.mxu0 %v1879
        %2399 = vmatprep.subr.mxu0 %v1883
        %2400 = vmatpush1.xpose.msra.mxu0 %v1882
        %2401 = vmatprep.subr.mxu0 %v1886
        %2402 = vmatpush1.xpose.msra.mxu0 %v1885
        %2403 = vmatprep.subr.mxu0 %v1889
        %2404 = vmatpush1.xpose.msra.mxu0 %v1888
        %2405 = vmatprep.mubr.f32.mxu0 %v1700
        %2406 = vmatmul.mubr.f32.gmra.mrb[0].mxu0 %v1699
        %v2407 = vpop.f32.mrb[0].mxu0
        %v2408 = vadd.f32 0.0, %v2407
        %v2409 = vpop.f32.mrb[0].mxu0
        %v2410 = vadd.f32 0.0, %v2409
        %2411 = vmatprep.mubr.f32.mxu0 %v1703
        %2412 = vmatmul.mubr.f32.gmra.mrb[0].mxu0 %v1702
        %v2413 = vpop.f32.mrb[0].mxu0
        %v2414 = vadd.f32 0.0, %v2413
        %v2415 = vpop.f32.mrb[0].mxu0
        %v2416 = vadd.f32 0.0, %v2415
        %2417 = vmatprep.mubr.f32.mxu0 %v1706
        %2418 = vmatmul.mubr.f32.gmra.mrb[0].mxu0 %v1705
        %v2419 = vpop.f32.mrb[0].mxu0
        %v2420 = vadd.f32 0.0, %v2419
        %v2421 = vpop.f32.mrb[0].mxu0
        %v2422 = vadd.f32 0.0, %v2421
        %2423 = vmatprep.mubr.f32.mxu0 %v1709
        %2424 = vmatmul.mubr.f32.gmra.mrb[0].mxu0 %v1708
        %v2425 = vpop.f32.mrb[0].mxu0
        %v2426 = vadd.f32 0.0, %v2425
        %v2427 = vpop.f32.mrb[0].mxu0
        %v2428 = vadd.f32 0.0, %v2427
        %2429 = vmatprep.mubr.f32.mxu0 %v1712
        %2430 = vmatmul.mubr.f32.gmra.mrb[0].mxu0 %v1711
        %v2431 = vpop.f32.mrb[0].mxu0
        %v2432 = vadd.f32 0.0, %v2431
        %v2433 = vpop.f32.mrb[0].mxu0
        %v2434 = vadd.f32 0.0, %v2433
        %2435 = vmatprep.mubr.f32.mxu0 %v1715
        %2436 = vmatmul.mubr.f32.gmra.mrb[0].mxu0 %v1714
        %v2437 = vpop.f32.mrb[0].mxu0
        %v2438 = vadd.f32 0.0, %v2437
        %v2439 = vpop.f32.mrb[0].mxu0
        %v2440 = vadd.f32 0.0, %v2439
        %2441 = vmatprep.mubr.f32.mxu0 %v1718
        %2442 = vmatmul.mubr.f32.gmra.mrb[0].mxu0 %v1717
        %v2443 = vpop.f32.mrb[0].mxu0
        %v2444 = vadd.f32 0.0, %v2443
        %v2445 = vpop.f32.mrb[0].mxu0
        %v2446 = vadd.f32 0.0, %v2445
        %2447 = vmatprep.mubr.f32.mxu0 %v1721
        %2448 = vmatmul.mubr.f32.gmra.mrb[0].mxu0 %v1720
        %v2449 = vpop.f32.mrb[0].mxu0
        %v2450 = vadd.f32 0.0, %v2449
        %v2451 = vpop.f32.mrb[0].mxu0
        %v2452 = vadd.f32 0.0, %v2451
        %2453 = vmatprep.mubr.f32.mxu0 %v1724
        %2454 = vmatmul.mubr.f32.gmra.mrb[0].mxu0 %v1723
        %v2455 = vpop.f32.mrb[0].mxu0
        %v2456 = vadd.f32 0.0, %v2455
        %v2457 = vpop.f32.mrb[0].mxu0
        %v2458 = vadd.f32 0.0, %v2457
        %2459 = vmatprep.mubr.f32.mxu0 %v1727
        %2460 = vmatmul.mubr.f32.gmra.mrb[0].mxu0 %v1726
        %v2461 = vpop.f32.mrb[0].mxu0
        %v2462 = vadd.f32 0.0, %v2461
        %v2463 = vpop.f32.mrb[0].mxu0
        %v2464 = vadd.f32 0.0, %v2463
        %2465 = vmatprep.mubr.f32.mxu0 %v1730
        %2466 = vmatmul.mubr.f32.gmra.mrb[0].mxu0 %v1729
        %v2467 = vpop.f32.mrb[0].mxu0
        %v2468 = vadd.f32 0.0, %v2467
        %v2469 = vpop.f32.mrb[0].mxu0
        %v2470 = vadd.f32 0.0, %v2469
        %2471 = vmatprep.mubr.f32.mxu0 %v1733
        %2472 = vmatmul.mubr.f32.gmra.mrb[0].mxu0 %v1732
        %v2473 = vpop.f32.mrb[0].mxu0
        %v2474 = vadd.f32 0.0, %v2473
        %v2475 = vpop.f32.mrb[0].mxu0
        %v2476 = vadd.f32 0.0, %v2475
        %2477 = vmatprep.mubr.f32.mxu0 %v1736
        %2478 = vmatmul.mubr.f32.gmra.mrb[0].mxu0 %v1735
        %v2479 = vpop.f32.mrb[0].mxu0
        %v2480 = vadd.f32 0.0, %v2479
        %v2481 = vpop.f32.mrb[0].mxu0
        %v2482 = vadd.f32 0.0, %v2481
        %2483 = vmatprep.mubr.f32.mxu0 %v1739
        %2484 = vmatmul.mubr.f32.gmra.mrb[0].mxu0 %v1738
        %v2485 = vpop.f32.mrb[0].mxu0
        %v2486 = vadd.f32 0.0, %v2485
        %v2487 = vpop.f32.mrb[0].mxu0
        %v2488 = vadd.f32 0.0, %v2487
        %2489 = vmatprep.mubr.f32.mxu0 %v1742
        %2490 = vmatmul.mubr.f32.gmra.mrb[0].mxu0 %v1741
        %v2491 = vpop.f32.mrb[0].mxu0
        %v2492 = vadd.f32 0.0, %v2491
        %v2493 = vpop.f32.mrb[0].mxu0
        %v2494 = vadd.f32 0.0, %v2493
        %2495 = vmatprep.mubr.f32.mxu0 %v1745
        %2496 = vmatmul.mubr.f32.gmra.mrb[0].mxu0 %v1744
        %v2497 = vpop.f32.mrb[0].mxu0
        %v2498 = vadd.f32 0.0, %v2497
        %v2499 = vpop.f32.mrb[0].mxu0
        %v2500 = vadd.f32 0.0, %v2499
        %2501 = vmatprep.mubr.f32.mxu0 %v1748
        %2502 = vmatmul.mubr.f32.gmra.mrb[0].mxu0 %v1747
        %v2503 = vpop.f32.mrb[0].mxu0
        %v2504 = vadd.f32 0.0, %v2503
        %v2505 = vpop.f32.mrb[0].mxu0
        %v2506 = vadd.f32 0.0, %v2505
        %2507 = vmatprep.mubr.f32.mxu0 %v1751
        %2508 = vmatmul.mubr.f32.gmra.mrb[0].mxu0 %v1750
        %v2509 = vpop.f32.mrb[0].mxu0
        %v2510 = vadd.f32 0.0, %v2509
        %v2511 = vpop.f32.mrb[0].mxu0
        %v2512 = vadd.f32 0.0, %v2511
        %2513 = vmatprep.mubr.f32.mxu0 %v1754
        %2514 = vmatmul.mubr.f32.gmra.mrb[0].mxu0 %v1753
        %v2515 = vpop.f32.mrb[0].mxu0
        %v2516 = vadd.f32 0.0, %v2515
        %v2517 = vpop.f32.mrb[0].mxu0
        %v2518 = vadd.f32 0.0, %v2517
        %2519 = vmatprep.mubr.f32.mxu0 %v1757
        %2520 = vmatmul.mubr.f32.gmra.mrb[0].mxu0 %v1756
        %v2521 = vpop.f32.mrb[0].mxu0
        %v2522 = vadd.f32 0.0, %v2521
        %v2523 = vpop.f32.mrb[0].mxu0
        %v2524 = vadd.f32 0.0, %v2523
        %2525 = vmatprep.mubr.f32.mxu0 %v1760
        %2526 = vmatmul.mubr.f32.gmra.mrb[0].mxu0 %v1759
        %v2527 = vpop.f32.mrb[0].mxu0
        %v2528 = vadd.f32 0.0, %v2527
        %v2529 = vpop.f32.mrb[0].mxu0
        %v2530 = vadd.f32 0.0, %v2529
        %2531 = vmatprep.mubr.f32.mxu0 %v1763
        %2532 = vmatmul.mubr.f32.gmra.mrb[0].mxu0 %v1762
        %v2533 = vpop.f32.mrb[0].mxu0
        %v2534 = vadd.f32 0.0, %v2533
        %v2535 = vpop.f32.mrb[0].mxu0
        %v2536 = vadd.f32 0.0, %v2535
        %2537 = vmatprep.mubr.f32.mxu0 %v1766
        %2538 = vmatmul.mubr.f32.gmra.mrb[0].mxu0 %v1765
        %v2539 = vpop.f32.mrb[0].mxu0
        %v2540 = vadd.f32 0.0, %v2539
        %v2541 = vpop.f32.mrb[0].mxu0
        %v2542 = vadd.f32 0.0, %v2541
        %2543 = vmatprep.mubr.f32.mxu0 %v1769
        %2544 = vmatmul.mubr.f32.gmra.mrb[0].mxu0 %v1768
        %v2545 = vpop.f32.mrb[0].mxu0
        %v2546 = vadd.f32 0.0, %v2545
        %v2547 = vpop.f32.mrb[0].mxu0
        %v2548 = vadd.f32 0.0, %v2547
        %2549 = vmatprep.mubr.f32.mxu0 %v1772
        %2550 = vmatmul.mubr.f32.gmra.mrb[0].mxu0 %v1771
        %v2551 = vpop.f32.mrb[0].mxu0
        %v2552 = vadd.f32 0.0, %v2551
        %v2553 = vpop.f32.mrb[0].mxu0
        %v2554 = vadd.f32 0.0, %v2553
        %2555 = vmatprep.mubr.f32.mxu0 %v1775
        %2556 = vmatmul.mubr.f32.gmra.mrb[0].mxu0 %v1774
        %v2557 = vpop.f32.mrb[0].mxu0
        %v2558 = vadd.f32 0.0, %v2557
        %v2559 = vpop.f32.mrb[0].mxu0
        %v2560 = vadd.f32 0.0, %v2559
        %2561 = vmatprep.mubr.f32.mxu0 %v1778
        %2562 = vmatmul.mubr.f32.gmra.mrb[0].mxu0 %v1777
        %v2563 = vpop.f32.mrb[0].mxu0
        %v2564 = vadd.f32 0.0, %v2563
        %v2565 = vpop.f32.mrb[0].mxu0
        %v2566 = vadd.f32 0.0, %v2565
        %2567 = vmatprep.mubr.f32.mxu0 %v1781
        %2568 = vmatmul.mubr.f32.gmra.mrb[0].mxu0 %v1780
        %v2569 = vpop.f32.mrb[0].mxu0
        %v2570 = vadd.f32 0.0, %v2569
        %v2571 = vpop.f32.mrb[0].mxu0
        %v2572 = vadd.f32 0.0, %v2571
        %2573 = vmatprep.mubr.f32.mxu0 %v1784
        %2574 = vmatmul.mubr.f32.gmra.mrb[0].mxu0 %v1783
        %v2575 = vpop.f32.mrb[0].mxu0
        %v2576 = vadd.f32 0.0, %v2575
        %v2577 = vpop.f32.mrb[0].mxu0
        %v2578 = vadd.f32 0.0, %v2577
        %2579 = vmatprep.mubr.f32.mxu0 %v1787
        %2580 = vmatmul.mubr.f32.gmra.mrb[0].mxu0 %v1786
        %v2581 = vpop.f32.mrb[0].mxu0
        %v2582 = vadd.f32 0.0, %v2581
        %v2583 = vpop.f32.mrb[0].mxu0
        %v2584 = vadd.f32 0.0, %v2583
        %2585 = vmatprep.mubr.f32.mxu0 %v1790
        %2586 = vmatmul.mubr.f32.gmra.mrb[0].mxu0 %v1789
        %v2587 = vpop.f32.mrb[0].mxu0
        %v2588 = vadd.f32 0.0, %v2587
        %v2589 = vpop.f32.mrb[0].mxu0
        %v2590 = vadd.f32 0.0, %v2589
        %2591 = vmatprep.mubr.f32.mxu0 %v1793
        %2592 = vmatmul.mubr.f32.gmra.mrb[0].mxu0 %v1792
        %v2593 = vpop.f32.mrb[0].mxu0
        %v2594 = vadd.f32 0.0, %v2593
        %v2595 = vpop.f32.mrb[0].mxu0
        %v2596 = vadd.f32 0.0, %v2595
        %2597 = vdwg.mxu0
        %2598 = vmatprep.subr.mxu0 0.0
        %2599 = vmatpush1.xpose.msra.mxu0 %v2246
        %2600 = vmatprep.subr.mxu0 0.0
        %2601 = vmatpush1.xpose.msra.mxu0 %v2249
        %2602 = vmatprep.subr.mxu0 0.0
        %2603 = vmatpush1.xpose.msra.mxu0 %v2252
        %2604 = vmatprep.subr.mxu0 0.0
        %2605 = vmatpush1.xpose.msra.mxu0 %v2255
        %2606 = vmatprep.subr.mxu0 0.0
        %2607 = vmatpush1.xpose.msra.mxu0 %v2258
        %2608 = vmatprep.subr.mxu0 0.0
        %2609 = vmatpush1.xpose.msra.mxu0 %v2261
        %2610 = vmatprep.subr.mxu0 0.0
        %2611 = vmatpush1.xpose.msra.mxu0 %v2264
        %2612 = vmatprep.subr.mxu0 0.0
        %2613 = vmatpush1.xpose.msra.mxu0 %v2267
        %2614 = vmatprep.subr.mxu0 0.0
        %2615 = vmatpush1.xpose.msra.mxu0 %v2270
        %2616 = vmatprep.subr.mxu0 0.0
        %2617 = vmatpush1.xpose.msra.mxu0 %v2273
        %2618 = vmatprep.subr.mxu0 0.0
        %2619 = vmatpush1.xpose.msra.mxu0 %v2276
        %2620 = vmatprep.subr.mxu0 0.0
        %2621 = vmatpush1.xpose.msra.mxu0 %v2279
        %2622 = vmatprep.subr.mxu0 0.0
        %2623 = vmatpush1.xpose.msra.mxu0 %v2282
        %2624 = vmatprep.subr.mxu0 0.0
        %2625 = vmatpush1.xpose.msra.mxu0 %v2285
        %2626 = vmatprep.subr.mxu0 0.0
        %2627 = vmatpush1.xpose.msra.mxu0 %v2288
        %2628 = vmatprep.subr.mxu0 0.0
        %2629 = vmatpush1.xpose.msra.mxu0 %v2291
        %2630 = vmatprep.subr.mxu0 0.0
        %2631 = vmatpush1.xpose.msra.mxu0 %v2294
        %2632 = vmatprep.subr.mxu0 0.0
        %2633 = vmatpush1.xpose.msra.mxu0 %v2297
        %2634 = vmatprep.subr.mxu0 0.0
        %2635 = vmatpush1.xpose.msra.mxu0 %v2300
        %2636 = vmatprep.subr.mxu0 0.0
        %2637 = vmatpush1.xpose.msra.mxu0 %v2303
        %2638 = vmatprep.subr.mxu0 0.0
        %2639 = vmatpush1.xpose.msra.mxu0 %v2306
        %2640 = vmatprep.subr.mxu0 0.0
        %2641 = vmatpush1.xpose.msra.mxu0 %v2309
        %2642 = vmatprep.subr.mxu0 0.0
        %2643 = vmatpush1.xpose.msra.mxu0 %v2312
        %2644 = vmatprep.subr.mxu0 0.0
        %2645 = vmatpush1.xpose.msra.mxu0 %v2315
        %2646 = vmatprep.subr.mxu0 0.0
        %2647 = vmatpush1.xpose.msra.mxu0 %v2318
        %2648 = vmatprep.subr.mxu0 0.0
        %2649 = vmatpush1.xpose.msra.mxu0 %v2321
        %2650 = vmatprep.subr.mxu0 0.0
        %2651 = vmatpush1.xpose.msra.mxu0 %v2324
        %2652 = vmatprep.subr.mxu0 0.0
        %2653 = vmatpush1.xpose.msra.mxu0 %v2327
        %2654 = vmatprep.subr.mxu0 0.0
        %2655 = vmatpush1.xpose.msra.mxu0 %v2330
        %2656 = vmatprep.subr.mxu0 0.0
        %2657 = vmatpush1.xpose.msra.mxu0 %v2333
        %2658 = vmatprep.subr.mxu0 0.0
        %2659 = vmatpush1.xpose.msra.mxu0 %v2336
        %2660 = vmatprep.subr.mxu0 0.0
        %2661 = vmatpush1.xpose.msra.mxu0 %v2339
        %2662 = vmatprep.mubr.f32.mxu0 0.0
        %2663 = vmatmul.mubr.f32.gmra.mrb[0].mxu0 %v2150
        %v2664 = vpop.f32.mrb[0].mxu0
        %v2665 = vadd.f32 %v2408, %v2664
        %v2666 = vpop.f32.mrb[0].mxu0
        %v2667 = vadd.f32 %v2410, %v2666
        %2668 = vmatprep.mubr.f32.mxu0 0.0
        %2669 = vmatmul.mubr.f32.gmra.mrb[0].mxu0 %v2153
        %v2670 = vpop.f32.mrb[0].mxu0
        %v2671 = vadd.f32 %v2414, %v2670
        %v2672 = vpop.f32.mrb[0].mxu0
        %v2673 = vadd.f32 %v2416, %v2672
        %2674 = vmatprep.mubr.f32.mxu0 0.0
        %2675 = vmatmul.mubr.f32.gmra.mrb[0].mxu0 %v2156
        %v2676 = vpop.f32.mrb[0].mxu0
        %v2677 = vadd.f32 %v2420, %v2676
        %v2678 = vpop.f32.mrb[0].mxu0
        %v2679 = vadd.f32 %v2422, %v2678
        %2680 = vmatprep.mubr.f32.mxu0 0.0
        %2681 = vmatmul.mubr.f32.gmra.mrb[0].mxu0 %v2159
        %v2682 = vpop.f32.mrb[0].mxu0
        %v2683 = vadd.f32 %v2426, %v2682
        %v2684 = vpop.f32.mrb[0].mxu0
        %v2685 = vadd.f32 %v2428, %v2684
        %2686 = vmatprep.mubr.f32.mxu0 0.0
        %2687 = vmatmul.mubr.f32.gmra.mrb[0].mxu0 %v2162
        %v2688 = vpop.f32.mrb[0].mxu0
        %v2689 = vadd.f32 %v2432, %v2688
        %v2690 = vpop.f32.mrb[0].mxu0
        %v2691 = vadd.f32 %v2434, %v2690
        %2692 = vmatprep.mubr.f32.mxu0 0.0
        %2693 = vmatmul.mubr.f32.gmra.mrb[0].mxu0 %v2165
        %v2694 = vpop.f32.mrb[0].mxu0
        %v2695 = vadd.f32 %v2438, %v2694
        %v2696 = vpop.f32.mrb[0].mxu0
        %v2697 = vadd.f32 %v2440, %v2696
        %2698 = vmatprep.mubr.f32.mxu0 0.0
        %2699 = vmatmul.mubr.f32.gmra.mrb[0].mxu0 %v2168
        %v2700 = vpop.f32.mrb[0].mxu0
        %v2701 = vadd.f32 %v2444, %v2700
        %v2702 = vpop.f32.mrb[0].mxu0
        %v2703 = vadd.f32 %v2446, %v2702
        %2704 = vmatprep.mubr.f32.mxu0 0.0
        %2705 = vmatmul.mubr.f32.gmra.mrb[0].mxu0 %v2171
        %v2706 = vpop.f32.mrb[0].mxu0
        %v2707 = vadd.f32 %v2450, %v2706
        %v2708 = vpop.f32.mrb[0].mxu0
        %v2709 = vadd.f32 %v2452, %v2708
        %2710 = vmatprep.mubr.f32.mxu0 0.0
        %2711 = vmatmul.mubr.f32.gmra.mrb[0].mxu0 %v2174
        %v2712 = vpop.f32.mrb[0].mxu0
        %v2713 = vadd.f32 %v2456, %v2712
        %v2714 = vpop.f32.mrb[0].mxu0
        %v2715 = vadd.f32 %v2458, %v2714
        %2716 = vmatprep.mubr.f32.mxu0 0.0
        %2717 = vmatmul.mubr.f32.gmra.mrb[0].mxu0 %v2177
        %v2718 = vpop.f32.mrb[0].mxu0
        %v2719 = vadd.f32 %v2462, %v2718
        %v2720 = vpop.f32.mrb[0].mxu0
        %v2721 = vadd.f32 %v2464, %v2720
        %2722 = vmatprep.mubr.f32.mxu0 0.0
        %2723 = vmatmul.mubr.f32.gmra.mrb[0].mxu0 %v2180
        %v2724 = vpop.f32.mrb[0].mxu0
        %v2725 = vadd.f32 %v2468, %v2724
        %v2726 = vpop.f32.mrb[0].mxu0
        %v2727 = vadd.f32 %v2470, %v2726
        %2728 = vmatprep.mubr.f32.mxu0 0.0
        %2729 = vmatmul.mubr.f32.gmra.mrb[0].mxu0 %v2183
        %v2730 = vpop.f32.mrb[0].mxu0
        %v2731 = vadd.f32 %v2474, %v2730
        %v2732 = vpop.f32.mrb[0].mxu0
        %v2733 = vadd.f32 %v2476, %v2732
        %2734 = vmatprep.mubr.f32.mxu0 0.0
        %2735 = vmatmul.mubr.f32.gmra.mrb[0].mxu0 %v2186
        %v2736 = vpop.f32.mrb[0].mxu0
        %v2737 = vadd.f32 %v2480, %v2736
        %v2738 = vpop.f32.mrb[0].mxu0
        %v2739 = vadd.f32 %v2482, %v2738
        %2740 = vmatprep.mubr.f32.mxu0 0.0
        %2741 = vmatmul.mubr.f32.gmra.mrb[0].mxu0 %v2189
        %v2742 = vpop.f32.mrb[0].mxu0
        %v2743 = vadd.f32 %v2486, %v2742
        %v2744 = vpop.f32.mrb[0].mxu0
        %v2745 = vadd.f32 %v2488, %v2744
        %2746 = vmatprep.mubr.f32.mxu0 0.0
        %2747 = vmatmul.mubr.f32.gmra.mrb[0].mxu0 %v2192
        %v2748 = vpop.f32.mrb[0].mxu0
        %v2749 = vadd.f32 %v2492, %v2748
        %v2750 = vpop.f32.mrb[0].mxu0
        %v2751 = vadd.f32 %v2494, %v2750
        %2752 = vmatprep.mubr.f32.mxu0 0.0
        %2753 = vmatmul.mubr.f32.gmra.mrb[0].mxu0 %v2195
        %v2754 = vpop.f32.mrb[0].mxu0
        %v2755 = vadd.f32 %v2498, %v2754
        %v2756 = vpop.f32.mrb[0].mxu0
        %v2757 = vadd.f32 %v2500, %v2756
        %2758 = vmatprep.mubr.f32.mxu0 0.0
        %2759 = vmatmul.mubr.f32.gmra.mrb[0].mxu0 %v2198
        %v2760 = vpop.f32.mrb[0].mxu0
        %v2761 = vadd.f32 %v2504, %v2760
        %v2762 = vpop.f32.mrb[0].mxu0
        %v2763 = vadd.f32 %v2506, %v2762
        %2764 = vmatprep.mubr.f32.mxu0 0.0
        %2765 = vmatmul.mubr.f32.gmra.mrb[0].mxu0 %v2201
        %v2766 = vpop.f32.mrb[0].mxu0
        %v2767 = vadd.f32 %v2510, %v2766
        %v2768 = vpop.f32.mrb[0].mxu0
        %v2769 = vadd.f32 %v2512, %v2768
        %2770 = vmatprep.mubr.f32.mxu0 0.0
        %2771 = vmatmul.mubr.f32.gmra.mrb[0].mxu0 %v2204
        %v2772 = vpop.f32.mrb[0].mxu0
        %v2773 = vadd.f32 %v2516, %v2772
        %v2774 = vpop.f32.mrb[0].mxu0
        %v2775 = vadd.f32 %v2518, %v2774
        %2776 = vmatprep.mubr.f32.mxu0 0.0
        %2777 = vmatmul.mubr.f32.gmra.mrb[0].mxu0 %v2207
        %v2778 = vpop.f32.mrb[0].mxu0
        %v2779 = vadd.f32 %v2522, %v2778
        %v2780 = vpop.f32.mrb[0].mxu0
        %v2781 = vadd.f32 %v2524, %v2780
        %2782 = vmatprep.mubr.f32.mxu0 0.0
        %2783 = vmatmul.mubr.f32.gmra.mrb[0].mxu0 %v2210
        %v2784 = vpop.f32.mrb[0].mxu0
        %v2785 = vadd.f32 %v2528, %v2784
        %v2786 = vpop.f32.mrb[0].mxu0
        %v2787 = vadd.f32 %v2530, %v2786
        %2788 = vmatprep.mubr.f32.mxu0 0.0
        %2789 = vmatmul.mubr.f32.gmra.mrb[0].mxu0 %v2213
        %v2790 = vpop.f32.mrb[0].mxu0
        %v2791 = vadd.f32 %v2534, %v2790
        %v2792 = vpop.f32.mrb[0].mxu0
        %v2793 = vadd.f32 %v2536, %v2792
        %2794 = vmatprep.mubr.f32.mxu0 0.0
        %2795 = vmatmul.mubr.f32.gmra.mrb[0].mxu0 %v2216
        %v2796 = vpop.f32.mrb[0].mxu0
        %v2797 = vadd.f32 %v2540, %v2796
        %v2798 = vpop.f32.mrb[0].mxu0
        %v2799 = vadd.f32 %v2542, %v2798
        %2800 = vmatprep.mubr.f32.mxu0 0.0
        %2801 = vmatmul.mubr.f32.gmra.mrb[0].mxu0 %v2219
        %v2802 = vpop.f32.mrb[0].mxu0
        %v2803 = vadd.f32 %v2546, %v2802
        %v2804 = vpop.f32.mrb[0].mxu0
        %v2805 = vadd.f32 %v2548, %v2804
        %2806 = vmatprep.mubr.f32.mxu0 0.0
        %2807 = vmatmul.mubr.f32.gmra.mrb[0].mxu0 %v2222
        %v2808 = vpop.f32.mrb[0].mxu0
        %v2809 = vadd.f32 %v2552, %v2808
        %v2810 = vpop.f32.mrb[0].mxu0
        %v2811 = vadd.f32 %v2554, %v2810
        %2812 = vmatprep.mubr.f32.mxu0 0.0
        %2813 = vmatmul.mubr.f32.gmra.mrb[0].mxu0 %v2225
        %v2814 = vpop.f32.mrb[0].mxu0
        %v2815 = vadd.f32 %v2558, %v2814
        %v2816 = vpop.f32.mrb[0].mxu0
        %v2817 = vadd.f32 %v2560, %v2816
        %2818 = vmatprep.mubr.f32.mxu0 0.0
        %2819 = vmatmul.mubr.f32.gmra.mrb[0].mxu0 %v2228
        %v2820 = vpop.f32.mrb[0].mxu0
        %v2821 = vadd.f32 %v2564, %v2820
        %v2822 = vpop.f32.mrb[0].mxu0
        %v2823 = vadd.f32 %v2566, %v2822
        %2824 = vmatprep.mubr.f32.mxu0 0.0
        %2825 = vmatmul.mubr.f32.gmra.mrb[0].mxu0 %v2231
        %v2826 = vpop.f32.mrb[0].mxu0
        %v2827 = vadd.f32 %v2570, %v2826
        %v2828 = vpop.f32.mrb[0].mxu0
        %v2829 = vadd.f32 %v2572, %v2828
        %2830 = vmatprep.mubr.f32.mxu0 0.0
        %2831 = vmatmul.mubr.f32.gmra.mrb[0].mxu0 %v2234
        %v2832 = vpop.f32.mrb[0].mxu0
        %v2833 = vadd.f32 %v2576, %v2832
        %v2834 = vpop.f32.mrb[0].mxu0
        %v2835 = vadd.f32 %v2578, %v2834
        %2836 = vmatprep.mubr.f32.mxu0 0.0
        %2837 = vmatmul.mubr.f32.gmra.mrb[0].mxu0 %v2237
        %v2838 = vpop.f32.mrb[0].mxu0
        %v2839 = vadd.f32 %v2582, %v2838
        %v2840 = vpop.f32.mrb[0].mxu0
        %v2841 = vadd.f32 %v2584, %v2840
        %2842 = vmatprep.mubr.f32.mxu0 0.0
        %2843 = vmatmul.mubr.f32.gmra.mrb[0].mxu0 %v2240
        %v2844 = vpop.f32.mrb[0].mxu0
        %v2845 = vadd.f32 %v2588, %v2844
        %v2846 = vpop.f32.mrb[0].mxu0
        %v2847 = vadd.f32 %v2590, %v2846
        %2848 = vmatprep.mubr.f32.mxu0 0.0
        %2849 = vmatmul.mubr.f32.gmra.mrb[0].mxu0 %v2243
        %v2850 = vpop.f32.mrb[0].mxu0
        %v2851 = vadd.f32 %v2594, %v2850
        %v2852 = vpop.f32.mrb[0].mxu0
        %v2853 = vadd.f32 %v2596, %v2852
        %2854 = vdwg.mxu0
        %v2856 = vlaneseq
        %v2857 = vshrl.u32 %v2856, 7
        %v2858 = vsub.s32 0, %v2857
        %v2859 = vrot.slane %v2148, %v2858
        %v2860 = vlaneseq
        %v2861 = vshrl.u32 %v2860, 7
        %v2862 = vsub.s32 1, %v2861
        %v2863 = vrot.slane %v2148, %v2862
        %v2866 = vadd.f32 %v1992, %v2859
        %v2867 = vadd.f32 %v1992, %v2863
        %v2868 = vadd.f32 %v1997, %v2859
        %v2869 = vadd.f32 %v1997, %v2863
        %v2870 = vadd.f32 %v2002, %v2859
        %v2871 = vadd.f32 %v2002, %v2863
        %v2872 = vadd.f32 %v2007, %v2859
        %v2873 = vadd.f32 %v2007, %v2863
        %v2874 = vadd.f32 %v2012, %v2859
        %v2875 = vadd.f32 %v2012, %v2863
        %v2876 = vadd.f32 %v2017, %v2859
        %v2877 = vadd.f32 %v2017, %v2863
        %v2878 = vadd.f32 %v2022, %v2859
        %v2879 = vadd.f32 %v2022, %v2863
        %v2880 = vadd.f32 %v2027, %v2859
        %v2881 = vadd.f32 %v2027, %v2863
        %v2882 = vadd.f32 %v2032, %v2859
        %v2883 = vadd.f32 %v2032, %v2863
        %v2884 = vadd.f32 %v2037, %v2859
        %v2885 = vadd.f32 %v2037, %v2863
        %v2886 = vadd.f32 %v2042, %v2859
        %v2887 = vadd.f32 %v2042, %v2863
        %v2888 = vadd.f32 %v2047, %v2859
        %v2889 = vadd.f32 %v2047, %v2863
        %v2890 = vadd.f32 %v2052, %v2859
        %v2891 = vadd.f32 %v2052, %v2863
        %v2892 = vadd.f32 %v2057, %v2859
        %v2893 = vadd.f32 %v2057, %v2863
        %v2894 = vadd.f32 %v2062, %v2859
        %v2895 = vadd.f32 %v2062, %v2863
        %v2896 = vadd.f32 %v2067, %v2859
        %v2897 = vadd.f32 %v2067, %v2863
        %v2898 = vadd.f32 %v2072, %v2859
        %v2899 = vadd.f32 %v2072, %v2863
        %v2900 = vadd.f32 %v2077, %v2859
        %v2901 = vadd.f32 %v2077, %v2863
        %v2902 = vadd.f32 %v2082, %v2859
        %v2903 = vadd.f32 %v2082, %v2863
        %v2904 = vadd.f32 %v2087, %v2859
        %v2905 = vadd.f32 %v2087, %v2863
        %v2906 = vadd.f32 %v2092, %v2859
        %v2907 = vadd.f32 %v2092, %v2863
        %v2908 = vadd.f32 %v2097, %v2859
        %v2909 = vadd.f32 %v2097, %v2863
        %v2910 = vadd.f32 %v2102, %v2859
        %v2911 = vadd.f32 %v2102, %v2863
        %v2912 = vadd.f32 %v2107, %v2859
        %v2913 = vadd.f32 %v2107, %v2863
        %v2914 = vadd.f32 %v2112, %v2859
        %v2915 = vadd.f32 %v2112, %v2863
        %v2916 = vadd.f32 %v2117, %v2859
        %v2917 = vadd.f32 %v2117, %v2863
        %v2918 = vadd.f32 %v2122, %v2859
        %v2919 = vadd.f32 %v2122, %v2863
        %v2920 = vadd.f32 %v2127, %v2859
        %v2921 = vadd.f32 %v2127, %v2863
        %v2922 = vadd.f32 %v2132, %v2859
        %v2923 = vadd.f32 %v2132, %v2863
        %v2924 = vadd.f32 %v2137, %v2859
        %v2925 = vadd.f32 %v2137, %v2863
        %v2926 = vadd.f32 %v2142, %v2859
        %v2927 = vadd.f32 %v2142, %v2863
        %v2928 = vadd.f32 %v2147, %v2859
        %v2929 = vadd.f32 %v2147, %v2863
        %v2930 = vmul.f32 %v2665, 2.0
        %v2931 = vmul.f32 %v2667, 2.0
        %v2932 = vmul.f32 %v2671, 2.0
        %v2933 = vmul.f32 %v2673, 2.0
        %v2934 = vmul.f32 %v2677, 2.0
        %v2935 = vmul.f32 %v2679, 2.0
        %v2936 = vmul.f32 %v2683, 2.0
        %v2937 = vmul.f32 %v2685, 2.0
        %v2938 = vmul.f32 %v2689, 2.0
        %v2939 = vmul.f32 %v2691, 2.0
        %v2940 = vmul.f32 %v2695, 2.0
        %v2941 = vmul.f32 %v2697, 2.0
        %v2942 = vmul.f32 %v2701, 2.0
        %v2943 = vmul.f32 %v2703, 2.0
        %v2944 = vmul.f32 %v2707, 2.0
        %v2945 = vmul.f32 %v2709, 2.0
        %v2946 = vmul.f32 %v2713, 2.0
        %v2947 = vmul.f32 %v2715, 2.0
        %v2948 = vmul.f32 %v2719, 2.0
        %v2949 = vmul.f32 %v2721, 2.0
        %v2950 = vmul.f32 %v2725, 2.0
        %v2951 = vmul.f32 %v2727, 2.0
        %v2952 = vmul.f32 %v2731, 2.0
        %v2953 = vmul.f32 %v2733, 2.0
        %v2954 = vmul.f32 %v2737, 2.0
        %v2955 = vmul.f32 %v2739, 2.0
        %v2956 = vmul.f32 %v2743, 2.0
        %v2957 = vmul.f32 %v2745, 2.0
        %v2958 = vmul.f32 %v2749, 2.0
        %v2959 = vmul.f32 %v2751, 2.0
        %v2960 = vmul.f32 %v2755, 2.0
        %v2961 = vmul.f32 %v2757, 2.0
        %v2962 = vmul.f32 %v2761, 2.0
        %v2963 = vmul.f32 %v2763, 2.0
        %v2964 = vmul.f32 %v2767, 2.0
        %v2965 = vmul.f32 %v2769, 2.0
        %v2966 = vmul.f32 %v2773, 2.0
        %v2967 = vmul.f32 %v2775, 2.0
        %v2968 = vmul.f32 %v2779, 2.0
        %v2969 = vmul.f32 %v2781, 2.0
        %v2970 = vmul.f32 %v2785, 2.0
        %v2971 = vmul.f32 %v2787, 2.0
        %v2972 = vmul.f32 %v2791, 2.0
        %v2973 = vmul.f32 %v2793, 2.0
        %v2974 = vmul.f32 %v2797, 2.0
        %v2975 = vmul.f32 %v2799, 2.0
        %v2976 = vmul.f32 %v2803, 2.0
        %v2977 = vmul.f32 %v2805, 2.0
        %v2978 = vmul.f32 %v2809, 2.0
        %v2979 = vmul.f32 %v2811, 2.0
        %v2980 = vmul.f32 %v2815, 2.0
        %v2981 = vmul.f32 %v2817, 2.0
        %v2982 = vmul.f32 %v2821, 2.0
        %v2983 = vmul.f32 %v2823, 2.0
        %v2984 = vmul.f32 %v2827, 2.0
        %v2985 = vmul.f32 %v2829, 2.0
        %v2986 = vmul.f32 %v2833, 2.0
        %v2987 = vmul.f32 %v2835, 2.0
        %v2988 = vmul.f32 %v2839, 2.0
        %v2989 = vmul.f32 %v2841, 2.0
        %v2990 = vmul.f32 %v2845, 2.0
        %v2991 = vmul.f32 %v2847, 2.0
        %v2992 = vmul.f32 %v2851, 2.0
        %v2993 = vmul.f32 %v2853, 2.0
        %v2994 = vsub.f32 %v2866, %v2930
        %v2995 = vsub.f32 %v2867, %v2931
        %v2996 = vsub.f32 %v2868, %v2932
        %v2997 = vsub.f32 %v2869, %v2933
        %v2998 = vsub.f32 %v2870, %v2934
        %v2999 = vsub.f32 %v2871, %v2935
        %v3000 = vsub.f32 %v2872, %v2936
        %v3001 = vsub.f32 %v2873, %v2937
        %v3002 = vsub.f32 %v2874, %v2938
        %v3003 = vsub.f32 %v2875, %v2939
        %v3004 = vsub.f32 %v2876, %v2940
        %v3005 = vsub.f32 %v2877, %v2941
        %v3006 = vsub.f32 %v2878, %v2942
        %v3007 = vsub.f32 %v2879, %v2943
        %v3008 = vsub.f32 %v2880, %v2944
        %v3009 = vsub.f32 %v2881, %v2945
        %v3010 = vsub.f32 %v2882, %v2946
        %v3011 = vsub.f32 %v2883, %v2947
        %v3012 = vsub.f32 %v2884, %v2948
        %v3013 = vsub.f32 %v2885, %v2949
        %v3014 = vsub.f32 %v2886, %v2950
        %v3015 = vsub.f32 %v2887, %v2951
        %v3016 = vsub.f32 %v2888, %v2952
        %v3017 = vsub.f32 %v2889, %v2953
        %v3018 = vsub.f32 %v2890, %v2954
        %v3019 = vsub.f32 %v2891, %v2955
        %v3020 = vsub.f32 %v2892, %v2956
        %v3021 = vsub.f32 %v2893, %v2957
        %v3022 = vsub.f32 %v2894, %v2958
        %v3023 = vsub.f32 %v2895, %v2959
        %v3024 = vsub.f32 %v2896, %v2960
        %v3025 = vsub.f32 %v2897, %v2961
        %v3026 = vsub.f32 %v2898, %v2962
        %v3027 = vsub.f32 %v2899, %v2963
        %v3028 = vsub.f32 %v2900, %v2964
        %v3029 = vsub.f32 %v2901, %v2965
        %v3030 = vsub.f32 %v2902, %v2966
        %v3031 = vsub.f32 %v2903, %v2967
        %v3032 = vsub.f32 %v2904, %v2968
        %v3033 = vsub.f32 %v2905, %v2969
        %v3034 = vsub.f32 %v2906, %v2970
        %v3035 = vsub.f32 %v2907, %v2971
        %v3036 = vsub.f32 %v2908, %v2972
        %v3037 = vsub.f32 %v2909, %v2973
        %v3038 = vsub.f32 %v2910, %v2974
        %v3039 = vsub.f32 %v2911, %v2975
        %v3040 = vsub.f32 %v2912, %v2976
        %v3041 = vsub.f32 %v2913, %v2977
        %v3042 = vsub.f32 %v2914, %v2978
        %v3043 = vsub.f32 %v2915, %v2979
        %v3044 = vsub.f32 %v2916, %v2980
        %v3045 = vsub.f32 %v2917, %v2981
        %v3046 = vsub.f32 %v2918, %v2982
        %v3047 = vsub.f32 %v2919, %v2983
        %v3048 = vsub.f32 %v2920, %v2984
        %v3049 = vsub.f32 %v2921, %v2985
        %v3050 = vsub.f32 %v2922, %v2986
        %v3051 = vsub.f32 %v2923, %v2987
        %v3052 = vsub.f32 %v2924, %v2988
        %v3053 = vsub.f32 %v2925, %v2989
        %v3054 = vsub.f32 %v2926, %v2990
        %v3055 = vsub.f32 %v2927, %v2991
        %v3056 = vsub.f32 %v2928, %v2992
        %v3057 = vsub.f32 %v2929, %v2993
        %v3058 = vmax.f32 %v2994, 0.0
        %v3059 = vmax.f32 %v2995, 0.0
        %v3060 = vmax.f32 %v2996, 0.0
        %v3061 = vmax.f32 %v2997, 0.0
        %v3062 = vmax.f32 %v2998, 0.0
        %v3063 = vmax.f32 %v2999, 0.0
        %v3064 = vmax.f32 %v3000, 0.0
        %v3065 = vmax.f32 %v3001, 0.0
        %v3066 = vmax.f32 %v3002, 0.0
        %v3067 = vmax.f32 %v3003, 0.0
        %v3068 = vmax.f32 %v3004, 0.0
        %v3069 = vmax.f32 %v3005, 0.0
        %v3070 = vmax.f32 %v3006, 0.0
        %v3071 = vmax.f32 %v3007, 0.0
        %v3072 = vmax.f32 %v3008, 0.0
        %v3073 = vmax.f32 %v3009, 0.0
        %v3074 = vmax.f32 %v3010, 0.0
        %v3075 = vmax.f32 %v3011, 0.0
        %v3076 = vmax.f32 %v3012, 0.0
        %v3077 = vmax.f32 %v3013, 0.0
        %v3078 = vmax.f32 %v3014, 0.0
        %v3079 = vmax.f32 %v3015, 0.0
        %v3080 = vmax.f32 %v3016, 0.0
        %v3081 = vmax.f32 %v3017, 0.0
        %v3082 = vmax.f32 %v3018, 0.0
        %v3083 = vmax.f32 %v3019, 0.0
        %v3084 = vmax.f32 %v3020, 0.0
        %v3085 = vmax.f32 %v3021, 0.0
        %v3086 = vmax.f32 %v3022, 0.0
        %v3087 = vmax.f32 %v3023, 0.0
        %v3088 = vmax.f32 %v3024, 0.0
        %v3089 = vmax.f32 %v3025, 0.0
        %v3090 = vmax.f32 %v3026, 0.0
        %v3091 = vmax.f32 %v3027, 0.0
        %v3092 = vmax.f32 %v3028, 0.0
        %v3093 = vmax.f32 %v3029, 0.0
        %v3094 = vmax.f32 %v3030, 0.0
        %v3095 = vmax.f32 %v3031, 0.0
        %v3096 = vmax.f32 %v3032, 0.0
        %v3097 = vmax.f32 %v3033, 0.0
        %v3098 = vmax.f32 %v3034, 0.0
        %v3099 = vmax.f32 %v3035, 0.0
        %v3100 = vmax.f32 %v3036, 0.0
        %v3101 = vmax.f32 %v3037, 0.0
        %v3102 = vmax.f32 %v3038, 0.0
        %v3103 = vmax.f32 %v3039, 0.0
        %v3104 = vmax.f32 %v3040, 0.0
        %v3105 = vmax.f32 %v3041, 0.0
        %v3106 = vmax.f32 %v3042, 0.0
        %v3107 = vmax.f32 %v3043, 0.0
        %v3108 = vmax.f32 %v3044, 0.0
        %v3109 = vmax.f32 %v3045, 0.0
        %v3110 = vmax.f32 %v3046, 0.0
        %v3111 = vmax.f32 %v3047, 0.0
        %v3112 = vmax.f32 %v3048, 0.0
        %v3113 = vmax.f32 %v3049, 0.0
        %v3114 = vmax.f32 %v3050, 0.0
        %v3115 = vmax.f32 %v3051, 0.0
        %v3116 = vmax.f32 %v3052, 0.0
        %v3117 = vmax.f32 %v3053, 0.0
        %v3118 = vmax.f32 %v3054, 0.0
        %v3119 = vmax.f32 %v3055, 0.0
        %v3120 = vmax.f32 %v3056, 0.0
        %v3121 = vmax.f32 %v3057, 0.0
        %3122 = vst [vmem:[%s522] sm:$0xff] %v3058
        %3123 = vst [vmem:[%s522 + $0x8] sm:$0xff] %v3059
        %3124 = vst [vmem:[%s522 + $0x10] sm:$0xff] %v3060
        %3125 = vst [vmem:[%s522 + $0x18] sm:$0xff] %v3061
        %3126 = vst [vmem:[%s522 + $0x20] sm:$0xff] %v3062
        %3127 = vst [vmem:[%s522 + $0x28] sm:$0xff] %v3063
        %3128 = vst [vmem:[%s522 + $0x30] sm:$0xff] %v3064
        %3129 = vst [vmem:[%s522 + $0x38] sm:$0xff] %v3065
        %3130 = vst [vmem:[%s522 + $0x40] sm:$0xff] %v3066
        %3131 = vst [vmem:[%s522 + $0x48] sm:$0xff] %v3067
        %3132 = vst [vmem:[%s522 + $0x50] sm:$0xff] %v3068
        %3133 = vst [vmem:[%s522 + $0x58] sm:$0xff] %v3069
        %3134 = vst [vmem:[%s522 + $0x60] sm:$0xff] %v3070
        %3135 = vst [vmem:[%s522 + $0x68] sm:$0xff] %v3071
        %3136 = vst [vmem:[%s522 + $0x70] sm:$0xff] %v3072
        %3137 = vst [vmem:[%s522 + $0x78] sm:$0xff] %v3073
        %3138 = vst [vmem:[%s522 + $0x80] sm:$0xff] %v3074
        %3139 = vst [vmem:[%s522 + $0x88] sm:$0xff] %v3075
        %3140 = vst [vmem:[%s522 + $0x90] sm:$0xff] %v3076
        %3141 = vst [vmem:[%s522 + $0x98] sm:$0xff] %v3077
        %3142 = vst [vmem:[%s522 + $0xa0] sm:$0xff] %v3078
        %3143 = vst [vmem:[%s522 + $0xa8] sm:$0xff] %v3079
        %3144 = vst [vmem:[%s522 + $0xb0] sm:$0xff] %v3080
        %3145 = vst [vmem:[%s522 + $0xb8] sm:$0xff] %v3081
        %3146 = vst [vmem:[%s522 + $0xc0] sm:$0xff] %v3082
        %3147 = vst [vmem:[%s522 + $0xc8] sm:$0xff] %v3083
        %3148 = vst [vmem:[%s522 + $0xd0] sm:$0xff] %v3084
        %3149 = vst [vmem:[%s522 + $0xd8] sm:$0xff] %v3085
        %3150 = vst [vmem:[%s522 + $0xe0] sm:$0xff] %v3086
        %3151 = vst [vmem:[%s522 + $0xe8] sm:$0xff] %v3087
        %3152 = vst [vmem:[%s522 + $0xf0] sm:$0xff] %v3088
        %3153 = vst [vmem:[%s522 + $0xf8] sm:$0xff] %v3089
        %3154 = vst [vmem:[%s522 + $0x100] sm:$0xff] %v3090
        %3155 = vst [vmem:[%s522 + $0x108] sm:$0xff] %v3091
        %3156 = vst [vmem:[%s522 + $0x110] sm:$0xff] %v3092
        %3157 = vst [vmem:[%s522 + $0x118] sm:$0xff] %v3093
        %3158 = vst [vmem:[%s522 + $0x120] sm:$0xff] %v3094
        %3159 = vst [vmem:[%s522 + $0x128] sm:$0xff] %v3095
        %3160 = vst [vmem:[%s522 + $0x130] sm:$0xff] %v3096
        %3161 = vst [vmem:[%s522 + $0x138] sm:$0xff] %v3097
        %3162 = vst [vmem:[%s522 + $0x140] sm:$0xff] %v3098
        %3163 = vst [vmem:[%s522 + $0x148] sm:$0xff] %v3099
        %3164 = vst [vmem:[%s522 + $0x150] sm:$0xff] %v3100
        %3165 = vst [vmem:[%s522 + $0x158] sm:$0xff] %v3101
        %3166 = vst [vmem:[%s522 + $0x160] sm:$0xff] %v3102
        %3167 = vst [vmem:[%s522 + $0x168] sm:$0xff] %v3103
        %3168 = vst [vmem:[%s522 + $0x170] sm:$0xff] %v3104
        %3169 = vst [vmem:[%s522 + $0x178] sm:$0xff] %v3105
        %3170 = vst [vmem:[%s522 + $0x180] sm:$0xff] %v3106
        %3171 = vst [vmem:[%s522 + $0x188] sm:$0xff] %v3107
        %3172 = vst [vmem:[%s522 + $0x190] sm:$0xff] %v3108
        %3173 = vst [vmem:[%s522 + $0x198] sm:$0xff] %v3109
        %3174 = vst [vmem:[%s522 + $0x1a0] sm:$0xff] %v3110
        %3175 = vst [vmem:[%s522 + $0x1a8] sm:$0xff] %v3111
        %3176 = vst [vmem:[%s522 + $0x1b0] sm:$0xff] %v3112
        %3177 = vst [vmem:[%s522 + $0x1b8] sm:$0xff] %v3113
        %3178 = vst [vmem:[%s522 + $0x1c0] sm:$0xff] %v3114
        %3179 = vst [vmem:[%s522 + $0x1c8] sm:$0xff] %v3115
        %3180 = vst [vmem:[%s522 + $0x1d0] sm:$0xff] %v3116
        %3181 = vst [vmem:[%s522 + $0x1d8] sm:$0xff] %v3117
        %3182 = vst [vmem:[%s522 + $0x1e0] sm:$0xff] %v3118
        %3183 = vst [vmem:[%s522 + $0x1e8] sm:$0xff] %v3119
        %3184 = vst [vmem:[%s522 + $0x1f0] sm:$0xff] %v3120
        %3185 = vst [vmem:[%s522 + $0x1f8] sm:$0xff] %v3121
        %s3186 = sand.u32 %s219, 1
        %s3187 = scalar_lea.sflag [#allocation4], %s3186
        %s3188 = sand.u32 %s219, 1
        %s3189 = smul.addr %s3188, 512
        %s3190 = scalar_lea.vmem [#allocation13], %s3189
        %s3191 = sand.u32 %s247, 1
        %s3192 = scalar_lea.sflag [#allocation15], %s3191
        %s3193 = sand.u32 %s247, 1
        %s3194 = smul.addr %s3193, 512
        %s3195 = scalar_lea.vmem [#allocation14], %s3194
        // Predicated region
        $region69: #{tpu_custom_call.1} parent=43 // pred_check
          %p3196 = pneg %p229
        $region70: #{tpu_custom_call.1} parent=43 // pred_check_branch
          %3198 = sbr.rel (%p3196) target = $region72
        $region71: #{tpu_custom_call.1} parent=43 // pred_region
          %s3199 = smul.u32 32, %s42
          %s3201 = ssub.s32 8192, 8192
          %3202 = vsyncadd %s3187, %s3201
          %s3203 = smul.addr %s3199, 2
          %s3204 = smul.addr %s41, 64
          %s3205 = sadd.s32 %s3203, %s3204
          %s3206 = smul.addr %s3205, 128
          %s3207 = scalar_lea.hbm %s6, %s3206
          %s3208 = sshll.u32 %s3190, 4
          %s3209 = int_to_ptr.vmem [resolvable:$true] %s3208
          %3214 = dma.vmem_to_hbm [thread:$0]  %s3209, 8192, %s3207, %s3187, 256, 256, 16
        $region72: #{tpu_custom_call.1} parent=43 // pred_fallthru
          _
        // Predicated region
        $region73: #{tpu_custom_call.1} parent=43 // pred_check
          %p3215 = pneg %p257
        $region74: #{tpu_custom_call.1} parent=43 // pred_check_branch
          %3217 = sbr.rel (%p3215) target = $region76
        $region75: #{tpu_custom_call.1} parent=43 // pred_region
          %s3218 = smul.u32 32, %s42
          %s3220 = ssub.s32 8192, 8192
          %3221 = vsyncadd %s3192, %s3220
          %s3222 = smul.addr %s3218, 2
          %s3223 = smul.addr %s41, 64
          %s3224 = sadd.s32 %s3222, %s3223
          %s3225 = smul.addr %s3224, 128
          %s3226 = scalar_lea.hbm %s7, %s3225
          %s3227 = sshll.u32 %s3195, 4
          %s3228 = int_to_ptr.vmem [resolvable:$true] %s3227
          %3233 = dma.vmem_to_hbm [thread:$0]  %s3228, 8192, %s3226, %s3192, 256, 256, 16
        $region76: #{tpu_custom_call.1} parent=43 // pred_fallthru
          _
      $region44: #{tpu_custom_call.1} parent=5 // pred_fallthru
        _
      %p3234 = scmp.le.s32.totalorder 2, %s32
      // Predicated region
      $region77: #{tpu_custom_call.1} parent=5 // pred_check
        %p3235 = pneg %p3234
      $region78: #{tpu_custom_call.1} parent=5 // pred_check_branch
        %3237 = sbr.rel (%p3235) target = $region80
      $region79: #{tpu_custom_call.1} parent=5 // pred_region
        %s3238 = ssub.s32 %s32, 2
        // Predicated region
        $region81: #{tpu_custom_call.1} parent=79 // pred_check
          %p3239 = pneg %p235
        $region82: #{tpu_custom_call.1} parent=79 // pred_check_branch
          %3241 = sbr.rel (%p3239) target = $region84
        $region83: #{tpu_custom_call.1} parent=79 // pred_region
          %s3242 = sand.u32 %s220, 1
          %s3243 = scalar_lea.sflag [#allocation4], %s3242
          %s3244 = sand.u32 %s220, 1
          %s3245 = smul.addr %s3244, 512
          %s3246 = scalar_lea.vmem [#allocation13], %s3245
          %3247 = dma.done %s3243, 8192
        $region84: #{tpu_custom_call.1} parent=79 // pred_fallthru
          _
        // Predicated region
        $region85: #{tpu_custom_call.1} parent=79 // pred_check
          %p3248 = pneg %p263
        $region86: #{tpu_custom_call.1} parent=79 // pred_check_branch
          %3250 = sbr.rel (%p3248) target = $region88
        $region87: #{tpu_custom_call.1} parent=79 // pred_region
          %s3251 = sand.u32 %s248, 1
          %s3252 = scalar_lea.sflag [#allocation15], %s3251
          %s3253 = sand.u32 %s248, 1
          %s3254 = smul.addr %s3253, 512
          %s3255 = scalar_lea.vmem [#allocation14], %s3254
          %3256 = dma.done %s3252, 8192
        $region88: #{tpu_custom_call.1} parent=79 // pred_fallthru
          _
      $region80: #{tpu_custom_call.1} parent=5 // pred_fallthru
        _
    $region6: #{tpu_custom_call.1} parent=1 // loop_footer
      %s36 = sadd.s32 1, %s32
    $region7: #{tpu_custom_call.1} parent=1 // loop_footer_branch
      %31 = sbr.rel target = $region3
    $region8: #{tpu_custom_call.1} parent=1 // loop_exit
      _
    %3257 = vsyncpa [#allocation3], 1
    %s3258 = scalar_lea.sflag [#allocation3], 1
    %3259 = vsyncpa %s3258, 1
    %3260 = vsyncpa [#allocation6], 1
    %s3261 = scalar_lea.sflag [#allocation6], 1
    %3262 = vsyncpa %s3261, 1
    %3263 = vsyncpa [#allocation9], 1
    %s3264 = scalar_lea.sflag [#allocation9], 1
    %3265 = vsyncpa %s3264, 1
    %3266 = vsyncpa [#allocation12], 1
    %s3267 = scalar_lea.sflag [#allocation12], 1
    %3268 = vsyncpa %s3267, 1
    %3269 = vsyncpa [#allocation4], 1
    %s3270 = scalar_lea.sflag [#allocation4], 1
    %3271 = vsyncpa %s3270, 1
    %3272 = vsyncpa [#allocation15], 1
    %s3273 = scalar_lea.sflag [#allocation15], 1
    %3274 = vsyncpa %s3273, 1

</llo_original>
